<compile_context>
chip_gen: v5e
topology: v5e:2x2
jax: 0.10.0
libtpu: 0.0.40
codegen_flags: <defaults>
</compile_context>

<pallas_src>
import functools

import jax
import jax.numpy as jnp
from jax.experimental import pallas as pl
from jax.experimental.pallas import tpu as pltpu

EPS = 1e-5  # torch.nn.InstanceNorm2d eps


# ---------------------------------------------------------------------------
# Fused kernel.  Scratch `skip_ref` holds the DS_DDB skip tensor as a flat
# (4C, PAD + T*(F+1) + PAD) slab, channel blocks ordered [x, y0, y1, y2] (the torch
# channel order is reversed by the wrapper's weight permutation).  Halo columns and the
# per-row pad column are zero, so all dilated / f-neighbour taps are plain lane-window
# slices of the scratch, with no boundary masks.
# ---------------------------------------------------------------------------
def _mask_decoder_kernel(
    x_ref,
    dw0_ref, pw0_ref,
    dw1_ref, pw1_ref,
    dw2_ref, pw2_ref,
    dw3_ref, pw3_ref,
    pwb_ref, ing_ref, inb_ref, pa_ref,
    pad_ref,
    vT_ref, bf_ref, tg_ref, tb_ref, tp_ref, w2_ref, b2_ref,
    slA_ref, slO_ref,
    oA_ref, oO_ref,
    skip_ref,
    *, C, T, F, PAD, beta):
  Fp = F + 1
  N = T * Fp          # padded flat spatial width
  NR = T * F          # real spatial size (InstanceNorm count)
  f32 = jnp.float32

  # Halo columns are written only here and never touched by any stage, so zero them once.
  # The scratch persists across the batch grid, which runs sequentially ("arbitrary").
  @pl.when(pl.program_id(0) == 0)
  def _zero_halo():
    skip_ref[:, 0:PAD] = jnp.zeros((4 * C, PAD), f32)
    skip_ref[:, PAD + N:PAD + N + PAD] = jnp.zeros((4 * C, PAD), f32)

  # Channel block 0 <- this sample's input.  The wrapper already appended one zero column
  # per time row, so every f-neighbour read below hits a genuine zero.
  skip_ref[0:C, PAD:PAD + N] = x_ref[0]

  pad_mask = pad_ref[...]          # (1, N): 1.0 at real (f < F) columns, 0.0 at the pad column

  dw_refs = (dw0_ref, dw1_ref, dw2_ref, dw3_ref)
  pw_refs = (pw0_ref, pw1_ref, pw2_ref, pw3_ref)

  # ------------------------- DS_DDB dense block (depth 4) -------------------------
  # torch: Conv2d(groups=cin, kernel (3,3), dilation (2**i, 1), "same" padding) ->
  #        Conv2d 1x1 (cin -> C) -> InstanceNorm2d(C, affine) -> PReLU(C)
  for i in range(4):
    dil = 2 ** i
    cin = C * (i + 1)
    dw = dw_refs[i][...]                                   # (cin, 9), scratch channel order

    # Depthwise dilated 3x3 conv on the flat (cin, T*(F+1)) slab, seeded with the centre tap.
    acc = skip_ref[0:cin, PAD:PAD + N] * dw[:, 4:5]
    for kt in range(3):
      for kf in range(3):
        if kt == 1 and kf == 1:
          continue
        off = (kt - 1) * dil * Fp + (kf - 1)
        xs = skip_ref[0:cin, PAD + off:PAD + off + N]      # lane-window slice (no masks)
        acc = acc + xs * dw[:, kt * 3 + kf:kt * 3 + kf + 1]

    # 1x1 conv as a lane-dense MXU matmul; the depthwise bias is folded into pwb (wrapper).
    y = jnp.dot(pw_refs[i][...], acc, preferred_element_type=f32) + pwb_ref[i]
    y = y * pad_mask                                       # zero the (garbage) pad column

    # InstanceNorm2d(C, affine) over the T*F real positions (one-pass, biased variance,
    # matching torch), with the affine folded into a single per-channel scale/shift.
    s1 = jnp.sum(y, axis=1, keepdims=True)
    s2 = jnp.sum(y * y, axis=1, keepdims=True)
    mean = s1 * (1.0 / NR)
    var = jnp.maximum(s2 * (1.0 / NR) - mean * mean, 0.0)
    scale = jax.lax.rsqrt(var + EPS) * ing_ref[i]          # (C, 1)
    shift = inb_ref[i] - mean * scale                      # (C, 1)
    z = y * scale + shift
    z = jnp.where(z >= 0, z, z * pa_ref[i])                # PReLU(C)
    z = z * pad_mask                                       # keep the pad column exactly zero

    if i < 3:
      skip_ref[(i + 1) * C:(i + 2) * C, PAD:PAD + N] = z   # append to skip (scratch order)
    else:
      # x is dead: park y3 in block 0 so the tail can read a (-1)-shifted view out of the
      # same zero-padded scratch.
      skip_ref[0:C, PAD:PAD + N] = z

  # ----------------------------- mask_conv tail -----------------------------
  # ConvTranspose2d(C, C, (1,3), stride (1,2)) folded with the following Conv2d(C, 1, 1x1):
  #   V[c, k] = sum_o w1[o] * wt[c, o, k],  bf = b1 + w1 . bt
  # Polyphase on the padded layout (m = 0..F-1):
  #   out[t, 2m]   = V0 . y3[:, t, m] + V2 . y3[:, t, m-1]
  #   out[t, 2m+1] = V1 . y3[:, t, m]
  #   out[t, 2F]   = V2 . y3[:, t, F-1]
  # y3 is zero in the pad column, so `even`'s pad-column slot automatically holds out[t, 2F]
  # (q0 is 0 there and the shifted q2 term reads y3[:, t, F-1]).  `odd`'s pad column is
  # garbage; it is masked out of the stats here and dropped by the wrapper.
  yd = skip_ref[0:C, PAD:PAD + N]                          # y3[c, n]
  ydm = skip_ref[0:C, PAD - 1:PAD - 1 + N]                 # y3[c, n-1]  (zero across row edges)
  vT = vT_ref[...]                                         # (8, C): rows 0..2 = V[:, 0..2].T
  qs = jnp.dot(vT, yd, preferred_element_type=f32)         # (8, N) on the otherwise idle MXU
  qsm = jnp.dot(vT, ydm, preferred_element_type=f32)       # (8, N); only row 2 is used

  bf = bf_ref[...]                                         # fused bias (1, 1)
  even = qs[0:1, :] + qsm[2:3, :] + bf                     # all even bins, incl. g=2F (pad col)
  odd = (qs[1:2, :] + bf) * pad_mask                       # odd bins; pad col zeroed for stats

  # InstanceNorm2d(1, affine) over the full (T, 2F+1) map, one-pass stats, affine folded.
  cnt = float(T * (2 * F + 1))
  s1 = jnp.sum(even, keepdims=True) + jnp.sum(odd, keepdims=True)
  s2 = jnp.sum(even * even, keepdims=True) + jnp.sum(odd * odd, keepdims=True)
  mean = s1 * (1.0 / cnt)
  var = jnp.maximum(s2 * (1.0 / cnt) - mean * mean, 0.0)
  t_scale = jax.lax.rsqrt(var + EPS) * tg_ref[...]         # (1, 1)
  t_shift = tb_ref[...] - mean * t_scale

  def head(u, slope):
    z = u * t_scale + t_shift                              # InstanceNorm2d(1) + affine
    z = jnp.where(z >= 0, z, z * tp_ref[...])              # PReLU(1)
    z = z * w2_ref[...] + b2_ref[...]                      # Conv2d(1, 1, (1,1))
    return beta * jax.nn.sigmoid(slope * z)                # LearnableSigmoid_2d

  oA_ref[0] = head(even, slA_ref[...])                     # even bins g=0,2,..,2F (pad col = 2F)
  oO_ref[0] = head(odd, slO_ref[...])                      # odd bins g=1,3,..,2F-1 (pad col junk)


def _const_spec(a):
  nd = a.ndim
  return pl.BlockSpec(a.shape, lambda b, _nd=nd: (0,) * _nd)


# ---------------------------------------------------------------------------
# Wrapper: PyTorch NCHW in, PyTorch-convention [B, 1, T, n_fft//2+1] out.
# All wrapper-side work is tiny weight reshuffling / final output interleave (glue).
# ---------------------------------------------------------------------------
def mask_decoder_forward(x_nchw, params, beta=2.0):
  x = x_nchw.astype(jnp.float32)
  B, C, T, F = x.shape
  Fp = F + 1                           # one zero pad column per time row
  N = T * Fp                           # flat working width
  DMAX = 2 ** 3                        # largest dilation in the dense block
  PAD = ((DMAX * Fp + 1 + 127) // 128) * 128
  NPAD = N + 2 * PAD

  # flat layout n = t*(F+1) + f, with column f == F identically zero
  xflat = jnp.pad(x, ((0, 0), (0, 0), (0, 0), (0, 1))).reshape(B, C, N)

  # --- dense-stage parameters, permuted from torch channel order [y_{i-1},..,y_0,x]
  #     to scratch order [x, y_0, .., y_{i-1}] (reverse the C-sized blocks) ---
  dws, pws = [], []
  pwb, ing, inb, pa = [], [], [], []
  for i, p in enumerate(params["dense"]):
    cin = C * (i + 1)
    dw = p["dw_w"].reshape(i + 1, C, 3, 3)[::-1].reshape(cin, 9)
    db = p["dw_b"].reshape(i + 1, C)[::-1].reshape(cin)
    pw = p["pw_w"].reshape(C, i + 1, C)[:, ::-1, :].reshape(C, cin)
    dws.append(dw)
    pws.append(pw)
    # fold the depthwise bias into the pointwise bias:  pw@(u + db) + b = pw@u + (b + pw@db)
    pwb.append((p["pw_b"] + pw @ db).reshape(C, 1))
    ing.append(p["in_g"].reshape(C, 1))
    inb.append(p["in_b"].reshape(C, 1))
    pa.append(p["prelu"].reshape(C, 1))
  pwb_all = jnp.stack(pwb)             # (4, C, 1)
  ing_all = jnp.stack(ing)
  inb_all = jnp.stack(inb)
  pa_all = jnp.stack(pa)

  # --- tail: fold ConvTranspose2d((1,3),(1,2)) with the 1x1 Conv2d(C->1) ---
  t = params["tail"]
  V = jnp.einsum("o,iok->ik", t["w1"], t["wt"]).astype(jnp.float32)     # (C, 3)
  vT = jnp.zeros((8, C), jnp.float32).at[0:3, :].set(V.T)               # sublane-padded lhs
  b_fold = (t["b1"] + jnp.dot(t["w1"], t["bt"])).reshape(1, 1)
  slope = t["slope"]
  # per-column LearnableSigmoid slopes on the padded layout:
  #   even slab column m<F -> bin 2m, pad column -> bin 2F; odd slab column m<F -> bin 2m+1
  slA_row = jnp.concatenate([slope[0:2 * F:2], slope[2 * F:2 * F + 1]])
  slO_row = jnp.concatenate([slope[1:2 * F:2], jnp.ones((1,), jnp.float32)])
  slopeA = jnp.tile(slA_row, T).reshape(1, N)
  slopeO = jnp.tile(slO_row, T).reshape(1, N)
  sc = lambda v: jnp.asarray(v, jnp.float32).reshape(1, 1)

  # real-column mask for the flat padded layout (1.0 where f < F)
  fidx = jnp.tile(jnp.arange(Fp, dtype=jnp.int32), T)
  pad_mask = (fidx < F).astype(jnp.float32).reshape(1, N)

  args = (xflat,
          dws[0], pws[0], dws[1], pws[1], dws[2], pws[2], dws[3], pws[3],
          pwb_all, ing_all, inb_all, pa_all,
          pad_mask,
          vT, b_fold, sc(t["in_g"]), sc(t["in_b"]), sc(t["prelu"]),
          sc(t["w2"]), sc(t["b2"]),
          slopeA, slopeO)

  in_specs = [pl.BlockSpec((1, C, N), lambda b: (b, 0, 0))]
  in_specs += [_const_spec(a) for a in args[1:]]

  out_shape = (jax.ShapeDtypeStruct((B, 1, N), jnp.float32),
               jax.ShapeDtypeStruct((B, 1, N), jnp.float32))
  out_specs = [pl.BlockSpec((1, 1, N), lambda b: (b, 0, 0)) for _ in range(2)]

  # VMEM budget from actual block + scratch sizes (double-buffered blocks + headroom),
  # capped so it stays under v7x's 64 MiB physical VMEM.
  per_step_bytes = 4 * (C * N + 2 * N + sum(int(a.size) for a in args[1:]))
  scratch_bytes = 4 * (4 * C * NPAD)
  vmem_limit = int(min(max(2 * per_step_bytes + scratch_bytes + (4 << 20), 16 << 20), 56 << 20))

  kern = functools.partial(_mask_decoder_kernel, C=C, T=T, F=F, PAD=PAD, beta=beta)

  rawA, rawO = pl.pallas_call(
      kern,
      out_shape=out_shape,
      grid=(B,),
      in_specs=in_specs,
      out_specs=out_specs,
      scratch_shapes=[pltpu.VMEM((4 * C, NPAD), jnp.float32)],
      compiler_params=pltpu.CompilerParams(
          # "arbitrary": the zero-once halo in the persistent scratch requires the batch
          # grid to run in order on one core.  TODO(synk): for v7x dual-TC add a parallel
          # T-tile axis (with a cross-tile InstanceNorm reduction) instead.
          dimension_semantics=("arbitrary",),
          vmem_limit_bytes=vmem_limit),
  )(*args)

  # Final interleave back onto the (T, n_fft//2+1) grid: pure layout plumbing.
  evenA = rawA[:, 0, :].reshape(B, T, Fp)     # columns 0..F-1 -> bins 0,2,..,2F-2; col F -> 2F
  oddA = rawO[:, 0, :].reshape(B, T, Fp)      # columns 0..F-1 -> bins 1,3,..,2F-1; col F junk
  inter = jnp.stack([evenA[:, :, :F], oddA[:, :, :F]], axis=-1).reshape(B, T, 2 * F)
  out = jnp.concatenate([inter, evenA[:, :, F:]], axis=-1)              # (B, T, 2F+1)
  return out[:, None, :, :]                                             # (B, 1, T, n_fft//2+1)


# ---------------------------------------------------------------------------
# Deterministic synthetic parameters (torch-convention shapes, singleton dims squeezed)
# ---------------------------------------------------------------------------
def init_params(key, C, F):
  G = 2 * F + 1
  keys = iter(jax.random.split(key, 64))

  def rnd(shape, scale=0.2):
    return (scale * jax.random.normal(next(keys), shape)).astype(jnp.float32)

  dense = []
  for i in range(4):
    cin = C * (i + 1)
    dense.append(dict(
        dw_w=rnd((cin, 3, 3), 0.3),                    # depthwise Conv2d weight (cin,1,3,3)
        dw_b=rnd((cin,), 0.1),
        pw_w=rnd((C, cin), 0.3),                       # Conv2d 1x1 (C, cin, 1, 1)
        pw_b=rnd((C,), 0.1),
        in_g=jnp.ones((C,), jnp.float32),              # InstanceNorm2d affine
        in_b=jnp.zeros((C,), jnp.float32),
        prelu=jnp.full((C,), 0.25, jnp.float32),       # PReLU (torch default 0.25)
    ))

  tail = dict(
      wt=rnd((C, C, 3), 0.3),                          # ConvTranspose2d weight (C, C, 1, 3)
      bt=rnd((C,), 0.1),
      w1=rnd((C,), 0.3),                               # Conv2d C -> 1
      b1=rnd((), 0.1),
      in_g=jnp.ones((), jnp.float32),                  # InstanceNorm2d(1) affine
      in_b=jnp.zeros((), jnp.float32),
      prelu=jnp.full((), 0.25, jnp.float32),           # PReLU(1)
      w2=rnd((), 0.5),                                 # Conv2d 1 -> 1
      b2=rnd((), 0.1),
      slope=jnp.ones((G,), jnp.float32),               # LearnableSigmoid_2d slope (init 1)
  )
  return dict(dense=dense, tail=tail)


if __name__ == "__main__":
  # small config: dense_channel=8, T=16 frames, F=8 freq bins -> n_fft=32, beta=2.0
  B, C, T, F = 2, 8, 16, 8
  key = jax.random.PRNGKey(0)
  kx, kp = jax.random.split(key)
  x = jax.random.normal(kx, (B, C, T, F), dtype=jnp.float32)   # PyTorch NCHW input
  params = init_params(kp, C, F)

  fwd = jax.jit(lambda xx, pp: mask_decoder_forward(xx, pp, beta=2.0))
  out = jax.block_until_ready(fwd(x, params))

  assert out.shape == (B, 1, T, 2 * F + 1), out.shape
  assert bool(jnp.all(jnp.isfinite(out)))
  assert bool(jnp.all(out >= 0.0)) and bool(jnp.all(out <= 2.0))  # beta*sigmoid range
  print("KERNEL_OK")
</pallas_src>

<mosaic_0001>
module attributes {stable_mosaic.version = 11 : i64} {
  func.func @_mask_decoder_kernel(%arg0: i32, %arg1: memref<1x8x144xf32, #tpu.memory_space<vmem>>, %arg2: memref<8x9xf32, #tpu.memory_space<vmem>>, %arg3: memref<8x8xf32, #tpu.memory_space<vmem>>, %arg4: memref<16x9xf32, #tpu.memory_space<vmem>>, %arg5: memref<8x16xf32, #tpu.memory_space<vmem>>, %arg6: memref<24x9xf32, #tpu.memory_space<vmem>>, %arg7: memref<8x24xf32, #tpu.memory_space<vmem>>, %arg8: memref<32x9xf32, #tpu.memory_space<vmem>>, %arg9: memref<8x32xf32, #tpu.memory_space<vmem>>, %arg10: memref<4x8x1xf32, #tpu.memory_space<vmem>>, %arg11: memref<4x8x1xf32, #tpu.memory_space<vmem>>, %arg12: memref<4x8x1xf32, #tpu.memory_space<vmem>>, %arg13: memref<4x8x1xf32, #tpu.memory_space<vmem>>, %arg14: memref<1x144xf32, #tpu.memory_space<vmem>>, %arg15: memref<8x8xf32, #tpu.memory_space<vmem>>, %arg16: memref<1x1xf32, #tpu.memory_space<vmem>>, %arg17: memref<1x1xf32, #tpu.memory_space<vmem>>, %arg18: memref<1x1xf32, #tpu.memory_space<vmem>>, %arg19: memref<1x1xf32, #tpu.memory_space<vmem>>, %arg20: memref<1x1xf32, #tpu.memory_space<vmem>>, %arg21: memref<1x1xf32, #tpu.memory_space<vmem>>, %arg22: memref<1x144xf32, #tpu.memory_space<vmem>>, %arg23: memref<1x144xf32, #tpu.memory_space<vmem>>, %arg24: memref<1x1x144xf32, #tpu.memory_space<vmem>>, %arg25: memref<1x1x144xf32, #tpu.memory_space<vmem>>, %arg26: memref<32x400xf32, #tpu.memory_space<vmem>>) attributes {dimension_semantics = [#tpu.dimension_semantics<arbitrary>], iteration_bounds = array<i64: 2>, scalar_prefetch = 0 : i64, scratch_operands = 1 : i64, tpu.core_type = #tpu.core_type<tc>, window_params = [{transform_indices = @transform_0, window_bounds = array<i64: 1, 8, 144>}, {pipeline_mode = #tpu.pipeline_mode<synchronous>, transform_indices = @transform_1, window_bounds = array<i64: 8, 9>}, {pipeline_mode = #tpu.pipeline_mode<synchronous>, transform_indices = @transform_2, window_bounds = array<i64: 8, 8>}, {pipeline_mode = #tpu.pipeline_mode<synchronous>, transform_indices = @transform_3, window_bounds = array<i64: 16, 9>}, {pipeline_mode = #tpu.pipeline_mode<synchronous>, transform_indices = @transform_4, window_bounds = array<i64: 8, 16>}, {pipeline_mode = #tpu.pipeline_mode<synchronous>, transform_indices = @transform_5, window_bounds = array<i64: 24, 9>}, {pipeline_mode = #tpu.pipeline_mode<synchronous>, transform_indices = @transform_6, window_bounds = array<i64: 8, 24>}, {pipeline_mode = #tpu.pipeline_mode<synchronous>, transform_indices = @transform_7, window_bounds = array<i64: 32, 9>}, {pipeline_mode = #tpu.pipeline_mode<synchronous>, transform_indices = @transform_8, window_bounds = array<i64: 8, 32>}, {pipeline_mode = #tpu.pipeline_mode<synchronous>, transform_indices = @transform_9, window_bounds = array<i64: 4, 8, 1>}, {pipeline_mode = #tpu.pipeline_mode<synchronous>, transform_indices = @transform_10, window_bounds = array<i64: 4, 8, 1>}, {pipeline_mode = #tpu.pipeline_mode<synchronous>, transform_indices = @transform_11, window_bounds = array<i64: 4, 8, 1>}, {pipeline_mode = #tpu.pipeline_mode<synchronous>, transform_indices = @transform_12, window_bounds = array<i64: 4, 8, 1>}, {pipeline_mode = #tpu.pipeline_mode<synchronous>, transform_indices = @transform_13, window_bounds = array<i64: 1, 144>}, {pipeline_mode = #tpu.pipeline_mode<synchronous>, transform_indices = @transform_14, window_bounds = array<i64: 8, 8>}, {pipeline_mode = #tpu.pipeline_mode<synchronous>, transform_indices = @transform_15, window_bounds = array<i64: 1, 1>}, {pipeline_mode = #tpu.pipeline_mode<synchronous>, transform_indices = @transform_16, window_bounds = array<i64: 1, 1>}, {pipeline_mode = #tpu.pipeline_mode<synchronous>, transform_indices = @transform_17, window_bounds = array<i64: 1, 1>}, {pipeline_mode = #tpu.pipeline_mode<synchronous>, transform_indices = @transform_18, window_bounds = array<i64: 1, 1>}, {pipeline_mode = #tpu.pipeline_mode<synchronous>, transform_indices = @transform_19, window_bounds = array<i64: 1, 1>}, {pipeline_mode = #tpu.pipeline_mode<synchronous>, transform_indices = @transform_20, window_bounds = array<i64: 1, 1>}, {pipeline_mode = #tpu.pipeline_mode<synchronous>, transform_indices = @transform_21, window_bounds = array<i64: 1, 144>}, {pipeline_mode = #tpu.pipeline_mode<synchronous>, transform_indices = @transform_22, window_bounds = array<i64: 1, 144>}, {transform_indices = @transform_23, window_bounds = array<i64: 1, 1, 144>}, {transform_indices = @transform_24, window_bounds = array<i64: 1, 1, 144>}]} {
    %c0_i32 = arith.constant 0 : i32
    %0 = arith.cmpi eq, %arg0, %c0_i32 : i32
    %1 = arith.extui %0 : i1 to i32
    %c0_i32_0 = arith.constant 0 : i32
    %2 = arith.cmpi ne, %1, %c0_i32_0 : i32
    scf.if %2 {
      %cst_199 = arith.constant 0.000000e+00 : f32
      %478 = vector.broadcast %cst_199 : f32 to vector<32x128xf32>
      %c0_200 = arith.constant 0 : index
      %c0_201 = arith.constant 0 : index
      %479 = vector.load %arg26[%c0_200, %c0_201] : memref<32x400xf32, #tpu.memory_space<vmem>>, vector<32x128xf32>
      tpu.vector_store %arg26[%c0_200, %c0_201], %478 {strides = array<i32>} : memref<32x400xf32, #tpu.memory_space<vmem>>, vector<32x128xf32>,
      %cst_202 = arith.constant 0.000000e+00 : f32
      %480 = vector.broadcast %cst_202 : f32 to vector<32x128xf32>
      %c0_203 = arith.constant 0 : index
      %c272 = arith.constant 272 : index
      %481 = vector.load %arg26[%c0_203, %c272] : memref<32x400xf32, #tpu.memory_space<vmem>>, vector<32x128xf32>
      tpu.vector_store %arg26[%c0_203, %c272], %480 {strides = array<i32>} : memref<32x400xf32, #tpu.memory_space<vmem>>, vector<32x128xf32>,
    } else {
    }
    %c0 = arith.constant 0 : index
    %c0_1 = arith.constant 0 : index
    %c0_2 = arith.constant 0 : index
    %3 = vector.load %arg1[%c0, %c0_1, %c0_2] : memref<1x8x144xf32, #tpu.memory_space<vmem>>, vector<1x8x144xf32>
    %4 = vector.shape_cast %3 : vector<1x8x144xf32> to vector<8x144xf32>
    %c0_3 = arith.constant 0 : index
    %c128 = arith.constant 128 : index
    %5 = vector.load %arg26[%c0_3, %c128] : memref<32x400xf32, #tpu.memory_space<vmem>>, vector<8x144xf32>
    tpu.vector_store %arg26[%c0_3, %c128], %4 {strides = array<i32>} : memref<32x400xf32, #tpu.memory_space<vmem>>, vector<8x144xf32>,
    %c0_4 = arith.constant 0 : index
    %c0_5 = arith.constant 0 : index
    %6 = vector.load %arg14[%c0_4, %c0_5] : memref<1x144xf32, #tpu.memory_space<vmem>>, vector<1x144xf32>
    %c0_6 = arith.constant 0 : index
    %c0_7 = arith.constant 0 : index
    %7 = vector.load %arg2[%c0_6, %c0_7] : memref<8x9xf32, #tpu.memory_space<vmem>>, vector<8x9xf32>
    %c0_8 = arith.constant 0 : index
    %c128_9 = arith.constant 128 : index
    %8 = vector.load %arg26[%c0_8, %c128_9] : memref<32x400xf32, #tpu.memory_space<vmem>>, vector<8x144xf32>
    %9 = vector.extract_strided_slice %7 {offsets = [0, 4], sizes = [8, 1], strides = [1, 1]} : vector<8x9xf32> to vector<8x1xf32>
    %10 = vector.broadcast %9 : vector<8x1xf32> to vector<8x144xf32>
    %11 = arith.mulf %8, %10 : vector<8x144xf32>
    %c0_10 = arith.constant 0 : index
    %c118 = arith.constant 118 : index
    %12 = vector.load %arg26[%c0_10, %c118] : memref<32x400xf32, #tpu.memory_space<vmem>>, vector<8x144xf32>
    %13 = vector.extract_strided_slice %7 {offsets = [0, 0], sizes = [8, 1], strides = [1, 1]} : vector<8x9xf32> to vector<8x1xf32>
    %14 = vector.broadcast %13 : vector<8x1xf32> to vector<8x144xf32>
    %15 = arith.mulf %12, %14 : vector<8x144xf32>
    %16 = arith.addf %11, %15 : vector<8x144xf32>
    %c0_11 = arith.constant 0 : index
    %c119 = arith.constant 119 : index
    %17 = vector.load %arg26[%c0_11, %c119] : memref<32x400xf32, #tpu.memory_space<vmem>>, vector<8x144xf32>
    %18 = vector.extract_strided_slice %7 {offsets = [0, 1], sizes = [8, 1], strides = [1, 1]} : vector<8x9xf32> to vector<8x1xf32>
    %19 = vector.broadcast %18 : vector<8x1xf32> to vector<8x144xf32>
    %20 = arith.mulf %17, %19 : vector<8x144xf32>
    %21 = arith.addf %16, %20 : vector<8x144xf32>
    %c0_12 = arith.constant 0 : index
    %c120 = arith.constant 120 : index
    %22 = vector.load %arg26[%c0_12, %c120] : memref<32x400xf32, #tpu.memory_space<vmem>>, vector<8x144xf32>
    %23 = vector.extract_strided_slice %7 {offsets = [0, 2], sizes = [8, 1], strides = [1, 1]} : vector<8x9xf32> to vector<8x1xf32>
    %24 = vector.broadcast %23 : vector<8x1xf32> to vector<8x144xf32>
    %25 = arith.mulf %22, %24 : vector<8x144xf32>
    %26 = arith.addf %21, %25 : vector<8x144xf32>
    %c0_13 = arith.constant 0 : index
    %c127 = arith.constant 127 : index
    %27 = vector.load %arg26[%c0_13, %c127] : memref<32x400xf32, #tpu.memory_space<vmem>>, vector<8x144xf32>
    %28 = vector.extract_strided_slice %7 {offsets = [0, 3], sizes = [8, 1], strides = [1, 1]} : vector<8x9xf32> to vector<8x1xf32>
    %29 = vector.broadcast %28 : vector<8x1xf32> to vector<8x144xf32>
    %30 = arith.mulf %27, %29 : vector<8x144xf32>
    %31 = arith.addf %26, %30 : vector<8x144xf32>
    %c0_14 = arith.constant 0 : index
    %c129 = arith.constant 129 : index
    %32 = vector.load %arg26[%c0_14, %c129] : memref<32x400xf32, #tpu.memory_space<vmem>>, vector<8x144xf32>
    %33 = vector.extract_strided_slice %7 {offsets = [0, 5], sizes = [8, 1], strides = [1, 1]} : vector<8x9xf32> to vector<8x1xf32>
    %34 = vector.broadcast %33 : vector<8x1xf32> to vector<8x144xf32>
    %35 = arith.mulf %32, %34 : vector<8x144xf32>
    %36 = arith.addf %31, %35 : vector<8x144xf32>
    %c0_15 = arith.constant 0 : index
    %c136 = arith.constant 136 : index
    %37 = vector.load %arg26[%c0_15, %c136] : memref<32x400xf32, #tpu.memory_space<vmem>>, vector<8x144xf32>
    %38 = vector.extract_strided_slice %7 {offsets = [0, 6], sizes = [8, 1], strides = [1, 1]} : vector<8x9xf32> to vector<8x1xf32>
    %39 = vector.broadcast %38 : vector<8x1xf32> to vector<8x144xf32>
    %40 = arith.mulf %37, %39 : vector<8x144xf32>
    %41 = arith.addf %36, %40 : vector<8x144xf32>
    %c0_16 = arith.constant 0 : index
    %c137 = arith.constant 137 : index
    %42 = vector.load %arg26[%c0_16, %c137] : memref<32x400xf32, #tpu.memory_space<vmem>>, vector<8x144xf32>
    %43 = vector.extract_strided_slice %7 {offsets = [0, 7], sizes = [8, 1], strides = [1, 1]} : vector<8x9xf32> to vector<8x1xf32>
    %44 = vector.broadcast %43 : vector<8x1xf32> to vector<8x144xf32>
    %45 = arith.mulf %42, %44 : vector<8x144xf32>
    %46 = arith.addf %41, %45 : vector<8x144xf32>
    %c0_17 = arith.constant 0 : index
    %c138 = arith.constant 138 : index
    %47 = vector.load %arg26[%c0_17, %c138] : memref<32x400xf32, #tpu.memory_space<vmem>>, vector<8x144xf32>
    %48 = vector.extract_strided_slice %7 {offsets = [0, 8], sizes = [8, 1], strides = [1, 1]} : vector<8x9xf32> to vector<8x1xf32>
    %49 = vector.broadcast %48 : vector<8x1xf32> to vector<8x144xf32>
    %50 = arith.mulf %47, %49 : vector<8x144xf32>
    %51 = arith.addf %46, %50 : vector<8x144xf32>
    %c0_18 = arith.constant 0 : index
    %c0_19 = arith.constant 0 : index
    %52 = vector.load %arg3[%c0_18, %c0_19] : memref<8x8xf32, #tpu.memory_space<vmem>>, vector<8x8xf32>
    %cst = arith.constant dense<0.000000e+00> : vector<8x144xf32>
    %53 = tpu.matmul %52, %51, %cst {dimension_numbers = #tpu.dot_dimension_numbers<[1], [0], [0], [1], [0, 0, 1, 1], [], []>} : vector<8x8xf32>, vector<8x144xf32>, vector<8x144xf32> -> vector<8x144xf32>
    %c0_20 = arith.constant 0 : index
    %c0_21 = arith.constant 0 : index
    %c0_22 = arith.constant 0 : index
    %54 = vector.load %arg10[%c0_20, %c0_21, %c0_22] : memref<4x8x1xf32, #tpu.memory_space<vmem>>, vector<1x8x1xf32>
    %55 = vector.shape_cast %54 : vector<1x8x1xf32> to vector<8x1xf32>
    %56 = vector.broadcast %55 : vector<8x1xf32> to vector<8x144xf32>
    %57 = arith.addf %53, %56 : vector<8x144xf32>
    %58 = vector.broadcast %6 : vector<1x144xf32> to vector<8x144xf32>
    %59 = arith.mulf %57, %58 : vector<8x144xf32>
    %cst_23 = arith.constant dense<0.000000e+00> : vector<8xf32>
    %60 = vector.multi_reduction <add>, %59, %cst_23 [1] : vector<8x144xf32> to vector<8xf32>
    %61 = vector.shape_cast %60 : vector<8xf32> to vector<8x1xf32>
    %62 = arith.mulf %59, %59 : vector<8x144xf32>
    %cst_24 = arith.constant dense<0.000000e+00> : vector<8xf32>
    %63 = vector.multi_reduction <add>, %62, %cst_24 [1] : vector<8x144xf32> to vector<8xf32>
    %64 = vector.shape_cast %63 : vector<8xf32> to vector<8x1xf32>
    %cst_25 = arith.constant 7.812500e-03 : f32
    %65 = vector.broadcast %cst_25 : f32 to vector<8x1xf32>
    %66 = arith.mulf %61, %65 : vector<8x1xf32>
    %cst_26 = arith.constant 7.812500e-03 : f32
    %67 = vector.broadcast %cst_26 : f32 to vector<8x1xf32>
    %68 = arith.mulf %64, %67 : vector<8x1xf32>
    %69 = arith.mulf %66, %66 : vector<8x1xf32>
    %70 = arith.subf %68, %69 : vector<8x1xf32>
    %cst_27 = arith.constant 0.000000e+00 : f32
    %71 = vector.broadcast %cst_27 : f32 to vector<8x1xf32>
    %72 = arith.maximumf %70, %71 : vector<8x1xf32>
    %cst_28 = arith.constant 9.99999974E-6 : f32
    %73 = vector.broadcast %cst_28 : f32 to vector<8x1xf32>
    %74 = arith.addf %72, %73 : vector<8x1xf32>
    %75 = math.rsqrt %74 : vector<8x1xf32>
    %c0_29 = arith.constant 0 : index
    %c0_30 = arith.constant 0 : index
    %c0_31 = arith.constant 0 : index
    %76 = vector.load %arg11[%c0_29, %c0_30, %c0_31] : memref<4x8x1xf32, #tpu.memory_space<vmem>>, vector<1x8x1xf32>
    %77 = vector.shape_cast %76 : vector<1x8x1xf32> to vector<8x1xf32>
    %78 = arith.mulf %75, %77 : vector<8x1xf32>
    %c0_32 = arith.constant 0 : index
    %c0_33 = arith.constant 0 : index
    %c0_34 = arith.constant 0 : index
    %79 = vector.load %arg12[%c0_32, %c0_33, %c0_34] : memref<4x8x1xf32, #tpu.memory_space<vmem>>, vector<1x8x1xf32>
    %80 = vector.shape_cast %79 : vector<1x8x1xf32> to vector<8x1xf32>
    %81 = arith.mulf %66, %78 : vector<8x1xf32>
    %82 = arith.subf %80, %81 : vector<8x1xf32>
    %83 = vector.broadcast %78 : vector<8x1xf32> to vector<8x144xf32>
    %84 = arith.mulf %59, %83 : vector<8x144xf32>
    %85 = vector.broadcast %82 : vector<8x1xf32> to vector<8x144xf32>
    %86 = arith.addf %84, %85 : vector<8x144xf32>
    %cst_35 = arith.constant 0.000000e+00 : f32
    %87 = vector.broadcast %cst_35 : f32 to vector<8x144xf32>
    %88 = arith.cmpf oge, %86, %87 : vector<8x144xf32>
    %c0_36 = arith.constant 0 : index
    %c0_37 = arith.constant 0 : index
    %c0_38 = arith.constant 0 : index
    %89 = vector.load %arg13[%c0_36, %c0_37, %c0_38] : memref<4x8x1xf32, #tpu.memory_space<vmem>>, vector<1x8x1xf32>
    %90 = vector.shape_cast %89 : vector<1x8x1xf32> to vector<8x1xf32>
    %91 = vector.broadcast %90 : vector<8x1xf32> to vector<8x144xf32>
    %92 = arith.mulf %86, %91 : vector<8x144xf32>
    %93 = arith.select %88, %86, %92 : vector<8x144xi1>, vector<8x144xf32>
    %94 = vector.broadcast %6 : vector<1x144xf32> to vector<8x144xf32>
    %95 = arith.mulf %93, %94 : vector<8x144xf32>
    %c8 = arith.constant 8 : index
    %c128_39 = arith.constant 128 : index
    %96 = vector.load %arg26[%c8, %c128_39] : memref<32x400xf32, #tpu.memory_space<vmem>>, vector<8x144xf32>
    tpu.vector_store %arg26[%c8, %c128_39], %95 {strides = array<i32>} : memref<32x400xf32, #tpu.memory_space<vmem>>, vector<8x144xf32>,
    %c0_40 = arith.constant 0 : index
    %c0_41 = arith.constant 0 : index
    %97 = vector.load %arg4[%c0_40, %c0_41] : memref<16x9xf32, #tpu.memory_space<vmem>>, vector<16x9xf32>
    %c0_42 = arith.constant 0 : index
    %c128_43 = arith.constant 128 : index
    %98 = vector.load %arg26[%c0_42, %c128_43] : memref<32x400xf32, #tpu.memory_space<vmem>>, vector<16x144xf32>
    %99 = vector.extract_strided_slice %97 {offsets = [0, 4], sizes = [16, 1], strides = [1, 1]} : vector<16x9xf32> to vector<16x1xf32>
    %100 = vector.broadcast %99 : vector<16x1xf32> to vector<16x144xf32>
    %101 = arith.mulf %98, %100 : vector<16x144xf32>
    %c0_44 = arith.constant 0 : index
    %c109 = arith.constant 109 : index
    %102 = vector.load %arg26[%c0_44, %c109] : memref<32x400xf32, #tpu.memory_space<vmem>>, vector<16x144xf32>
    %103 = vector.extract_strided_slice %97 {offsets = [0, 0], sizes = [16, 1], strides = [1, 1]} : vector<16x9xf32> to vector<16x1xf32>
    %104 = vector.broadcast %103 : vector<16x1xf32> to vector<16x144xf32>
    %105 = arith.mulf %102, %104 : vector<16x144xf32>
    %106 = arith.addf %101, %105 : vector<16x144xf32>
    %c0_45 = arith.constant 0 : index
    %c110 = arith.constant 110 : index
    %107 = vector.load %arg26[%c0_45, %c110] : memref<32x400xf32, #tpu.memory_space<vmem>>, vector<16x144xf32>
    %108 = vector.extract_strided_slice %97 {offsets = [0, 1], sizes = [16, 1], strides = [1, 1]} : vector<16x9xf32> to vector<16x1xf32>
    %109 = vector.broadcast %108 : vector<16x1xf32> to vector<16x144xf32>
    %110 = arith.mulf %107, %109 : vector<16x144xf32>
    %111 = arith.addf %106, %110 : vector<16x144xf32>
    %c0_46 = arith.constant 0 : index
    %c111 = arith.constant 111 : index
    %112 = vector.load %arg26[%c0_46, %c111] : memref<32x400xf32, #tpu.memory_space<vmem>>, vector<16x144xf32>
    %113 = vector.extract_strided_slice %97 {offsets = [0, 2], sizes = [16, 1], strides = [1, 1]} : vector<16x9xf32> to vector<16x1xf32>
    %114 = vector.broadcast %113 : vector<16x1xf32> to vector<16x144xf32>
    %115 = arith.mulf %112, %114 : vector<16x144xf32>
    %116 = arith.addf %111, %115 : vector<16x144xf32>
    %c0_47 = arith.constant 0 : index
    %c127_48 = arith.constant 127 : index
    %117 = vector.load %arg26[%c0_47, %c127_48] : memref<32x400xf32, #tpu.memory_space<vmem>>, vector<16x144xf32>
    %118 = vector.extract_strided_slice %97 {offsets = [0, 3], sizes = [16, 1], strides = [1, 1]} : vector<16x9xf32> to vector<16x1xf32>
    %119 = vector.broadcast %118 : vector<16x1xf32> to vector<16x144xf32>
    %120 = arith.mulf %117, %119 : vector<16x144xf32>
    %121 = arith.addf %116, %120 : vector<16x144xf32>
    %c0_49 = arith.constant 0 : index
    %c129_50 = arith.constant 129 : index
    %122 = vector.load %arg26[%c0_49, %c129_50] : memref<32x400xf32, #tpu.memory_space<vmem>>, vector<16x144xf32>
    %123 = vector.extract_strided_slice %97 {offsets = [0, 5], sizes = [16, 1], strides = [1, 1]} : vector<16x9xf32> to vector<16x1xf32>
    %124 = vector.broadcast %123 : vector<16x1xf32> to vector<16x144xf32>
    %125 = arith.mulf %122, %124 : vector<16x144xf32>
    %126 = arith.addf %121, %125 : vector<16x144xf32>
    %c0_51 = arith.constant 0 : index
    %c145 = arith.constant 145 : index
    %127 = vector.load %arg26[%c0_51, %c145] : memref<32x400xf32, #tpu.memory_space<vmem>>, vector<16x144xf32>
    %128 = vector.extract_strided_slice %97 {offsets = [0, 6], sizes = [16, 1], strides = [1, 1]} : vector<16x9xf32> to vector<16x1xf32>
    %129 = vector.broadcast %128 : vector<16x1xf32> to vector<16x144xf32>
    %130 = arith.mulf %127, %129 : vector<16x144xf32>
    %131 = arith.addf %126, %130 : vector<16x144xf32>
    %c0_52 = arith.constant 0 : index
    %c146 = arith.constant 146 : index
    %132 = vector.load %arg26[%c0_52, %c146] : memref<32x400xf32, #tpu.memory_space<vmem>>, vector<16x144xf32>
    %133 = vector.extract_strided_slice %97 {offsets = [0, 7], sizes = [16, 1], strides = [1, 1]} : vector<16x9xf32> to vector<16x1xf32>
    %134 = vector.broadcast %133 : vector<16x1xf32> to vector<16x144xf32>
    %135 = arith.mulf %132, %134 : vector<16x144xf32>
    %136 = arith.addf %131, %135 : vector<16x144xf32>
    %c0_53 = arith.constant 0 : index
    %c147 = arith.constant 147 : index
    %137 = vector.load %arg26[%c0_53, %c147] : memref<32x400xf32, #tpu.memory_space<vmem>>, vector<16x144xf32>
    %138 = vector.extract_strided_slice %97 {offsets = [0, 8], sizes = [16, 1], strides = [1, 1]} : vector<16x9xf32> to vector<16x1xf32>
    %139 = vector.broadcast %138 : vector<16x1xf32> to vector<16x144xf32>
    %140 = arith.mulf %137, %139 : vector<16x144xf32>
    %141 = arith.addf %136, %140 : vector<16x144xf32>
    %c0_54 = arith.constant 0 : index
    %c0_55 = arith.constant 0 : index
    %142 = vector.load %arg5[%c0_54, %c0_55] : memref<8x16xf32, #tpu.memory_space<vmem>>, vector<8x16xf32>
    %cst_56 = arith.constant dense<0.000000e+00> : vector<8x144xf32>
    %143 = tpu.matmul %142, %141, %cst_56 {dimension_numbers = #tpu.dot_dimension_numbers<[1], [0], [0], [1], [0, 0, 1, 1], [], []>} : vector<8x16xf32>, vector<16x144xf32>, vector<8x144xf32> -> vector<8x144xf32>
    %c1 = arith.constant 1 : index
    %c0_57 = arith.constant 0 : index
    %c0_58 = arith.constant 0 : index
    %144 = vector.load %arg10[%c1, %c0_57, %c0_58] : memref<4x8x1xf32, #tpu.memory_space<vmem>>, vector<1x8x1xf32>
    %145 = vector.shape_cast %144 : vector<1x8x1xf32> to vector<8x1xf32>
    %146 = vector.broadcast %145 : vector<8x1xf32> to vector<8x144xf32>
    %147 = arith.addf %143, %146 : vector<8x144xf32>
    %148 = vector.broadcast %6 : vector<1x144xf32> to vector<8x144xf32>
    %149 = arith.mulf %147, %148 : vector<8x144xf32>
    %cst_59 = arith.constant dense<0.000000e+00> : vector<8xf32>
    %150 = vector.multi_reduction <add>, %149, %cst_59 [1] : vector<8x144xf32> to vector<8xf32>
    %151 = vector.shape_cast %150 : vector<8xf32> to vector<8x1xf32>
    %152 = arith.mulf %149, %149 : vector<8x144xf32>
    %cst_60 = arith.constant dense<0.000000e+00> : vector<8xf32>
    %153 = vector.multi_reduction <add>, %152, %cst_60 [1] : vector<8x144xf32> to vector<8xf32>
    %154 = vector.shape_cast %153 : vector<8xf32> to vector<8x1xf32>
    %cst_61 = arith.constant 7.812500e-03 : f32
    %155 = vector.broadcast %cst_61 : f32 to vector<8x1xf32>
    %156 = arith.mulf %151, %155 : vector<8x1xf32>
    %cst_62 = arith.constant 7.812500e-03 : f32
    %157 = vector.broadcast %cst_62 : f32 to vector<8x1xf32>
    %158 = arith.mulf %154, %157 : vector<8x1xf32>
    %159 = arith.mulf %156, %156 : vector<8x1xf32>
    %160 = arith.subf %158, %159 : vector<8x1xf32>
    %cst_63 = arith.constant 0.000000e+00 : f32
    %161 = vector.broadcast %cst_63 : f32 to vector<8x1xf32>
    %162 = arith.maximumf %160, %161 : vector<8x1xf32>
    %cst_64 = arith.constant 9.99999974E-6 : f32
    %163 = vector.broadcast %cst_64 : f32 to vector<8x1xf32>
    %164 = arith.addf %162, %163 : vector<8x1xf32>
    %165 = math.rsqrt %164 : vector<8x1xf32>
    %c1_65 = arith.constant 1 : index
    %c0_66 = arith.constant 0 : index
    %c0_67 = arith.constant 0 : index
    %166 = vector.load %arg11[%c1_65, %c0_66, %c0_67] : memref<4x8x1xf32, #tpu.memory_space<vmem>>, vector<1x8x1xf32>
    %167 = vector.shape_cast %166 : vector<1x8x1xf32> to vector<8x1xf32>
    %168 = arith.mulf %165, %167 : vector<8x1xf32>
    %c1_68 = arith.constant 1 : index
    %c0_69 = arith.constant 0 : index
    %c0_70 = arith.constant 0 : index
    %169 = vector.load %arg12[%c1_68, %c0_69, %c0_70] : memref<4x8x1xf32, #tpu.memory_space<vmem>>, vector<1x8x1xf32>
    %170 = vector.shape_cast %169 : vector<1x8x1xf32> to vector<8x1xf32>
    %171 = arith.mulf %156, %168 : vector<8x1xf32>
    %172 = arith.subf %170, %171 : vector<8x1xf32>
    %173 = vector.broadcast %168 : vector<8x1xf32> to vector<8x144xf32>
    %174 = arith.mulf %149, %173 : vector<8x144xf32>
    %175 = vector.broadcast %172 : vector<8x1xf32> to vector<8x144xf32>
    %176 = arith.addf %174, %175 : vector<8x144xf32>
    %cst_71 = arith.constant 0.000000e+00 : f32
    %177 = vector.broadcast %cst_71 : f32 to vector<8x144xf32>
    %178 = arith.cmpf oge, %176, %177 : vector<8x144xf32>
    %c1_72 = arith.constant 1 : index
    %c0_73 = arith.constant 0 : index
    %c0_74 = arith.constant 0 : index
    %179 = vector.load %arg13[%c1_72, %c0_73, %c0_74] : memref<4x8x1xf32, #tpu.memory_space<vmem>>, vector<1x8x1xf32>
    %180 = vector.shape_cast %179 : vector<1x8x1xf32> to vector<8x1xf32>
    %181 = vector.broadcast %180 : vector<8x1xf32> to vector<8x144xf32>
    %182 = arith.mulf %176, %181 : vector<8x144xf32>
    %183 = arith.select %178, %176, %182 : vector<8x144xi1>, vector<8x144xf32>
    %184 = vector.broadcast %6 : vector<1x144xf32> to vector<8x144xf32>
    %185 = arith.mulf %183, %184 : vector<8x144xf32>
    %c16 = arith.constant 16 : index
    %c128_75 = arith.constant 128 : index
    %186 = vector.load %arg26[%c16, %c128_75] : memref<32x400xf32, #tpu.memory_space<vmem>>, vector<8x144xf32>
    tpu.vector_store %arg26[%c16, %c128_75], %185 {strides = array<i32>} : memref<32x400xf32, #tpu.memory_space<vmem>>, vector<8x144xf32>,
    %c0_76 = arith.constant 0 : index
    %c0_77 = arith.constant 0 : index
    %187 = vector.load %arg6[%c0_76, %c0_77] : memref<24x9xf32, #tpu.memory_space<vmem>>, vector<24x9xf32>
    %c0_78 = arith.constant 0 : index
    %c128_79 = arith.constant 128 : index
    %188 = vector.load %arg26[%c0_78, %c128_79] : memref<32x400xf32, #tpu.memory_space<vmem>>, vector<24x144xf32>
    %189 = vector.extract_strided_slice %187 {offsets = [0, 4], sizes = [24, 1], strides = [1, 1]} : vector<24x9xf32> to vector<24x1xf32>
    %190 = vector.broadcast %189 : vector<24x1xf32> to vector<24x144xf32>
    %191 = arith.mulf %188, %190 : vector<24x144xf32>
    %c0_80 = arith.constant 0 : index
    %c91 = arith.constant 91 : index
    %192 = vector.load %arg26[%c0_80, %c91] : memref<32x400xf32, #tpu.memory_space<vmem>>, vector<24x144xf32>
    %193 = vector.extract_strided_slice %187 {offsets = [0, 0], sizes = [24, 1], strides = [1, 1]} : vector<24x9xf32> to vector<24x1xf32>
    %194 = vector.broadcast %193 : vector<24x1xf32> to vector<24x144xf32>
    %195 = arith.mulf %192, %194 : vector<24x144xf32>
    %196 = arith.addf %191, %195 : vector<24x144xf32>
    %c0_81 = arith.constant 0 : index
    %c92 = arith.constant 92 : index
    %197 = vector.load %arg26[%c0_81, %c92] : memref<32x400xf32, #tpu.memory_space<vmem>>, vector<24x144xf32>
    %198 = vector.extract_strided_slice %187 {offsets = [0, 1], sizes = [24, 1], strides = [1, 1]} : vector<24x9xf32> to vector<24x1xf32>
    %199 = vector.broadcast %198 : vector<24x1xf32> to vector<24x144xf32>
    %200 = arith.mulf %197, %199 : vector<24x144xf32>
    %201 = arith.addf %196, %200 : vector<24x144xf32>
    %c0_82 = arith.constant 0 : index
    %c93 = arith.constant 93 : index
    %202 = vector.load %arg26[%c0_82, %c93] : memref<32x400xf32, #tpu.memory_space<vmem>>, vector<24x144xf32>
    %203 = vector.extract_strided_slice %187 {offsets = [0, 2], sizes = [24, 1], strides = [1, 1]} : vector<24x9xf32> to vector<24x1xf32>
    %204 = vector.broadcast %203 : vector<24x1xf32> to vector<24x144xf32>
    %205 = arith.mulf %202, %204 : vector<24x144xf32>
    %206 = arith.addf %201, %205 : vector<24x144xf32>
    %c0_83 = arith.constant 0 : index
    %c127_84 = arith.constant 127 : index
    %207 = vector.load %arg26[%c0_83, %c127_84] : memref<32x400xf32, #tpu.memory_space<vmem>>, vector<24x144xf32>
    %208 = vector.extract_strided_slice %187 {offsets = [0, 3], sizes = [24, 1], strides = [1, 1]} : vector<24x9xf32> to vector<24x1xf32>
    %209 = vector.broadcast %208 : vector<24x1xf32> to vector<24x144xf32>
    %210 = arith.mulf %207, %209 : vector<24x144xf32>
    %211 = arith.addf %206, %210 : vector<24x144xf32>
    %c0_85 = arith.constant 0 : index
    %c129_86 = arith.constant 129 : index
    %212 = vector.load %arg26[%c0_85, %c129_86] : memref<32x400xf32, #tpu.memory_space<vmem>>, vector<24x144xf32>
    %213 = vector.extract_strided_slice %187 {offsets = [0, 5], sizes = [24, 1], strides = [1, 1]} : vector<24x9xf32> to vector<24x1xf32>
    %214 = vector.broadcast %213 : vector<24x1xf32> to vector<24x144xf32>
    %215 = arith.mulf %212, %214 : vector<24x144xf32>
    %216 = arith.addf %211, %215 : vector<24x144xf32>
    %c0_87 = arith.constant 0 : index
    %c163 = arith.constant 163 : index
    %217 = vector.load %arg26[%c0_87, %c163] : memref<32x400xf32, #tpu.memory_space<vmem>>, vector<24x144xf32>
    %218 = vector.extract_strided_slice %187 {offsets = [0, 6], sizes = [24, 1], strides = [1, 1]} : vector<24x9xf32> to vector<24x1xf32>
    %219 = vector.broadcast %218 : vector<24x1xf32> to vector<24x144xf32>
    %220 = arith.mulf %217, %219 : vector<24x144xf32>
    %221 = arith.addf %216, %220 : vector<24x144xf32>
    %c0_88 = arith.constant 0 : index
    %c164 = arith.constant 164 : index
    %222 = vector.load %arg26[%c0_88, %c164] : memref<32x400xf32, #tpu.memory_space<vmem>>, vector<24x144xf32>
    %223 = vector.extract_strided_slice %187 {offsets = [0, 7], sizes = [24, 1], strides = [1, 1]} : vector<24x9xf32> to vector<24x1xf32>
    %224 = vector.broadcast %223 : vector<24x1xf32> to vector<24x144xf32>
    %225 = arith.mulf %222, %224 : vector<24x144xf32>
    %226 = arith.addf %221, %225 : vector<24x144xf32>
    %c0_89 = arith.constant 0 : index
    %c165 = arith.constant 165 : index
    %227 = vector.load %arg26[%c0_89, %c165] : memref<32x400xf32, #tpu.memory_space<vmem>>, vector<24x144xf32>
    %228 = vector.extract_strided_slice %187 {offsets = [0, 8], sizes = [24, 1], strides = [1, 1]} : vector<24x9xf32> to vector<24x1xf32>
    %229 = vector.broadcast %228 : vector<24x1xf32> to vector<24x144xf32>
    %230 = arith.mulf %227, %229 : vector<24x144xf32>
    %231 = arith.addf %226, %230 : vector<24x144xf32>
    %c0_90 = arith.constant 0 : index
    %c0_91 = arith.constant 0 : index
    %232 = vector.load %arg7[%c0_90, %c0_91] : memref<8x24xf32, #tpu.memory_space<vmem>>, vector<8x24xf32>
    %cst_92 = arith.constant dense<0.000000e+00> : vector<8x144xf32>
    %233 = tpu.matmul %232, %231, %cst_92 {dimension_numbers = #tpu.dot_dimension_numbers<[1], [0], [0], [1], [0, 0, 1, 1], [], []>} : vector<8x24xf32>, vector<24x144xf32>, vector<8x144xf32> -> vector<8x144xf32>
    %c2 = arith.constant 2 : index
    %c0_93 = arith.constant 0 : index
    %c0_94 = arith.constant 0 : index
    %234 = vector.load %arg10[%c2, %c0_93, %c0_94] : memref<4x8x1xf32, #tpu.memory_space<vmem>>, vector<1x8x1xf32>
    %235 = vector.shape_cast %234 : vector<1x8x1xf32> to vector<8x1xf32>
    %236 = vector.broadcast %235 : vector<8x1xf32> to vector<8x144xf32>
    %237 = arith.addf %233, %236 : vector<8x144xf32>
    %238 = vector.broadcast %6 : vector<1x144xf32> to vector<8x144xf32>
    %239 = arith.mulf %237, %238 : vector<8x144xf32>
    %cst_95 = arith.constant dense<0.000000e+00> : vector<8xf32>
    %240 = vector.multi_reduction <add>, %239, %cst_95 [1] : vector<8x144xf32> to vector<8xf32>
    %241 = vector.shape_cast %240 : vector<8xf32> to vector<8x1xf32>
    %242 = arith.mulf %239, %239 : vector<8x144xf32>
    %cst_96 = arith.constant dense<0.000000e+00> : vector<8xf32>
    %243 = vector.multi_reduction <add>, %242, %cst_96 [1] : vector<8x144xf32> to vector<8xf32>
    %244 = vector.shape_cast %243 : vector<8xf32> to vector<8x1xf32>
    %cst_97 = arith.constant 7.812500e-03 : f32
    %245 = vector.broadcast %cst_97 : f32 to vector<8x1xf32>
    %246 = arith.mulf %241, %245 : vector<8x1xf32>
    %cst_98 = arith.constant 7.812500e-03 : f32
    %247 = vector.broadcast %cst_98 : f32 to vector<8x1xf32>
    %248 = arith.mulf %244, %247 : vector<8x1xf32>
    %249 = arith.mulf %246, %246 : vector<8x1xf32>
    %250 = arith.subf %248, %249 : vector<8x1xf32>
    %cst_99 = arith.constant 0.000000e+00 : f32
    %251 = vector.broadcast %cst_99 : f32 to vector<8x1xf32>
    %252 = arith.maximumf %250, %251 : vector<8x1xf32>
    %cst_100 = arith.constant 9.99999974E-6 : f32
    %253 = vector.broadcast %cst_100 : f32 to vector<8x1xf32>
    %254 = arith.addf %252, %253 : vector<8x1xf32>
    %255 = math.rsqrt %254 : vector<8x1xf32>
    %c2_101 = arith.constant 2 : index
    %c0_102 = arith.constant 0 : index
    %c0_103 = arith.constant 0 : index
    %256 = vector.load %arg11[%c2_101, %c0_102, %c0_103] : memref<4x8x1xf32, #tpu.memory_space<vmem>>, vector<1x8x1xf32>
    %257 = vector.shape_cast %256 : vector<1x8x1xf32> to vector<8x1xf32>
    %258 = arith.mulf %255, %257 : vector<8x1xf32>
    %c2_104 = arith.constant 2 : index
    %c0_105 = arith.constant 0 : index
    %c0_106 = arith.constant 0 : index
    %259 = vector.load %arg12[%c2_104, %c0_105, %c0_106] : memref<4x8x1xf32, #tpu.memory_space<vmem>>, vector<1x8x1xf32>
    %260 = vector.shape_cast %259 : vector<1x8x1xf32> to vector<8x1xf32>
    %261 = arith.mulf %246, %258 : vector<8x1xf32>
    %262 = arith.subf %260, %261 : vector<8x1xf32>
    %263 = vector.broadcast %258 : vector<8x1xf32> to vector<8x144xf32>
    %264 = arith.mulf %239, %263 : vector<8x144xf32>
    %265 = vector.broadcast %262 : vector<8x1xf32> to vector<8x144xf32>
    %266 = arith.addf %264, %265 : vector<8x144xf32>
    %cst_107 = arith.constant 0.000000e+00 : f32
    %267 = vector.broadcast %cst_107 : f32 to vector<8x144xf32>
    %268 = arith.cmpf oge, %266, %267 : vector<8x144xf32>
    %c2_108 = arith.constant 2 : index
    %c0_109 = arith.constant 0 : index
    %c0_110 = arith.constant 0 : index
    %269 = vector.load %arg13[%c2_108, %c0_109, %c0_110] : memref<4x8x1xf32, #tpu.memory_space<vmem>>, vector<1x8x1xf32>
    %270 = vector.shape_cast %269 : vector<1x8x1xf32> to vector<8x1xf32>
    %271 = vector.broadcast %270 : vector<8x1xf32> to vector<8x144xf32>
    %272 = arith.mulf %266, %271 : vector<8x144xf32>
    %273 = arith.select %268, %266, %272 : vector<8x144xi1>, vector<8x144xf32>
    %274 = vector.broadcast %6 : vector<1x144xf32> to vector<8x144xf32>
    %275 = arith.mulf %273, %274 : vector<8x144xf32>
    %c24 = arith.constant 24 : index
    %c128_111 = arith.constant 128 : index
    %276 = vector.load %arg26[%c24, %c128_111] : memref<32x400xf32, #tpu.memory_space<vmem>>, vector<8x144xf32>
    tpu.vector_store %arg26[%c24, %c128_111], %275 {strides = array<i32>} : memref<32x400xf32, #tpu.memory_space<vmem>>, vector<8x144xf32>,
    %c0_112 = arith.constant 0 : index
    %c0_113 = arith.constant 0 : index
    %277 = vector.load %arg8[%c0_112, %c0_113] : memref<32x9xf32, #tpu.memory_space<vmem>>, vector<32x9xf32>
    %c0_114 = arith.constant 0 : index
    %c128_115 = arith.constant 128 : index
    %278 = vector.load %arg26[%c0_114, %c128_115] : memref<32x400xf32, #tpu.memory_space<vmem>>, vector<32x144xf32>
    %279 = vector.extract_strided_slice %277 {offsets = [0, 4], sizes = [32, 1], strides = [1, 1]} : vector<32x9xf32> to vector<32x1xf32>
    %280 = vector.broadcast %279 : vector<32x1xf32> to vector<32x144xf32>
    %281 = arith.mulf %278, %280 : vector<32x144xf32>
    %c0_116 = arith.constant 0 : index
    %c55 = arith.constant 55 : index
    %282 = vector.load %arg26[%c0_116, %c55] : memref<32x400xf32, #tpu.memory_space<vmem>>, vector<32x144xf32>
    %283 = vector.extract_strided_slice %277 {offsets = [0, 0], sizes = [32, 1], strides = [1, 1]} : vector<32x9xf32> to vector<32x1xf32>
    %284 = vector.broadcast %283 : vector<32x1xf32> to vector<32x144xf32>
    %285 = arith.mulf %282, %284 : vector<32x144xf32>
    %286 = arith.addf %281, %285 : vector<32x144xf32>
    %c0_117 = arith.constant 0 : index
    %c56 = arith.constant 56 : index
    %287 = vector.load %arg26[%c0_117, %c56] : memref<32x400xf32, #tpu.memory_space<vmem>>, vector<32x144xf32>
    %288 = vector.extract_strided_slice %277 {offsets = [0, 1], sizes = [32, 1], strides = [1, 1]} : vector<32x9xf32> to vector<32x1xf32>
    %289 = vector.broadcast %288 : vector<32x1xf32> to vector<32x144xf32>
    %290 = arith.mulf %287, %289 : vector<32x144xf32>
    %291 = arith.addf %286, %290 : vector<32x144xf32>
    %c0_118 = arith.constant 0 : index
    %c57 = arith.constant 57 : index
    %292 = vector.load %arg26[%c0_118, %c57] : memref<32x400xf32, #tpu.memory_space<vmem>>, vector<32x144xf32>
    %293 = vector.extract_strided_slice %277 {offsets = [0, 2], sizes = [32, 1], strides = [1, 1]} : vector<32x9xf32> to vector<32x1xf32>
    %294 = vector.broadcast %293 : vector<32x1xf32> to vector<32x144xf32>
    %295 = arith.mulf %292, %294 : vector<32x144xf32>
    %296 = arith.addf %291, %295 : vector<32x144xf32>
    %c0_119 = arith.constant 0 : index
    %c127_120 = arith.constant 127 : index
    %297 = vector.load %arg26[%c0_119, %c127_120] : memref<32x400xf32, #tpu.memory_space<vmem>>, vector<32x144xf32>
    %298 = vector.extract_strided_slice %277 {offsets = [0, 3], sizes = [32, 1], strides = [1, 1]} : vector<32x9xf32> to vector<32x1xf32>
    %299 = vector.broadcast %298 : vector<32x1xf32> to vector<32x144xf32>
    %300 = arith.mulf %297, %299 : vector<32x144xf32>
    %301 = arith.addf %296, %300 : vector<32x144xf32>
    %c0_121 = arith.constant 0 : index
    %c129_122 = arith.constant 129 : index
    %302 = vector.load %arg26[%c0_121, %c129_122] : memref<32x400xf32, #tpu.memory_space<vmem>>, vector<32x144xf32>
    %303 = vector.extract_strided_slice %277 {offsets = [0, 5], sizes = [32, 1], strides = [1, 1]} : vector<32x9xf32> to vector<32x1xf32>
    %304 = vector.broadcast %303 : vector<32x1xf32> to vector<32x144xf32>
    %305 = arith.mulf %302, %304 : vector<32x144xf32>
    %306 = arith.addf %301, %305 : vector<32x144xf32>
    %c0_123 = arith.constant 0 : index
    %c199 = arith.constant 199 : index
    %307 = vector.load %arg26[%c0_123, %c199] : memref<32x400xf32, #tpu.memory_space<vmem>>, vector<32x144xf32>
    %308 = vector.extract_strided_slice %277 {offsets = [0, 6], sizes = [32, 1], strides = [1, 1]} : vector<32x9xf32> to vector<32x1xf32>
    %309 = vector.broadcast %308 : vector<32x1xf32> to vector<32x144xf32>
    %310 = arith.mulf %307, %309 : vector<32x144xf32>
    %311 = arith.addf %306, %310 : vector<32x144xf32>
    %c0_124 = arith.constant 0 : index
    %c200 = arith.constant 200 : index
    %312 = vector.load %arg26[%c0_124, %c200] : memref<32x400xf32, #tpu.memory_space<vmem>>, vector<32x144xf32>
    %313 = vector.extract_strided_slice %277 {offsets = [0, 7], sizes = [32, 1], strides = [1, 1]} : vector<32x9xf32> to vector<32x1xf32>
    %314 = vector.broadcast %313 : vector<32x1xf32> to vector<32x144xf32>
    %315 = arith.mulf %312, %314 : vector<32x144xf32>
    %316 = arith.addf %311, %315 : vector<32x144xf32>
    %c0_125 = arith.constant 0 : index
    %c201 = arith.constant 201 : index
    %317 = vector.load %arg26[%c0_125, %c201] : memref<32x400xf32, #tpu.memory_space<vmem>>, vector<32x144xf32>
    %318 = vector.extract_strided_slice %277 {offsets = [0, 8], sizes = [32, 1], strides = [1, 1]} : vector<32x9xf32> to vector<32x1xf32>
    %319 = vector.broadcast %318 : vector<32x1xf32> to vector<32x144xf32>
    %320 = arith.mulf %317, %319 : vector<32x144xf32>
    %321 = arith.addf %316, %320 : vector<32x144xf32>
    %c0_126 = arith.constant 0 : index
    %c0_127 = arith.constant 0 : index
    %322 = vector.load %arg9[%c0_126, %c0_127] : memref<8x32xf32, #tpu.memory_space<vmem>>, vector<8x32xf32>
    %cst_128 = arith.constant dense<0.000000e+00> : vector<8x144xf32>
    %323 = tpu.matmul %322, %321, %cst_128 {dimension_numbers = #tpu.dot_dimension_numbers<[1], [0], [0], [1], [0, 0, 1, 1], [], []>} : vector<8x32xf32>, vector<32x144xf32>, vector<8x144xf32> -> vector<8x144xf32>
    %c3 = arith.constant 3 : index
    %c0_129 = arith.constant 0 : index
    %c0_130 = arith.constant 0 : index
    %324 = vector.load %arg10[%c3, %c0_129, %c0_130] : memref<4x8x1xf32, #tpu.memory_space<vmem>>, vector<1x8x1xf32>
    %325 = vector.shape_cast %324 : vector<1x8x1xf32> to vector<8x1xf32>
    %326 = vector.broadcast %325 : vector<8x1xf32> to vector<8x144xf32>
    %327 = arith.addf %323, %326 : vector<8x144xf32>
    %328 = vector.broadcast %6 : vector<1x144xf32> to vector<8x144xf32>
    %329 = arith.mulf %327, %328 : vector<8x144xf32>
    %cst_131 = arith.constant dense<0.000000e+00> : vector<8xf32>
    %330 = vector.multi_reduction <add>, %329, %cst_131 [1] : vector<8x144xf32> to vector<8xf32>
    %331 = vector.shape_cast %330 : vector<8xf32> to vector<8x1xf32>
    %332 = arith.mulf %329, %329 : vector<8x144xf32>
    %cst_132 = arith.constant dense<0.000000e+00> : vector<8xf32>
    %333 = vector.multi_reduction <add>, %332, %cst_132 [1] : vector<8x144xf32> to vector<8xf32>
    %334 = vector.shape_cast %333 : vector<8xf32> to vector<8x1xf32>
    %cst_133 = arith.constant 7.812500e-03 : f32
    %335 = vector.broadcast %cst_133 : f32 to vector<8x1xf32>
    %336 = arith.mulf %331, %335 : vector<8x1xf32>
    %cst_134 = arith.constant 7.812500e-03 : f32
    %337 = vector.broadcast %cst_134 : f32 to vector<8x1xf32>
    %338 = arith.mulf %334, %337 : vector<8x1xf32>
    %339 = arith.mulf %336, %336 : vector<8x1xf32>
    %340 = arith.subf %338, %339 : vector<8x1xf32>
    %cst_135 = arith.constant 0.000000e+00 : f32
    %341 = vector.broadcast %cst_135 : f32 to vector<8x1xf32>
    %342 = arith.maximumf %340, %341 : vector<8x1xf32>
    %cst_136 = arith.constant 9.99999974E-6 : f32
    %343 = vector.broadcast %cst_136 : f32 to vector<8x1xf32>
    %344 = arith.addf %342, %343 : vector<8x1xf32>
    %345 = math.rsqrt %344 : vector<8x1xf32>
    %c3_137 = arith.constant 3 : index
    %c0_138 = arith.constant 0 : index
    %c0_139 = arith.constant 0 : index
    %346 = vector.load %arg11[%c3_137, %c0_138, %c0_139] : memref<4x8x1xf32, #tpu.memory_space<vmem>>, vector<1x8x1xf32>
    %347 = vector.shape_cast %346 : vector<1x8x1xf32> to vector<8x1xf32>
    %348 = arith.mulf %345, %347 : vector<8x1xf32>
    %c3_140 = arith.constant 3 : index
    %c0_141 = arith.constant 0 : index
    %c0_142 = arith.constant 0 : index
    %349 = vector.load %arg12[%c3_140, %c0_141, %c0_142] : memref<4x8x1xf32, #tpu.memory_space<vmem>>, vector<1x8x1xf32>
    %350 = vector.shape_cast %349 : vector<1x8x1xf32> to vector<8x1xf32>
    %351 = arith.mulf %336, %348 : vector<8x1xf32>
    %352 = arith.subf %350, %351 : vector<8x1xf32>
    %353 = vector.broadcast %348 : vector<8x1xf32> to vector<8x144xf32>
    %354 = arith.mulf %329, %353 : vector<8x144xf32>
    %355 = vector.broadcast %352 : vector<8x1xf32> to vector<8x144xf32>
    %356 = arith.addf %354, %355 : vector<8x144xf32>
    %cst_143 = arith.constant 0.000000e+00 : f32
    %357 = vector.broadcast %cst_143 : f32 to vector<8x144xf32>
    %358 = arith.cmpf oge, %356, %357 : vector<8x144xf32>
    %c3_144 = arith.constant 3 : index
    %c0_145 = arith.constant 0 : index
    %c0_146 = arith.constant 0 : index
    %359 = vector.load %arg13[%c3_144, %c0_145, %c0_146] : memref<4x8x1xf32, #tpu.memory_space<vmem>>, vector<1x8x1xf32>
    %360 = vector.shape_cast %359 : vector<1x8x1xf32> to vector<8x1xf32>
    %361 = vector.broadcast %360 : vector<8x1xf32> to vector<8x144xf32>
    %362 = arith.mulf %356, %361 : vector<8x144xf32>
    %363 = arith.select %358, %356, %362 : vector<8x144xi1>, vector<8x144xf32>
    %364 = vector.broadcast %6 : vector<1x144xf32> to vector<8x144xf32>
    %365 = arith.mulf %363, %364 : vector<8x144xf32>
    %c0_147 = arith.constant 0 : index
    %c128_148 = arith.constant 128 : index
    %366 = vector.load %arg26[%c0_147, %c128_148] : memref<32x400xf32, #tpu.memory_space<vmem>>, vector<8x144xf32>
    tpu.vector_store %arg26[%c0_147, %c128_148], %365 {strides = array<i32>} : memref<32x400xf32, #tpu.memory_space<vmem>>, vector<8x144xf32>,
    %c0_149 = arith.constant 0 : index
    %c128_150 = arith.constant 128 : index
    %367 = vector.load %arg26[%c0_149, %c128_150] : memref<32x400xf32, #tpu.memory_space<vmem>>, vector<8x144xf32>
    %c0_151 = arith.constant 0 : index
    %c127_152 = arith.constant 127 : index
    %368 = vector.load %arg26[%c0_151, %c127_152] : memref<32x400xf32, #tpu.memory_space<vmem>>, vector<8x144xf32>
    %c0_153 = arith.constant 0 : index
    %c0_154 = arith.constant 0 : index
    %369 = vector.load %arg15[%c0_153, %c0_154] : memref<8x8xf32, #tpu.memory_space<vmem>>, vector<8x8xf32>
    %cst_155 = arith.constant dense<0.000000e+00> : vector<8x144xf32>
    %370 = tpu.matmul %369, %367, %cst_155 {dimension_numbers = #tpu.dot_dimension_numbers<[1], [0], [0], [1], [0, 0, 1, 1], [], []>} : vector<8x8xf32>, vector<8x144xf32>, vector<8x144xf32> -> vector<8x144xf32>
    %cst_156 = arith.constant dense<0.000000e+00> : vector<8x144xf32>
    %371 = tpu.matmul %369, %368, %cst_156 {dimension_numbers = #tpu.dot_dimension_numbers<[1], [0], [0], [1], [0, 0, 1, 1], [], []>} : vector<8x8xf32>, vector<8x144xf32>, vector<8x144xf32> -> vector<8x144xf32>
    %c0_157 = arith.constant 0 : index
    %c0_158 = arith.constant 0 : index
    %372 = vector.load %arg16[%c0_157, %c0_158] : memref<1x1xf32, #tpu.memory_space<vmem>>, vector<1x1xf32>
    %373 = vector.extract_strided_slice %370 {offsets = [0, 0], sizes = [1, 144], strides = [1, 1]} : vector<8x144xf32> to vector<1x144xf32>
    %374 = vector.extract_strided_slice %371 {offsets = [2, 0], sizes = [1, 144], strides = [1, 1]} : vector<8x144xf32> to vector<1x144xf32>
    %375 = arith.addf %373, %374 : vector<1x144xf32>
    %376 = vector.broadcast %372 : vector<1x1xf32> to vector<1x144xf32>
    %377 = arith.addf %375, %376 : vector<1x144xf32>
    %378 = vector.extract_strided_slice %370 {offsets = [1, 0], sizes = [1, 144], strides = [1, 1]} : vector<8x144xf32> to vector<1x144xf32>
    %379 = vector.broadcast %372 : vector<1x1xf32> to vector<1x144xf32>
    %380 = arith.addf %378, %379 : vector<1x144xf32>
    %381 = arith.mulf %380, %6 : vector<1x144xf32>
    %382 = vector.shape_cast %377 : vector<1x144xf32> to vector<1x1x144xf32>
    %cst_159 = arith.constant dense<0.000000e+00> : vector<1xf32>
    %383 = vector.multi_reduction <add>, %382, %cst_159 [1, 2] : vector<1x1x144xf32> to vector<1xf32>
    %384 = vector.shape_cast %383 : vector<1xf32> to vector<1x1x1xf32>
    %385 = vector.extract %384[0, 0, 0] : f32 from vector<1x1x1xf32>
    %386 = vector.broadcast %385 : f32 to vector<1x1xf32>
    %387 = vector.shape_cast %381 : vector<1x144xf32> to vector<1x1x144xf32>
    %cst_160 = arith.constant dense<0.000000e+00> : vector<1xf32>
    %388 = vector.multi_reduction <add>, %387, %cst_160 [1, 2] : vector<1x1x144xf32> to vector<1xf32>
    %389 = vector.shape_cast %388 : vector<1xf32> to vector<1x1x1xf32>
    %390 = vector.extract %389[0, 0, 0] : f32 from vector<1x1x1xf32>
    %391 = vector.broadcast %390 : f32 to vector<1x1xf32>
    %392 = arith.addf %386, %391 : vector<1x1xf32>
    %393 = arith.mulf %377, %377 : vector<1x144xf32>
    %394 = vector.shape_cast %393 : vector<1x144xf32> to vector<1x1x144xf32>
    %cst_161 = arith.constant dense<0.000000e+00> : vector<1xf32>
    %395 = vector.multi_reduction <add>, %394, %cst_161 [1, 2] : vector<1x1x144xf32> to vector<1xf32>
    %396 = vector.shape_cast %395 : vector<1xf32> to vector<1x1x1xf32>
    %397 = vector.extract %396[0, 0, 0] : f32 from vector<1x1x1xf32>
    %398 = vector.broadcast %397 : f32 to vector<1x1xf32>
    %399 = arith.mulf %381, %381 : vector<1x144xf32>
    %400 = vector.shape_cast %399 : vector<1x144xf32> to vector<1x1x144xf32>
    %cst_162 = arith.constant dense<0.000000e+00> : vector<1xf32>
    %401 = vector.multi_reduction <add>, %400, %cst_162 [1, 2] : vector<1x1x144xf32> to vector<1xf32>
    %402 = vector.shape_cast %401 : vector<1xf32> to vector<1x1x1xf32>
    %403 = vector.extract %402[0, 0, 0] : f32 from vector<1x1x1xf32>
    %404 = vector.broadcast %403 : f32 to vector<1x1xf32>
    %405 = arith.addf %398, %404 : vector<1x1xf32>
    %cst_163 = arith.constant 0.0036764706 : f32
    %406 = vector.broadcast %cst_163 : f32 to vector<1x1xf32>
    %407 = arith.mulf %392, %406 : vector<1x1xf32>
    %cst_164 = arith.constant 0.0036764706 : f32
    %408 = vector.broadcast %cst_164 : f32 to vector<1x1xf32>
    %409 = arith.mulf %405, %408 : vector<1x1xf32>
    %410 = arith.mulf %407, %407 : vector<1x1xf32>
    %411 = arith.subf %409, %410 : vector<1x1xf32>
    %cst_165 = arith.constant 0.000000e+00 : f32
    %412 = vector.broadcast %cst_165 : f32 to vector<1x1xf32>
    %413 = arith.maximumf %411, %412 : vector<1x1xf32>
    %cst_166 = arith.constant 9.99999974E-6 : f32
    %414 = vector.broadcast %cst_166 : f32 to vector<1x1xf32>
    %415 = arith.addf %413, %414 : vector<1x1xf32>
    %416 = math.rsqrt %415 : vector<1x1xf32>
    %c0_167 = arith.constant 0 : index
    %c0_168 = arith.constant 0 : index
    %417 = vector.load %arg17[%c0_167, %c0_168] : memref<1x1xf32, #tpu.memory_space<vmem>>, vector<1x1xf32>
    %418 = arith.mulf %416, %417 : vector<1x1xf32>
    %c0_169 = arith.constant 0 : index
    %c0_170 = arith.constant 0 : index
    %419 = vector.load %arg18[%c0_169, %c0_170] : memref<1x1xf32, #tpu.memory_space<vmem>>, vector<1x1xf32>
    %420 = arith.mulf %407, %418 : vector<1x1xf32>
    %421 = arith.subf %419, %420 : vector<1x1xf32>
    %c0_171 = arith.constant 0 : index
    %c0_172 = arith.constant 0 : index
    %422 = vector.load %arg22[%c0_171, %c0_172] : memref<1x144xf32, #tpu.memory_space<vmem>>, vector<1x144xf32>
    %423 = vector.broadcast %418 : vector<1x1xf32> to vector<1x144xf32>
    %424 = arith.mulf %377, %423 : vector<1x144xf32>
    %425 = vector.broadcast %421 : vector<1x1xf32> to vector<1x144xf32>
    %426 = arith.addf %424, %425 : vector<1x144xf32>
    %cst_173 = arith.constant 0.000000e+00 : f32
    %427 = vector.broadcast %cst_173 : f32 to vector<1x144xf32>
    %428 = arith.cmpf oge, %426, %427 : vector<1x144xf32>
    %c0_174 = arith.constant 0 : index
    %c0_175 = arith.constant 0 : index
    %429 = vector.load %arg19[%c0_174, %c0_175] : memref<1x1xf32, #tpu.memory_space<vmem>>, vector<1x1xf32>
    %430 = vector.broadcast %429 : vector<1x1xf32> to vector<1x144xf32>
    %431 = arith.mulf %426, %430 : vector<1x144xf32>
    %432 = arith.select %428, %426, %431 : vector<1x144xi1>, vector<1x144xf32>
    %c0_176 = arith.constant 0 : index
    %c0_177 = arith.constant 0 : index
    %433 = vector.load %arg20[%c0_176, %c0_177] : memref<1x1xf32, #tpu.memory_space<vmem>>, vector<1x1xf32>
    %434 = vector.broadcast %433 : vector<1x1xf32> to vector<1x144xf32>
    %435 = arith.mulf %432, %434 : vector<1x144xf32>
    %c0_178 = arith.constant 0 : index
    %c0_179 = arith.constant 0 : index
    %436 = vector.load %arg21[%c0_178, %c0_179] : memref<1x1xf32, #tpu.memory_space<vmem>>, vector<1x1xf32>
    %437 = vector.broadcast %436 : vector<1x1xf32> to vector<1x144xf32>
    %438 = arith.addf %435, %437 : vector<1x144xf32>
    %439 = arith.mulf %422, %438 : vector<1x144xf32>
    %440 = arith.negf %439 : vector<1x144xf32>
    %441 = math.exp %440 : vector<1x144xf32>
    %cst_180 = arith.constant 1.000000e+00 : f32
    %442 = vector.broadcast %cst_180 : f32 to vector<1x144xf32>
    %443 = arith.addf %442, %441 : vector<1x144xf32>
    %444 = arith.divf %442, %443 : vector<1x144xf32>
    %cst_181 = arith.constant 2.000000e+00 : f32
    %445 = vector.broadcast %cst_181 : f32 to vector<1x144xf32>
    %446 = arith.mulf %445, %444 : vector<1x144xf32>
    %c0_182 = arith.constant 0 : index
    %c0_183 = arith.constant 0 : index
    %c0_184 = arith.constant 0 : index
    %447 = vector.load %arg24[%c0_182, %c0_183, %c0_184] : memref<1x1x144xf32, #tpu.memory_space<vmem>>, vector<1x1x144xf32>
    %448 = vector.shape_cast %447 : vector<1x1x144xf32> to vector<1x144xf32>
    %449 = vector.shape_cast %446 : vector<1x144xf32> to vector<1x1x144xf32>
    tpu.vector_store %arg24[%c0_182, %c0_183, %c0_184], %449 {strides = array<i32>} : memref<1x1x144xf32, #tpu.memory_space<vmem>>, vector<1x1x144xf32>,
    %c0_185 = arith.constant 0 : index
    %c0_186 = arith.constant 0 : index
    %450 = vector.load %arg23[%c0_185, %c0_186] : memref<1x144xf32, #tpu.memory_space<vmem>>, vector<1x144xf32>
    %451 = vector.broadcast %418 : vector<1x1xf32> to vector<1x144xf32>
    %452 = arith.mulf %381, %451 : vector<1x144xf32>
    %453 = vector.broadcast %421 : vector<1x1xf32> to vector<1x144xf32>
    %454 = arith.addf %452, %453 : vector<1x144xf32>
    %cst_187 = arith.constant 0.000000e+00 : f32
    %455 = vector.broadcast %cst_187 : f32 to vector<1x144xf32>
    %456 = arith.cmpf oge, %454, %455 : vector<1x144xf32>
    %c0_188 = arith.constant 0 : index
    %c0_189 = arith.constant 0 : index
    %457 = vector.load %arg19[%c0_188, %c0_189] : memref<1x1xf32, #tpu.memory_space<vmem>>, vector<1x1xf32>
    %458 = vector.broadcast %457 : vector<1x1xf32> to vector<1x144xf32>
    %459 = arith.mulf %454, %458 : vector<1x144xf32>
    %460 = arith.select %456, %454, %459 : vector<1x144xi1>, vector<1x144xf32>
    %c0_190 = arith.constant 0 : index
    %c0_191 = arith.constant 0 : index
    %461 = vector.load %arg20[%c0_190, %c0_191] : memref<1x1xf32, #tpu.memory_space<vmem>>, vector<1x1xf32>
    %462 = vector.broadcast %461 : vector<1x1xf32> to vector<1x144xf32>
    %463 = arith.mulf %460, %462 : vector<1x144xf32>
    %c0_192 = arith.constant 0 : index
    %c0_193 = arith.constant 0 : index
    %464 = vector.load %arg21[%c0_192, %c0_193] : memref<1x1xf32, #tpu.memory_space<vmem>>, vector<1x1xf32>
    %465 = vector.broadcast %464 : vector<1x1xf32> to vector<1x144xf32>
    %466 = arith.addf %463, %465 : vector<1x144xf32>
    %467 = arith.mulf %450, %466 : vector<1x144xf32>
    %468 = arith.negf %467 : vector<1x144xf32>
    %469 = math.exp %468 : vector<1x144xf32>
    %cst_194 = arith.constant 1.000000e+00 : f32
    %470 = vector.broadcast %cst_194 : f32 to vector<1x144xf32>
    %471 = arith.addf %470, %469 : vector<1x144xf32>
    %472 = arith.divf %470, %471 : vector<1x144xf32>
    %cst_195 = arith.constant 2.000000e+00 : f32
    %473 = vector.broadcast %cst_195 : f32 to vector<1x144xf32>
    %474 = arith.mulf %473, %472 : vector<1x144xf32>
    %c0_196 = arith.constant 0 : index
    %c0_197 = arith.constant 0 : index
    %c0_198 = arith.constant 0 : index
    %475 = vector.load %arg25[%c0_196, %c0_197, %c0_198] : memref<1x1x144xf32, #tpu.memory_space<vmem>>, vector<1x1x144xf32>
    %476 = vector.shape_cast %475 : vector<1x1x144xf32> to vector<1x144xf32>
    %477 = vector.shape_cast %474 : vector<1x144xf32> to vector<1x1x144xf32>
    tpu.vector_store %arg25[%c0_196, %c0_197, %c0_198], %477 {strides = array<i32>} : memref<1x1x144xf32, #tpu.memory_space<vmem>>, vector<1x1x144xf32>,
    return
  }
  func.func @transform_0(%arg0: i32) -> (i32, i32, i32) {
    %c0_i32 = arith.constant 0 : i32
    %c0_i32_0 = arith.constant 0 : i32
    %c0_i32_1 = arith.constant 0 : i32
    return %arg0, %c0_i32, %c0_i32_0 : i32, i32, i32
  }
  func.func @transform_1(%arg0: i32) -> (i32, i32) {
    %c0_i32 = arith.constant 0 : i32
    %c0_i32_0 = arith.constant 0 : i32
    %c0_i32_1 = arith.constant 0 : i32
    return %c0_i32, %c0_i32_0 : i32, i32
  }
  func.func @transform_2(%arg0: i32) -> (i32, i32) {
    %c0_i32 = arith.constant 0 : i32
    %c0_i32_0 = arith.constant 0 : i32
    %c0_i32_1 = arith.constant 0 : i32
    return %c0_i32, %c0_i32_0 : i32, i32
  }
  func.func @transform_3(%arg0: i32) -> (i32, i32) {
    %c0_i32 = arith.constant 0 : i32
    %c0_i32_0 = arith.constant 0 : i32
    %c0_i32_1 = arith.constant 0 : i32
    return %c0_i32, %c0_i32_0 : i32, i32
  }
  func.func @transform_4(%arg0: i32) -> (i32, i32) {
    %c0_i32 = arith.constant 0 : i32
    %c0_i32_0 = arith.constant 0 : i32
    %c0_i32_1 = arith.constant 0 : i32
    return %c0_i32, %c0_i32_0 : i32, i32
  }
  func.func @transform_5(%arg0: i32) -> (i32, i32) {
    %c0_i32 = arith.constant 0 : i32
    %c0_i32_0 = arith.constant 0 : i32
    %c0_i32_1 = arith.constant 0 : i32
    return %c0_i32, %c0_i32_0 : i32, i32
  }
  func.func @transform_6(%arg0: i32) -> (i32, i32) {
    %c0_i32 = arith.constant 0 : i32
    %c0_i32_0 = arith.constant 0 : i32
    %c0_i32_1 = arith.constant 0 : i32
    return %c0_i32, %c0_i32_0 : i32, i32
  }
  func.func @transform_7(%arg0: i32) -> (i32, i32) {
    %c0_i32 = arith.constant 0 : i32
    %c0_i32_0 = arith.constant 0 : i32
    %c0_i32_1 = arith.constant 0 : i32
    return %c0_i32, %c0_i32_0 : i32, i32
  }
  func.func @transform_8(%arg0: i32) -> (i32, i32) {
    %c0_i32 = arith.constant 0 : i32
    %c0_i32_0 = arith.constant 0 : i32
    %c0_i32_1 = arith.constant 0 : i32
    return %c0_i32, %c0_i32_0 : i32, i32
  }
  func.func @transform_9(%arg0: i32) -> (i32, i32, i32) {
    %c0_i32 = arith.constant 0 : i32
    %c0_i32_0 = arith.constant 0 : i32
    %c0_i32_1 = arith.constant 0 : i32
    %c0_i32_2 = arith.constant 0 : i32
    return %c0_i32, %c0_i32_0, %c0_i32_1 : i32, i32, i32
  }
  func.func @transform_10(%arg0: i32) -> (i32, i32, i32) {
    %c0_i32 = arith.constant 0 : i32
    %c0_i32_0 = arith.constant 0 : i32
    %c0_i32_1 = arith.constant 0 : i32
    %c0_i32_2 = arith.constant 0 : i32
    return %c0_i32, %c0_i32_0, %c0_i32_1 : i32, i32, i32
  }
  func.func @transform_11(%arg0: i32) -> (i32, i32, i32) {
    %c0_i32 = arith.constant 0 : i32
    %c0_i32_0 = arith.constant 0 : i32
    %c0_i32_1 = arith.constant 0 : i32
    %c0_i32_2 = arith.constant 0 : i32
    return %c0_i32, %c0_i32_0, %c0_i32_1 : i32, i32, i32
  }
  func.func @transform_12(%arg0: i32) -> (i32, i32, i32) {
    %c0_i32 = arith.constant 0 : i32
    %c0_i32_0 = arith.constant 0 : i32
    %c0_i32_1 = arith.constant 0 : i32
    %c0_i32_2 = arith.constant 0 : i32
    return %c0_i32, %c0_i32_0, %c0_i32_1 : i32, i32, i32
  }
  func.func @transform_13(%arg0: i32) -> (i32, i32) {
    %c0_i32 = arith.constant 0 : i32
    %c0_i32_0 = arith.constant 0 : i32
    %c0_i32_1 = arith.constant 0 : i32
    return %c0_i32, %c0_i32_0 : i32, i32
  }
  func.func @transform_14(%arg0: i32) -> (i32, i32) {
    %c0_i32 = arith.constant 0 : i32
    %c0_i32_0 = arith.constant 0 : i32
    %c0_i32_1 = arith.constant 0 : i32
    return %c0_i32, %c0_i32_0 : i32, i32
  }
  func.func @transform_15(%arg0: i32) -> (i32, i32) {
    %c0_i32 = arith.constant 0 : i32
    %c0_i32_0 = arith.constant 0 : i32
    %c0_i32_1 = arith.constant 0 : i32
    return %c0_i32, %c0_i32_0 : i32, i32
  }
  func.func @transform_16(%arg0: i32) -> (i32, i32) {
    %c0_i32 = arith.constant 0 : i32
    %c0_i32_0 = arith.constant 0 : i32
    %c0_i32_1 = arith.constant 0 : i32
    return %c0_i32, %c0_i32_0 : i32, i32
  }
  func.func @transform_17(%arg0: i32) -> (i32, i32) {
    %c0_i32 = arith.constant 0 : i32
    %c0_i32_0 = arith.constant 0 : i32
    %c0_i32_1 = arith.constant 0 : i32
    return %c0_i32, %c0_i32_0 : i32, i32
  }
  func.func @transform_18(%arg0: i32) -> (i32, i32) {
    %c0_i32 = arith.constant 0 : i32
    %c0_i32_0 = arith.constant 0 : i32
    %c0_i32_1 = arith.constant 0 : i32
    return %c0_i32, %c0_i32_0 : i32, i32
  }
  func.func @transform_19(%arg0: i32) -> (i32, i32) {
    %c0_i32 = arith.constant 0 : i32
    %c0_i32_0 = arith.constant 0 : i32
    %c0_i32_1 = arith.constant 0 : i32
    return %c0_i32, %c0_i32_0 : i32, i32
  }
  func.func @transform_20(%arg0: i32) -> (i32, i32) {
    %c0_i32 = arith.constant 0 : i32
    %c0_i32_0 = arith.constant 0 : i32
    %c0_i32_1 = arith.constant 0 : i32
    return %c0_i32, %c0_i32_0 : i32, i32
  }
  func.func @transform_21(%arg0: i32) -> (i32, i32) {
    %c0_i32 = arith.constant 0 : i32
    %c0_i32_0 = arith.constant 0 : i32
    %c0_i32_1 = arith.constant 0 : i32
    return %c0_i32, %c0_i32_0 : i32, i32
  }
  func.func @transform_22(%arg0: i32) -> (i32, i32) {
    %c0_i32 = arith.constant 0 : i32
    %c0_i32_0 = arith.constant 0 : i32
    %c0_i32_1 = arith.constant 0 : i32
    return %c0_i32, %c0_i32_0 : i32, i32
  }
  func.func @transform_23(%arg0: i32) -> (i32, i32, i32) {
    %c0_i32 = arith.constant 0 : i32
    %c0_i32_0 = arith.constant 0 : i32
    %c0_i32_1 = arith.constant 0 : i32
    return %arg0, %c0_i32, %c0_i32_0 : i32, i32, i32
  }
  func.func @transform_24(%arg0: i32) -> (i32, i32, i32) {
    %c0_i32 = arith.constant 0 : i32
    %c0_i32_0 = arith.constant 0 : i32
    %c0_i32_1 = arith.constant 0 : i32
    return %arg0, %c0_i32, %c0_i32_0 : i32, i32, i32
  }
}

</mosaic_0001>

<llo_original>
// kernel: tile.18
$region0: #{tile.18}
  #allocation0 [shape = 's32[1]{0}', space=sflag, size = 0x4, scoped, tag = 'scoped memory for tile.18']
  %s0 = inlined_call_operand.vmem [shape: f32[9], index: 0, kind: input, shape index: {}]
  %s1 = inlined_call_operand.vmem [shape: f32[16,9], index: 1, kind: output, shape index: {}]
  // Predicated region
  $region2: #{tile.18} parent=0 // pred_check
    _
  $region3: #{tile.18} parent=0 // pred_check_branch
    %3 = sbr.rel (0) target = $region5
  $region4: #{tile.18} parent=0 // pred_region
    _
  $region5: #{tile.18} parent=0 // pred_fallthru
    _
  %v4 = vld [vmem:[%s0] ss:$0 sm:$0xff]
  %5 = vst [vmem:[%s1] sm:$0xff] %v4
  %s6 = scalar_lea.vmem %s1, 8
  %7 = vst [vmem:[%s6] sm:$0xff] %v4

// kernel: squeeze.2
$region0: #{squeeze.2}
  %s0 = inlined_call_operand.vmem [shape: f32[2,144], index: 0, kind: input, shape index: {}]
  %s1 = inlined_call_operand.vmem [shape: f32[2,16,9], index: 1, kind: output, shape index: {}]
  $region1: #{squeeze.2} parent=0
    #allocation0 [shape = 'u8[8192]{0}', space=vmem, size = 0x2000, scoped, tag = 'scoped mem for input reshape']
    %s3 = ssub.s32 4, 1
    %s4 = scalar_lea.vmem %s0, 2
    %v5 = vld [vmem:[%s4] sm:%s3]
    %s6 = scalar_lea.vmem [#allocation0], 8
    %7 = vst [vmem:[%s6] sm:%s3] %v5
    %v8 = vld [vmem:[%s0] sm:%s3]
    %9 = vst [vmem:[#allocation0] sm:%s3] %v8
    %v10 = vld [vmem:[#allocation0] sm:$0x3]
    %vm11 = vcmask 72704
    %12 = vst.msk [vmem:[%s1] ss:$16 sm:$0x3] %vm11, %v10
    %s13 = scalar_lea.vmem [#allocation0], 8
    %v14 = vld [vmem:[%s13] sm:$0x3]
    %15 = vrot.lane.b32.xlu0 %v14, 121
    %v16 = vpop.permute.xlu0 %15
    %vm17 = vcmask 72704
    %s18 = scalar_lea.vmem %s1, 15
    %19 = vst.msk [vmem:[%s18] ss:$16 sm:$0x3] %vm17, %v16
    %v20 = vld [vmem:[#allocation0] sm:$0x3]
    %21 = vrot.lane.b32.xlu0 %v20, 119
    %v22 = vpop.permute.xlu0 %21
    %vm23 = vcmask 72704
    %s24 = scalar_lea.vmem %s1, 1
    %25 = vst.msk [vmem:[%s24] ss:$16 sm:$0x3] %vm23, %v22
    %v26 = vld [vmem:[#allocation0] sm:$0x3]
    %27 = vrot.lane.b32.xlu0 %v26, 110
    %v28 = vpop.permute.xlu0 %27
    %vm29 = vcmask 72704
    %s30 = scalar_lea.vmem %s1, 2
    %31 = vst.msk [vmem:[%s30] ss:$16 sm:$0x3] %vm29, %v28
    %v32 = vld [vmem:[#allocation0] sm:$0x3]
    %33 = vrot.lane.b32.xlu0 %v32, 101
    %v34 = vpop.permute.xlu0 %33
    %vm35 = vcmask 72704
    %s36 = scalar_lea.vmem %s1, 3
    %37 = vst.msk [vmem:[%s36] ss:$16 sm:$0x3] %vm35, %v34
    %v38 = vld [vmem:[#allocation0] sm:$0x3]
    %39 = vrot.lane.b32.xlu0 %v38, 92
    %v40 = vpop.permute.xlu0 %39
    %vm41 = vcmask 72704
    %s42 = scalar_lea.vmem %s1, 4
    %43 = vst.msk [vmem:[%s42] ss:$16 sm:$0x3] %vm41, %v40
    %v44 = vld [vmem:[#allocation0] sm:$0x3]
    %45 = vrot.lane.b32.xlu0 %v44, 83
    %v46 = vpop.permute.xlu0 %45
    %vm47 = vcmask 72704
    %s48 = scalar_lea.vmem %s1, 5
    %49 = vst.msk [vmem:[%s48] ss:$16 sm:$0x3] %vm47, %v46
    %v50 = vld [vmem:[#allocation0] sm:$0x3]
    %51 = vrot.lane.b32.xlu0 %v50, 74
    %v52 = vpop.permute.xlu0 %51
    %vm53 = vcmask 72704
    %s54 = scalar_lea.vmem %s1, 6
    %55 = vst.msk [vmem:[%s54] ss:$16 sm:$0x3] %vm53, %v52
    %v56 = vld [vmem:[#allocation0] sm:$0x3]
    %57 = vrot.lane.b32.xlu0 %v56, 65
    %v58 = vpop.permute.xlu0 %57
    %vm59 = vcmask 72704
    %s60 = scalar_lea.vmem %s1, 7
    %61 = vst.msk [vmem:[%s60] ss:$16 sm:$0x3] %vm59, %v58
    %v62 = vld [vmem:[#allocation0] sm:$0x3]
    %63 = vrot.lane.b32.xlu0 %v62, 56
    %v64 = vpop.permute.xlu0 %63
    %vm65 = vcmask 72704
    %s66 = scalar_lea.vmem %s1, 8
    %67 = vst.msk [vmem:[%s66] ss:$16 sm:$0x3] %vm65, %v64
    %v68 = vld [vmem:[#allocation0] sm:$0x3]
    %69 = vrot.lane.b32.xlu0 %v68, 47
    %v70 = vpop.permute.xlu0 %69
    %vm71 = vcmask 72704
    %s72 = scalar_lea.vmem %s1, 9
    %73 = vst.msk [vmem:[%s72] ss:$16 sm:$0x3] %vm71, %v70
    %v74 = vld [vmem:[#allocation0] sm:$0x3]
    %75 = vrot.lane.b32.xlu0 %v74, 38
    %v76 = vpop.permute.xlu0 %75
    %vm77 = vcmask 72704
    %s78 = scalar_lea.vmem %s1, 10
    %79 = vst.msk [vmem:[%s78] ss:$16 sm:$0x3] %vm77, %v76
    %v80 = vld [vmem:[#allocation0] sm:$0x3]
    %81 = vrot.lane.b32.xlu0 %v80, 29
    %v82 = vpop.permute.xlu0 %81
    %vm83 = vcmask 72704
    %s84 = scalar_lea.vmem %s1, 11
    %85 = vst.msk [vmem:[%s84] ss:$16 sm:$0x3] %vm83, %v82
    %v86 = vld [vmem:[#allocation0] sm:$0x3]
    %87 = vrot.lane.b32.xlu0 %v86, 20
    %v88 = vpop.permute.xlu0 %87
    %vm89 = vcmask 72704
    %s90 = scalar_lea.vmem %s1, 12
    %91 = vst.msk [vmem:[%s90] ss:$16 sm:$0x3] %vm89, %v88
    %v92 = vld [vmem:[#allocation0] sm:$0x3]
    %93 = vrot.lane.b32.xlu0 %v92, 11
    %v94 = vpop.permute.xlu0 %93
    %vm95 = vcmask 72704
    %s96 = scalar_lea.vmem %s1, 13
    %97 = vst.msk [vmem:[%s96] ss:$16 sm:$0x3] %vm95, %v94
    %v98 = vld [vmem:[#allocation0] sm:$0x3]
    %s99 = scalar_lea.vmem [#allocation0], 8
    %v100 = vld [vmem:[%s99] sm:$0x3]
    %vm101 = vcmask 1031168
    %v102 = vsel %vm101, %v100, %v98
    %103 = vrot.lane.b32.xlu0 %v102, 2
    %v104 = vpop.permute.xlu0 %103
    %vm105 = vcmask 15360
    %s106 = scalar_lea.vmem %s1, 14
    %107 = vst.msk [vmem:[%s106] ss:$16 sm:$0x3] %vm105, %v104
    %vm108 = vcmask 72720
    %s109 = scalar_lea.vmem %s1, 14
    %110 = vst.msk [vmem:[%s109] ss:$16 sm:$0x3] %vm108, %v104

// kernel: _lambda_.1
$region0: #{_lambda_.1}
  #allocation0 [shape = 'u32[]', space=smem, size = 0x4, offset = 0x4, fixed_abs, tag = 'smem constant byte address 0x4 - core index']
  #allocation1 [shape = 'u32[72,128]{1,0:T(1,128)}', space=vmem, size = 0x9000, scoped, tag = 'internal scratch']
  #allocation2 [shape = 'f32[32,400]{1,0:T(8,128)}', space=vmem, size = 0x10000, scoped, tag = 'scratch operand']
  #allocation3 [shape = 'f32[1,1]{1,0:T(1,128)S(1)}', space=vmem, size = 0x200, scoped, tag = 'scoped memory for _lambda_.1']
  #allocation4 [shape = 'f32[1,1]{1,0:T(1,128)S(1)}', space=vmem, size = 0x200, scoped, tag = 'scoped memory for _lambda_.1']
  #allocation5 [shape = 'f32[1,1]{1,0:T(1,128)S(1)}', space=vmem, size = 0x200, scoped, tag = 'scoped memory for _lambda_.1']
  #allocation6 [shape = 'f32[1,1]{1,0:T(1,128)S(1)}', space=vmem, size = 0x200, scoped, tag = 'scoped memory for _lambda_.1']
  #allocation7 [shape = 'f32[1,1]{1,0:T(1,128)S(1)}', space=vmem, size = 0x200, scoped, tag = 'scoped memory for _lambda_.1']
  #allocation8 [shape = 'f32[1,1]{1,0:T(1,128)S(1)}', space=vmem, size = 0x200, scoped, tag = 'scoped memory for _lambda_.1']
  %s0 = inlined_call_operand.vmem [shape: f32[2,8,144], index: 0, kind: input, shape index: {}]
  %s1 = inlined_call_operand.vmem [shape: f32[8,9], index: 1, kind: input, shape index: {}]
  %s2 = inlined_call_operand.vmem [shape: f32[8,8], index: 2, kind: input, shape index: {}]
  %s3 = inlined_call_operand.vmem [shape: f32[16,9], index: 3, kind: input, shape index: {}]
  %s4 = inlined_call_operand.vmem [shape: f32[8,16], index: 4, kind: input, shape index: {}]
  %s5 = inlined_call_operand.vmem [shape: f32[24,9], index: 5, kind: input, shape index: {}]
  %s6 = inlined_call_operand.vmem [shape: f32[8,24], index: 6, kind: input, shape index: {}]
  %s7 = inlined_call_operand.vmem [shape: f32[32,9], index: 7, kind: input, shape index: {}]
  %s8 = inlined_call_operand.vmem [shape: f32[8,32], index: 8, kind: input, shape index: {}]
  %s9 = inlined_call_operand.vmem [shape: f32[4,8,1], index: 9, kind: input, shape index: {}]
  %s10 = inlined_call_operand.vmem [shape: f32[4,8,1], index: 10, kind: input, shape index: {}]
  %s11 = inlined_call_operand.vmem [shape: f32[4,8,1], index: 11, kind: input, shape index: {}]
  %s12 = inlined_call_operand.vmem [shape: f32[4,8,1], index: 12, kind: input, shape index: {}]
  %s13 = inlined_call_operand.vmem [shape: f32[1,144], index: 13, kind: input, shape index: {}]
  %s14 = inlined_call_operand.vmem [shape: f32[8,8], index: 14, kind: input, shape index: {}]
  %s15 = inlined_call_operand.<no memory space> [shape: f32[1,1], index: 15, kind: input, shape index: {}]
  %s16 = inlined_call_operand.<no memory space> [shape: f32[1,1], index: 16, kind: input, shape index: {}]
  %s17 = inlined_call_operand.<no memory space> [shape: f32[1,1], index: 17, kind: input, shape index: {}]
  %s18 = inlined_call_operand.<no memory space> [shape: f32[1,1], index: 18, kind: input, shape index: {}]
  %s19 = inlined_call_operand.<no memory space> [shape: f32[1,1], index: 19, kind: input, shape index: {}]
  %s20 = inlined_call_operand.<no memory space> [shape: f32[1,1], index: 20, kind: input, shape index: {}]
  %s21 = inlined_call_operand.vmem [shape: f32[1,144], index: 21, kind: input, shape index: {}]
  %s22 = inlined_call_operand.vmem [shape: f32[1,144], index: 22, kind: input, shape index: {}]
  %s23 = inlined_call_operand.vmem [shape: f32[2,1,144], index: 23, kind: output, shape index: {0}]
  %s24 = inlined_call_operand.vmem [shape: f32[2,1,144], index: 24, kind: output, shape index: {1}]
  %25 = xla_tuple %s23, %s24
  %s26 = sld [smem:[#allocation0]]
  $region137: #{_lambda_.1} parent=0
    _
  %s28 = ssub.s32 1, %s26
  %s29 = scalar_select 0, %s28, %s26
  %v30 = vstv %s15
  %31 = vst [vmem:[#allocation3] sm:$0x1] %v30
  %v32 = vstv %s16
  %33 = vst [vmem:[#allocation4] sm:$0x1] %v32
  %v34 = vstv %s17
  %35 = vst [vmem:[#allocation5] sm:$0x1] %v34
  %v36 = vstv %s18
  %37 = vst [vmem:[#allocation6] sm:$0x1] %v36
  %v38 = vstv %s19
  %39 = vst [vmem:[#allocation7] sm:$0x1] %v38
  %v40 = vstv %s20
  %41 = vst [vmem:[#allocation8] sm:$0x1] %v40
  loop: start=0, step=1, limit=4
  $region2: #{_lambda_.1} parent=0 // loop_pre_header
    _
  $region3: #{_lambda_.1} parent=0 // loop_header
    %s43 = sphi 0, %s47
    %p44 = scmp.ge.s32.totalorder %s43, 4
    %s53 = sphi 0, %s55
    %s56 = sphi 0, %s53
    %s57 = sphi 0, %s56
    %s73 = sphi 0, %s57
    %s77 = sphi 0, %s77
    %s79 = sphi 0, %s77
    %s80 = sphi 0, %s79
    %s94 = sphi 0, %s80
    %s98 = sphi 0, %s98
    %s100 = sphi 0, %s98
    %s101 = sphi 0, %s100
    %s115 = sphi 0, %s101
    %s119 = sphi 0, %s119
    %s121 = sphi 0, %s119
    %s122 = sphi 0, %s121
    %s136 = sphi 0, %s122
    %s140 = sphi 0, %s140
    %s142 = sphi 0, %s140
    %s143 = sphi 0, %s142
    %s157 = sphi 0, %s143
    %s161 = sphi 0, %s161
    %s163 = sphi 0, %s161
    %s164 = sphi 0, %s163
    %s178 = sphi 0, %s164
    %s182 = sphi 0, %s182
    %s184 = sphi 0, %s182
    %s185 = sphi 0, %s184
    %s199 = sphi 0, %s185
    %s203 = sphi 0, %s203
    %s205 = sphi 0, %s203
    %s206 = sphi 0, %s205
    %s220 = sphi 0, %s206
    %s224 = sphi 0, %s224
    %s226 = sphi 0, %s224
    %s227 = sphi 0, %s226
    %s241 = sphi 0, %s227
    %s245 = sphi 0, %s245
    %s247 = sphi 0, %s245
    %s248 = sphi 0, %s247
    %s262 = sphi 0, %s248
    %s266 = sphi 0, %s266
    %s268 = sphi 0, %s266
    %s269 = sphi 0, %s268
    %s283 = sphi 0, %s269
    %s287 = sphi 0, %s287
    %s289 = sphi 0, %s287
    %s290 = sphi 0, %s289
    %s304 = sphi 0, %s290
    %s308 = sphi 0, %s308
    %s310 = sphi 0, %s308
    %s311 = sphi 0, %s310
    %s325 = sphi 0, %s311
    %s329 = sphi 0, %s329
    %s331 = sphi 0, %s329
    %s332 = sphi 0, %s331
    %s346 = sphi 0, %s332
    %s350 = sphi 0, %s350
    %s352 = sphi 0, %s350
    %s353 = sphi 0, %s352
    %s367 = sphi 0, %s353
    %s371 = sphi 0, %s371
    %s373 = sphi 0, %s371
    %s374 = sphi 0, %s373
    %s388 = sphi 0, %s374
    %s392 = sphi 0, %s392
    %s394 = sphi 0, %s392
    %s395 = sphi 0, %s394
    %s409 = sphi 0, %s395
    %s413 = sphi 0, %s413
    %s415 = sphi 0, %s413
    %s416 = sphi 0, %s415
    %s430 = sphi 0, %s416
    %s434 = sphi 0, %s434
    %s436 = sphi 0, %s434
    %s437 = sphi 0, %s436
    %s451 = sphi 0, %s437
    %s455 = sphi 0, %s455
    %s457 = sphi 0, %s455
    %s458 = sphi 0, %s457
    %s472 = sphi 0, %s458
    %s476 = sphi 0, %s476
    %s478 = sphi 0, %s476
    %s479 = sphi 0, %s478
    %s493 = sphi 0, %s479
    %s497 = sphi 0, %s497
    %s499 = sphi 0, %s497
    %s500 = sphi 0, %s499
    %s514 = sphi 0, %s500
    %s518 = sphi 0, %s518
    %s520 = sphi 0, %s518
    %s521 = sphi 0, %s520
    %s535 = sphi 0, %s521
    %s541 = sphi 0, %s543
    %s544 = sphi 0, %s541
    %s545 = sphi 0, %s544
    %s561 = sphi 0, %s545
    %s567 = sphi 0, %s569
    %s570 = sphi 0, %s567
    %s571 = sphi 0, %s570
    %s587 = sphi 0, %s571
  $region4: #{_lambda_.1} parent=0 // loop_header_branch
    %46 = sbr.rel (%p44) target = $region8
  $region5: #{_lambda_.1} parent=0 // loop_body
    %s48 = ssub.s32 %s43, 1
    %s49 = ssub.s32 %s43, 2
    %s50 = sadd.s32 %s43, 1
    %s51 = ssub.s32 %s43, %s50
    %p52 = scmp.eq.s32.totalorder %s51, 0
    %s54 = sadd.s32 %s53, 1
    %s55 = scalar_select %p52, %s53, %s54
    %p58 = pneg %p52
    %p59 = scmp.eq.s32.totalorder %s43, 1
    %p60 = por %p58, %p59
    %p61 = scmp.ne.s32.totalorder %s53, %s56
    %p62 = scmp.eq.s32.totalorder %s43, 0
    %p63 = por %p61, %p62
    %p64 = scmp.ne.s32.totalorder %s53, %s56
    %p65 = scmp.eq.s32.totalorder %s48, 1
    %p66 = por %p64, %p65
    %p67 = scmp.ne.s32.totalorder %s56, %s57
    %p68 = scmp.eq.s32.totalorder %s48, 0
    %p69 = por %p67, %p68
    %p70 = scmp.ne.s32.totalorder %s56, %s57
    %p71 = scmp.eq.s32.totalorder %s49, 1
    %p72 = por %p70, %p71
    %p74 = scmp.ne.s32.totalorder %s57, %s73
    %p75 = scmp.eq.s32.totalorder %s49, 0
    %p76 = por %p74, %p75
    %s78 = sadd.s32 %s77, 1
    %p81 = scmp.eq.s32.totalorder %s43, 1
    %p82 = scmp.ne.s32.totalorder %s77, %s79
    %p83 = scmp.eq.s32.totalorder %s43, 0
    %p84 = por %p82, %p83
    %p85 = scmp.ne.s32.totalorder %s77, %s79
    %p86 = scmp.eq.s32.totalorder %s48, 1
    %p87 = por %p85, %p86
    %p88 = scmp.ne.s32.totalorder %s79, %s80
    %p89 = scmp.eq.s32.totalorder %s48, 0
    %p90 = por %p88, %p89
    %p91 = scmp.ne.s32.totalorder %s79, %s80
    %p92 = scmp.eq.s32.totalorder %s49, 1
    %p93 = por %p91, %p92
    %p95 = scmp.ne.s32.totalorder %s80, %s94
    %p96 = scmp.eq.s32.totalorder %s49, 0
    %p97 = por %p95, %p96
    %s99 = sadd.s32 %s98, 1
    %p102 = scmp.eq.s32.totalorder %s43, 1
    %p103 = scmp.ne.s32.totalorder %s98, %s100
    %p104 = scmp.eq.s32.totalorder %s43, 0
    %p105 = por %p103, %p104
    %p106 = scmp.ne.s32.totalorder %s98, %s100
    %p107 = scmp.eq.s32.totalorder %s48, 1
    %p108 = por %p106, %p107
    %p109 = scmp.ne.s32.totalorder %s100, %s101
    %p110 = scmp.eq.s32.totalorder %s48, 0
    %p111 = por %p109, %p110
    %p112 = scmp.ne.s32.totalorder %s100, %s101
    %p113 = scmp.eq.s32.totalorder %s49, 1
    %p114 = por %p112, %p113
    %p116 = scmp.ne.s32.totalorder %s101, %s115
    %p117 = scmp.eq.s32.totalorder %s49, 0
    %p118 = por %p116, %p117
    %s120 = sadd.s32 %s119, 1
    %p123 = scmp.eq.s32.totalorder %s43, 1
    %p124 = scmp.ne.s32.totalorder %s119, %s121
    %p125 = scmp.eq.s32.totalorder %s43, 0
    %p126 = por %p124, %p125
    %p127 = scmp.ne.s32.totalorder %s119, %s121
    %p128 = scmp.eq.s32.totalorder %s48, 1
    %p129 = por %p127, %p128
    %p130 = scmp.ne.s32.totalorder %s121, %s122
    %p131 = scmp.eq.s32.totalorder %s48, 0
    %p132 = por %p130, %p131
    %p133 = scmp.ne.s32.totalorder %s121, %s122
    %p134 = scmp.eq.s32.totalorder %s49, 1
    %p135 = por %p133, %p134
    %p137 = scmp.ne.s32.totalorder %s122, %s136
    %p138 = scmp.eq.s32.totalorder %s49, 0
    %p139 = por %p137, %p138
    %s141 = sadd.s32 %s140, 1
    %p144 = scmp.eq.s32.totalorder %s43, 1
    %p145 = scmp.ne.s32.totalorder %s140, %s142
    %p146 = scmp.eq.s32.totalorder %s43, 0
    %p147 = por %p145, %p146
    %p148 = scmp.ne.s32.totalorder %s140, %s142
    %p149 = scmp.eq.s32.totalorder %s48, 1
    %p150 = por %p148, %p149
    %p151 = scmp.ne.s32.totalorder %s142, %s143
    %p152 = scmp.eq.s32.totalorder %s48, 0
    %p153 = por %p151, %p152
    %p154 = scmp.ne.s32.totalorder %s142, %s143
    %p155 = scmp.eq.s32.totalorder %s49, 1
    %p156 = por %p154, %p155
    %p158 = scmp.ne.s32.totalorder %s143, %s157
    %p159 = scmp.eq.s32.totalorder %s49, 0
    %p160 = por %p158, %p159
    %s162 = sadd.s32 %s161, 1
    %p165 = scmp.eq.s32.totalorder %s43, 1
    %p166 = scmp.ne.s32.totalorder %s161, %s163
    %p167 = scmp.eq.s32.totalorder %s43, 0
    %p168 = por %p166, %p167
    %p169 = scmp.ne.s32.totalorder %s161, %s163
    %p170 = scmp.eq.s32.totalorder %s48, 1
    %p171 = por %p169, %p170
    %p172 = scmp.ne.s32.totalorder %s163, %s164
    %p173 = scmp.eq.s32.totalorder %s48, 0
    %p174 = por %p172, %p173
    %p175 = scmp.ne.s32.totalorder %s163, %s164
    %p176 = scmp.eq.s32.totalorder %s49, 1
    %p177 = por %p175, %p176
    %p179 = scmp.ne.s32.totalorder %s164, %s178
    %p180 = scmp.eq.s32.totalorder %s49, 0
    %p181 = por %p179, %p180
    %s183 = sadd.s32 %s182, 1
    %p186 = scmp.eq.s32.totalorder %s43, 1
    %p187 = scmp.ne.s32.totalorder %s182, %s184
    %p188 = scmp.eq.s32.totalorder %s43, 0
    %p189 = por %p187, %p188
    %p190 = scmp.ne.s32.totalorder %s182, %s184
    %p191 = scmp.eq.s32.totalorder %s48, 1
    %p192 = por %p190, %p191
    %p193 = scmp.ne.s32.totalorder %s184, %s185
    %p194 = scmp.eq.s32.totalorder %s48, 0
    %p195 = por %p193, %p194
    %p196 = scmp.ne.s32.totalorder %s184, %s185
    %p197 = scmp.eq.s32.totalorder %s49, 1
    %p198 = por %p196, %p197
    %p200 = scmp.ne.s32.totalorder %s185, %s199
    %p201 = scmp.eq.s32.totalorder %s49, 0
    %p202 = por %p200, %p201
    %s204 = sadd.s32 %s203, 1
    %p207 = scmp.eq.s32.totalorder %s43, 1
    %p208 = scmp.ne.s32.totalorder %s203, %s205
    %p209 = scmp.eq.s32.totalorder %s43, 0
    %p210 = por %p208, %p209
    %p211 = scmp.ne.s32.totalorder %s203, %s205
    %p212 = scmp.eq.s32.totalorder %s48, 1
    %p213 = por %p211, %p212
    %p214 = scmp.ne.s32.totalorder %s205, %s206
    %p215 = scmp.eq.s32.totalorder %s48, 0
    %p216 = por %p214, %p215
    %p217 = scmp.ne.s32.totalorder %s205, %s206
    %p218 = scmp.eq.s32.totalorder %s49, 1
    %p219 = por %p217, %p218
    %p221 = scmp.ne.s32.totalorder %s206, %s220
    %p222 = scmp.eq.s32.totalorder %s49, 0
    %p223 = por %p221, %p222
    %s225 = sadd.s32 %s224, 1
    %p228 = scmp.eq.s32.totalorder %s43, 1
    %p229 = scmp.ne.s32.totalorder %s224, %s226
    %p230 = scmp.eq.s32.totalorder %s43, 0
    %p231 = por %p229, %p230
    %p232 = scmp.ne.s32.totalorder %s224, %s226
    %p233 = scmp.eq.s32.totalorder %s48, 1
    %p234 = por %p232, %p233
    %p235 = scmp.ne.s32.totalorder %s226, %s227
    %p236 = scmp.eq.s32.totalorder %s48, 0
    %p237 = por %p235, %p236
    %p238 = scmp.ne.s32.totalorder %s226, %s227
    %p239 = scmp.eq.s32.totalorder %s49, 1
    %p240 = por %p238, %p239
    %p242 = scmp.ne.s32.totalorder %s227, %s241
    %p243 = scmp.eq.s32.totalorder %s49, 0
    %p244 = por %p242, %p243
    %s246 = sadd.s32 %s245, 1
    %p249 = scmp.eq.s32.totalorder %s43, 1
    %p250 = scmp.ne.s32.totalorder %s245, %s247
    %p251 = scmp.eq.s32.totalorder %s43, 0
    %p252 = por %p250, %p251
    %p253 = scmp.ne.s32.totalorder %s245, %s247
    %p254 = scmp.eq.s32.totalorder %s48, 1
    %p255 = por %p253, %p254
    %p256 = scmp.ne.s32.totalorder %s247, %s248
    %p257 = scmp.eq.s32.totalorder %s48, 0
    %p258 = por %p256, %p257
    %p259 = scmp.ne.s32.totalorder %s247, %s248
    %p260 = scmp.eq.s32.totalorder %s49, 1
    %p261 = por %p259, %p260
    %p263 = scmp.ne.s32.totalorder %s248, %s262
    %p264 = scmp.eq.s32.totalorder %s49, 0
    %p265 = por %p263, %p264
    %s267 = sadd.s32 %s266, 1
    %p270 = scmp.eq.s32.totalorder %s43, 1
    %p271 = scmp.ne.s32.totalorder %s266, %s268
    %p272 = scmp.eq.s32.totalorder %s43, 0
    %p273 = por %p271, %p272
    %p274 = scmp.ne.s32.totalorder %s266, %s268
    %p275 = scmp.eq.s32.totalorder %s48, 1
    %p276 = por %p274, %p275
    %p277 = scmp.ne.s32.totalorder %s268, %s269
    %p278 = scmp.eq.s32.totalorder %s48, 0
    %p279 = por %p277, %p278
    %p280 = scmp.ne.s32.totalorder %s268, %s269
    %p281 = scmp.eq.s32.totalorder %s49, 1
    %p282 = por %p280, %p281
    %p284 = scmp.ne.s32.totalorder %s269, %s283
    %p285 = scmp.eq.s32.totalorder %s49, 0
    %p286 = por %p284, %p285
    %s288 = sadd.s32 %s287, 1
    %p291 = scmp.eq.s32.totalorder %s43, 1
    %p292 = scmp.ne.s32.totalorder %s287, %s289
    %p293 = scmp.eq.s32.totalorder %s43, 0
    %p294 = por %p292, %p293
    %p295 = scmp.ne.s32.totalorder %s287, %s289
    %p296 = scmp.eq.s32.totalorder %s48, 1
    %p297 = por %p295, %p296
    %p298 = scmp.ne.s32.totalorder %s289, %s290
    %p299 = scmp.eq.s32.totalorder %s48, 0
    %p300 = por %p298, %p299
    %p301 = scmp.ne.s32.totalorder %s289, %s290
    %p302 = scmp.eq.s32.totalorder %s49, 1
    %p303 = por %p301, %p302
    %p305 = scmp.ne.s32.totalorder %s290, %s304
    %p306 = scmp.eq.s32.totalorder %s49, 0
    %p307 = por %p305, %p306
    %s309 = sadd.s32 %s308, 1
    %p312 = scmp.eq.s32.totalorder %s43, 1
    %p313 = scmp.ne.s32.totalorder %s308, %s310
    %p314 = scmp.eq.s32.totalorder %s43, 0
    %p315 = por %p313, %p314
    %p316 = scmp.ne.s32.totalorder %s308, %s310
    %p317 = scmp.eq.s32.totalorder %s48, 1
    %p318 = por %p316, %p317
    %p319 = scmp.ne.s32.totalorder %s310, %s311
    %p320 = scmp.eq.s32.totalorder %s48, 0
    %p321 = por %p319, %p320
    %p322 = scmp.ne.s32.totalorder %s310, %s311
    %p323 = scmp.eq.s32.totalorder %s49, 1
    %p324 = por %p322, %p323
    %p326 = scmp.ne.s32.totalorder %s311, %s325
    %p327 = scmp.eq.s32.totalorder %s49, 0
    %p328 = por %p326, %p327
    %s330 = sadd.s32 %s329, 1
    %p333 = scmp.eq.s32.totalorder %s43, 1
    %p334 = scmp.ne.s32.totalorder %s329, %s331
    %p335 = scmp.eq.s32.totalorder %s43, 0
    %p336 = por %p334, %p335
    %p337 = scmp.ne.s32.totalorder %s329, %s331
    %p338 = scmp.eq.s32.totalorder %s48, 1
    %p339 = por %p337, %p338
    %p340 = scmp.ne.s32.totalorder %s331, %s332
    %p341 = scmp.eq.s32.totalorder %s48, 0
    %p342 = por %p340, %p341
    %p343 = scmp.ne.s32.totalorder %s331, %s332
    %p344 = scmp.eq.s32.totalorder %s49, 1
    %p345 = por %p343, %p344
    %p347 = scmp.ne.s32.totalorder %s332, %s346
    %p348 = scmp.eq.s32.totalorder %s49, 0
    %p349 = por %p347, %p348
    %s351 = sadd.s32 %s350, 1
    %p354 = scmp.eq.s32.totalorder %s43, 1
    %p355 = scmp.ne.s32.totalorder %s350, %s352
    %p356 = scmp.eq.s32.totalorder %s43, 0
    %p357 = por %p355, %p356
    %p358 = scmp.ne.s32.totalorder %s350, %s352
    %p359 = scmp.eq.s32.totalorder %s48, 1
    %p360 = por %p358, %p359
    %p361 = scmp.ne.s32.totalorder %s352, %s353
    %p362 = scmp.eq.s32.totalorder %s48, 0
    %p363 = por %p361, %p362
    %p364 = scmp.ne.s32.totalorder %s352, %s353
    %p365 = scmp.eq.s32.totalorder %s49, 1
    %p366 = por %p364, %p365
    %p368 = scmp.ne.s32.totalorder %s353, %s367
    %p369 = scmp.eq.s32.totalorder %s49, 0
    %p370 = por %p368, %p369
    %s372 = sadd.s32 %s371, 1
    %p375 = scmp.eq.s32.totalorder %s43, 1
    %p376 = scmp.ne.s32.totalorder %s371, %s373
    %p377 = scmp.eq.s32.totalorder %s43, 0
    %p378 = por %p376, %p377
    %p379 = scmp.ne.s32.totalorder %s371, %s373
    %p380 = scmp.eq.s32.totalorder %s48, 1
    %p381 = por %p379, %p380
    %p382 = scmp.ne.s32.totalorder %s373, %s374
    %p383 = scmp.eq.s32.totalorder %s48, 0
    %p384 = por %p382, %p383
    %p385 = scmp.ne.s32.totalorder %s373, %s374
    %p386 = scmp.eq.s32.totalorder %s49, 1
    %p387 = por %p385, %p386
    %p389 = scmp.ne.s32.totalorder %s374, %s388
    %p390 = scmp.eq.s32.totalorder %s49, 0
    %p391 = por %p389, %p390
    %s393 = sadd.s32 %s392, 1
    %p396 = scmp.eq.s32.totalorder %s43, 1
    %p397 = scmp.ne.s32.totalorder %s392, %s394
    %p398 = scmp.eq.s32.totalorder %s43, 0
    %p399 = por %p397, %p398
    %p400 = scmp.ne.s32.totalorder %s392, %s394
    %p401 = scmp.eq.s32.totalorder %s48, 1
    %p402 = por %p400, %p401
    %p403 = scmp.ne.s32.totalorder %s394, %s395
    %p404 = scmp.eq.s32.totalorder %s48, 0
    %p405 = por %p403, %p404
    %p406 = scmp.ne.s32.totalorder %s394, %s395
    %p407 = scmp.eq.s32.totalorder %s49, 1
    %p408 = por %p406, %p407
    %p410 = scmp.ne.s32.totalorder %s395, %s409
    %p411 = scmp.eq.s32.totalorder %s49, 0
    %p412 = por %p410, %p411
    %s414 = sadd.s32 %s413, 1
    %p417 = scmp.eq.s32.totalorder %s43, 1
    %p418 = scmp.ne.s32.totalorder %s413, %s415
    %p419 = scmp.eq.s32.totalorder %s43, 0
    %p420 = por %p418, %p419
    %p421 = scmp.ne.s32.totalorder %s413, %s415
    %p422 = scmp.eq.s32.totalorder %s48, 1
    %p423 = por %p421, %p422
    %p424 = scmp.ne.s32.totalorder %s415, %s416
    %p425 = scmp.eq.s32.totalorder %s48, 0
    %p426 = por %p424, %p425
    %p427 = scmp.ne.s32.totalorder %s415, %s416
    %p428 = scmp.eq.s32.totalorder %s49, 1
    %p429 = por %p427, %p428
    %p431 = scmp.ne.s32.totalorder %s416, %s430
    %p432 = scmp.eq.s32.totalorder %s49, 0
    %p433 = por %p431, %p432
    %s435 = sadd.s32 %s434, 1
    %p438 = scmp.eq.s32.totalorder %s43, 1
    %p439 = scmp.ne.s32.totalorder %s434, %s436
    %p440 = scmp.eq.s32.totalorder %s43, 0
    %p441 = por %p439, %p440
    %p442 = scmp.ne.s32.totalorder %s434, %s436
    %p443 = scmp.eq.s32.totalorder %s48, 1
    %p444 = por %p442, %p443
    %p445 = scmp.ne.s32.totalorder %s436, %s437
    %p446 = scmp.eq.s32.totalorder %s48, 0
    %p447 = por %p445, %p446
    %p448 = scmp.ne.s32.totalorder %s436, %s437
    %p449 = scmp.eq.s32.totalorder %s49, 1
    %p450 = por %p448, %p449
    %p452 = scmp.ne.s32.totalorder %s437, %s451
    %p453 = scmp.eq.s32.totalorder %s49, 0
    %p454 = por %p452, %p453
    %s456 = sadd.s32 %s455, 1
    %p459 = scmp.eq.s32.totalorder %s43, 1
    %p460 = scmp.ne.s32.totalorder %s455, %s457
    %p461 = scmp.eq.s32.totalorder %s43, 0
    %p462 = por %p460, %p461
    %p463 = scmp.ne.s32.totalorder %s455, %s457
    %p464 = scmp.eq.s32.totalorder %s48, 1
    %p465 = por %p463, %p464
    %p466 = scmp.ne.s32.totalorder %s457, %s458
    %p467 = scmp.eq.s32.totalorder %s48, 0
    %p468 = por %p466, %p467
    %p469 = scmp.ne.s32.totalorder %s457, %s458
    %p470 = scmp.eq.s32.totalorder %s49, 1
    %p471 = por %p469, %p470
    %p473 = scmp.ne.s32.totalorder %s458, %s472
    %p474 = scmp.eq.s32.totalorder %s49, 0
    %p475 = por %p473, %p474
    %s477 = sadd.s32 %s476, 1
    %p480 = scmp.eq.s32.totalorder %s43, 1
    %p481 = scmp.ne.s32.totalorder %s476, %s478
    %p482 = scmp.eq.s32.totalorder %s43, 0
    %p483 = por %p481, %p482
    %p484 = scmp.ne.s32.totalorder %s476, %s478
    %p485 = scmp.eq.s32.totalorder %s48, 1
    %p486 = por %p484, %p485
    %p487 = scmp.ne.s32.totalorder %s478, %s479
    %p488 = scmp.eq.s32.totalorder %s48, 0
    %p489 = por %p487, %p488
    %p490 = scmp.ne.s32.totalorder %s478, %s479
    %p491 = scmp.eq.s32.totalorder %s49, 1
    %p492 = por %p490, %p491
    %p494 = scmp.ne.s32.totalorder %s479, %s493
    %p495 = scmp.eq.s32.totalorder %s49, 0
    %p496 = por %p494, %p495
    %s498 = sadd.s32 %s497, 1
    %p501 = scmp.eq.s32.totalorder %s43, 1
    %p502 = scmp.ne.s32.totalorder %s497, %s499
    %p503 = scmp.eq.s32.totalorder %s43, 0
    %p504 = por %p502, %p503
    %p505 = scmp.ne.s32.totalorder %s497, %s499
    %p506 = scmp.eq.s32.totalorder %s48, 1
    %p507 = por %p505, %p506
    %p508 = scmp.ne.s32.totalorder %s499, %s500
    %p509 = scmp.eq.s32.totalorder %s48, 0
    %p510 = por %p508, %p509
    %p511 = scmp.ne.s32.totalorder %s499, %s500
    %p512 = scmp.eq.s32.totalorder %s49, 1
    %p513 = por %p511, %p512
    %p515 = scmp.ne.s32.totalorder %s500, %s514
    %p516 = scmp.eq.s32.totalorder %s49, 0
    %p517 = por %p515, %p516
    %s519 = sadd.s32 %s518, 1
    %p522 = scmp.eq.s32.totalorder %s43, 1
    %p523 = scmp.ne.s32.totalorder %s518, %s520
    %p524 = scmp.eq.s32.totalorder %s43, 0
    %p525 = por %p523, %p524
    %p526 = scmp.ne.s32.totalorder %s518, %s520
    %p527 = scmp.eq.s32.totalorder %s48, 1
    %p528 = por %p526, %p527
    %p529 = scmp.ne.s32.totalorder %s520, %s521
    %p530 = scmp.eq.s32.totalorder %s48, 0
    %p531 = por %p529, %p530
    %p532 = scmp.ne.s32.totalorder %s520, %s521
    %p533 = scmp.eq.s32.totalorder %s49, 1
    %p534 = por %p532, %p533
    %p536 = scmp.ne.s32.totalorder %s521, %s535
    %p537 = scmp.eq.s32.totalorder %s49, 0
    %p538 = por %p536, %p537
    %s539 = ssub.s32 %s43, %s50
    %p540 = scmp.eq.s32.totalorder %s539, 0
    %s542 = sadd.s32 %s541, 1
    %s543 = scalar_select %p540, %s541, %s542
    %p546 = pneg %p540
    %p547 = scmp.eq.s32.totalorder %s43, 1
    %p548 = por %p546, %p547
    %p549 = scmp.ne.s32.totalorder %s541, %s544
    %p550 = scmp.eq.s32.totalorder %s43, 0
    %p551 = por %p549, %p550
    %p552 = scmp.ne.s32.totalorder %s541, %s544
    %p553 = scmp.eq.s32.totalorder %s48, 1
    %p554 = por %p552, %p553
    %p555 = scmp.ne.s32.totalorder %s544, %s545
    %p556 = scmp.eq.s32.totalorder %s48, 0
    %p557 = por %p555, %p556
    %p558 = scmp.ne.s32.totalorder %s544, %s545
    %p559 = scmp.eq.s32.totalorder %s49, 1
    %p560 = por %p558, %p559
    %p562 = scmp.ne.s32.totalorder %s545, %s561
    %p563 = scmp.eq.s32.totalorder %s49, 0
    %p564 = por %p562, %p563
    %s565 = ssub.s32 %s43, %s50
    %p566 = scmp.eq.s32.totalorder %s565, 0
    %s568 = sadd.s32 %s567, 1
    %s569 = scalar_select %p566, %s567, %s568
    %p572 = pneg %p566
    %p573 = scmp.eq.s32.totalorder %s43, 1
    %p574 = por %p572, %p573
    %p575 = scmp.ne.s32.totalorder %s567, %s570
    %p576 = scmp.eq.s32.totalorder %s43, 0
    %p577 = por %p575, %p576
    %p578 = scmp.ne.s32.totalorder %s567, %s570
    %p579 = scmp.eq.s32.totalorder %s48, 1
    %p580 = por %p578, %p579
    %p581 = scmp.ne.s32.totalorder %s570, %s571
    %p582 = scmp.eq.s32.totalorder %s48, 0
    %p583 = por %p581, %p582
    %p584 = scmp.ne.s32.totalorder %s570, %s571
    %p585 = scmp.eq.s32.totalorder %s49, 1
    %p586 = por %p584, %p585
    %p588 = scmp.ne.s32.totalorder %s571, %s587
    %p589 = scmp.eq.s32.totalorder %s49, 0
    %p590 = por %p588, %p589
    %p591 = scmp.le.s32.totalorder 1, %s43
    %p592 = scmp.lt.s32.totalorder %s43, 3
    %p593 = pnand %p591, %p592
    %p594 = pneg %p593
    // Predicated region
    $region9: #{_lambda_.1} parent=5 // pred_check
      _
    $region10: #{_lambda_.1} parent=5 // pred_check_branch
      %596 = sbr.rel (%p593) target = $region12
    $region11: #{_lambda_.1} parent=5 // pred_region
      %s597 = ssub.s32 %s43, 1
      // Predicated region
      $region13: #{_lambda_.1} parent=11 // pred_check
        %p598 = pneg %p90
      $region14: #{_lambda_.1} parent=11 // pred_check_branch
        %600 = sbr.rel (%p598) target = $region16
      $region15: #{_lambda_.1} parent=11 // pred_region
        _
      $region16: #{_lambda_.1} parent=11 // pred_fallthru
        _
      // Predicated region
      $region17: #{_lambda_.1} parent=11 // pred_check
        %p601 = pneg %p111
      $region18: #{_lambda_.1} parent=11 // pred_check_branch
        %603 = sbr.rel (%p601) target = $region20
      $region19: #{_lambda_.1} parent=11 // pred_region
        _
      $region20: #{_lambda_.1} parent=11 // pred_fallthru
        _
      // Predicated region
      $region21: #{_lambda_.1} parent=11 // pred_check
        %p604 = pneg %p132
      $region22: #{_lambda_.1} parent=11 // pred_check_branch
        %606 = sbr.rel (%p604) target = $region24
      $region23: #{_lambda_.1} parent=11 // pred_region
        _
      $region24: #{_lambda_.1} parent=11 // pred_fallthru
        _
      // Predicated region
      $region25: #{_lambda_.1} parent=11 // pred_check
        %p607 = pneg %p153
      $region26: #{_lambda_.1} parent=11 // pred_check_branch
        %609 = sbr.rel (%p607) target = $region28
      $region27: #{_lambda_.1} parent=11 // pred_region
        _
      $region28: #{_lambda_.1} parent=11 // pred_fallthru
        _
      // Predicated region
      $region29: #{_lambda_.1} parent=11 // pred_check
        %p610 = pneg %p174
      $region30: #{_lambda_.1} parent=11 // pred_check_branch
        %612 = sbr.rel (%p610) target = $region32
      $region31: #{_lambda_.1} parent=11 // pred_region
        _
      $region32: #{_lambda_.1} parent=11 // pred_fallthru
        _
      // Predicated region
      $region33: #{_lambda_.1} parent=11 // pred_check
        %p613 = pneg %p195
      $region34: #{_lambda_.1} parent=11 // pred_check_branch
        %615 = sbr.rel (%p613) target = $region36
      $region35: #{_lambda_.1} parent=11 // pred_region
        _
      $region36: #{_lambda_.1} parent=11 // pred_fallthru
        _
      // Predicated region
      $region37: #{_lambda_.1} parent=11 // pred_check
        %p616 = pneg %p216
      $region38: #{_lambda_.1} parent=11 // pred_check_branch
        %618 = sbr.rel (%p616) target = $region40
      $region39: #{_lambda_.1} parent=11 // pred_region
        _
      $region40: #{_lambda_.1} parent=11 // pred_fallthru
        _
      // Predicated region
      $region41: #{_lambda_.1} parent=11 // pred_check
        %p619 = pneg %p237
      $region42: #{_lambda_.1} parent=11 // pred_check_branch
        %621 = sbr.rel (%p619) target = $region44
      $region43: #{_lambda_.1} parent=11 // pred_region
        _
      $region44: #{_lambda_.1} parent=11 // pred_fallthru
        _
      // Predicated region
      $region45: #{_lambda_.1} parent=11 // pred_check
        %p622 = pneg %p258
      $region46: #{_lambda_.1} parent=11 // pred_check_branch
        %624 = sbr.rel (%p622) target = $region48
      $region47: #{_lambda_.1} parent=11 // pred_region
        _
      $region48: #{_lambda_.1} parent=11 // pred_fallthru
        _
      // Predicated region
      $region49: #{_lambda_.1} parent=11 // pred_check
        %p625 = pneg %p279
      $region50: #{_lambda_.1} parent=11 // pred_check_branch
        %627 = sbr.rel (%p625) target = $region52
      $region51: #{_lambda_.1} parent=11 // pred_region
        _
      $region52: #{_lambda_.1} parent=11 // pred_fallthru
        _
      // Predicated region
      $region53: #{_lambda_.1} parent=11 // pred_check
        %p628 = pneg %p300
      $region54: #{_lambda_.1} parent=11 // pred_check_branch
        %630 = sbr.rel (%p628) target = $region56
      $region55: #{_lambda_.1} parent=11 // pred_region
        _
      $region56: #{_lambda_.1} parent=11 // pred_fallthru
        _
      // Predicated region
      $region57: #{_lambda_.1} parent=11 // pred_check
        %p631 = pneg %p321
      $region58: #{_lambda_.1} parent=11 // pred_check_branch
        %633 = sbr.rel (%p631) target = $region60
      $region59: #{_lambda_.1} parent=11 // pred_region
        _
      $region60: #{_lambda_.1} parent=11 // pred_fallthru
        _
      // Predicated region
      $region61: #{_lambda_.1} parent=11 // pred_check
        %p634 = pneg %p342
      $region62: #{_lambda_.1} parent=11 // pred_check_branch
        %636 = sbr.rel (%p634) target = $region64
      $region63: #{_lambda_.1} parent=11 // pred_region
        _
      $region64: #{_lambda_.1} parent=11 // pred_fallthru
        _
      // Predicated region
      $region65: #{_lambda_.1} parent=11 // pred_check
        %p637 = pneg %p363
      $region66: #{_lambda_.1} parent=11 // pred_check_branch
        %639 = sbr.rel (%p637) target = $region68
      $region67: #{_lambda_.1} parent=11 // pred_region
        _
      $region68: #{_lambda_.1} parent=11 // pred_fallthru
        _
      // Predicated region
      $region69: #{_lambda_.1} parent=11 // pred_check
        %p640 = pneg %p384
      $region70: #{_lambda_.1} parent=11 // pred_check_branch
        %642 = sbr.rel (%p640) target = $region72
      $region71: #{_lambda_.1} parent=11 // pred_region
        _
      $region72: #{_lambda_.1} parent=11 // pred_fallthru
        _
      // Predicated region
      $region73: #{_lambda_.1} parent=11 // pred_check
        %p643 = pneg %p405
      $region74: #{_lambda_.1} parent=11 // pred_check_branch
        %645 = sbr.rel (%p643) target = $region76
      $region75: #{_lambda_.1} parent=11 // pred_region
        _
      $region76: #{_lambda_.1} parent=11 // pred_fallthru
        _
      // Predicated region
      $region77: #{_lambda_.1} parent=11 // pred_check
        %p646 = pneg %p426
      $region78: #{_lambda_.1} parent=11 // pred_check_branch
        %648 = sbr.rel (%p646) target = $region80
      $region79: #{_lambda_.1} parent=11 // pred_region
        _
      $region80: #{_lambda_.1} parent=11 // pred_fallthru
        _
      // Predicated region
      $region81: #{_lambda_.1} parent=11 // pred_check
        %p649 = pneg %p447
      $region82: #{_lambda_.1} parent=11 // pred_check_branch
        %651 = sbr.rel (%p649) target = $region84
      $region83: #{_lambda_.1} parent=11 // pred_region
        _
      $region84: #{_lambda_.1} parent=11 // pred_fallthru
        _
      // Predicated region
      $region85: #{_lambda_.1} parent=11 // pred_check
        %p652 = pneg %p468
      $region86: #{_lambda_.1} parent=11 // pred_check_branch
        %654 = sbr.rel (%p652) target = $region88
      $region87: #{_lambda_.1} parent=11 // pred_region
        _
      $region88: #{_lambda_.1} parent=11 // pred_fallthru
        _
      // Predicated region
      $region89: #{_lambda_.1} parent=11 // pred_check
        %p655 = pneg %p489
      $region90: #{_lambda_.1} parent=11 // pred_check_branch
        %657 = sbr.rel (%p655) target = $region92
      $region91: #{_lambda_.1} parent=11 // pred_region
        _
      $region92: #{_lambda_.1} parent=11 // pred_fallthru
        _
      // Predicated region
      $region93: #{_lambda_.1} parent=11 // pred_check
        %p658 = pneg %p510
      $region94: #{_lambda_.1} parent=11 // pred_check_branch
        %660 = sbr.rel (%p658) target = $region96
      $region95: #{_lambda_.1} parent=11 // pred_region
        _
      $region96: #{_lambda_.1} parent=11 // pred_fallthru
        _
      // Predicated region
      $region97: #{_lambda_.1} parent=11 // pred_check
        %p661 = pneg %p531
      $region98: #{_lambda_.1} parent=11 // pred_check_branch
        %663 = sbr.rel (%p661) target = $region100
      $region99: #{_lambda_.1} parent=11 // pred_region
        _
      $region100: #{_lambda_.1} parent=11 // pred_fallthru
        _
    $region12: #{_lambda_.1} parent=5 // pred_fallthru
      _
    %p664 = scmp.lt.s32.totalorder %s43, 2
    // Predicated region
    $region101: #{_lambda_.1} parent=5 // pred_check
      %p665 = pneg %p664
    $region102: #{_lambda_.1} parent=5 // pred_check_branch
      %667 = sbr.rel (%p665) target = $region104
    $region103: #{_lambda_.1} parent=5 // pred_region
      // Predicated region
      $region105: #{_lambda_.1} parent=103 // pred_check
        %p668 = pneg %p63
      $region106: #{_lambda_.1} parent=103 // pred_check_branch
        %670 = sbr.rel (%p668) target = $region108
      $region107: #{_lambda_.1} parent=103 // pred_region
        %p671 = scmp.lt.s32.totalorder %s43, 1
        %s672 = scalar_select %p671, %s43, 1
        %s673 = smul.addr %s672, 2
        %s674 = smul.addr %s673, 8
        %s675 = scalar_lea.vmem %s0, %s674
      $region108: #{_lambda_.1} parent=103 // pred_fallthru
        _
    $region104: #{_lambda_.1} parent=5 // pred_fallthru
      _
    %p676 = scmp.le.s32.totalorder 1, %s43
    %p677 = scmp.lt.s32.totalorder %s43, 3
    %p678 = pnand %p676, %p677
    %p679 = pneg %p678
    // Predicated region
    $region109: #{_lambda_.1} parent=5 // pred_check
      _
    $region110: #{_lambda_.1} parent=5 // pred_check_branch
      %681 = sbr.rel (%p678) target = $region112
    $region111: #{_lambda_.1} parent=5 // pred_region
      %s682 = ssub.s32 %s43, 1
      %p683 = scmp.lt.s32.totalorder %s48, 1
      %s684 = scalar_select %p683, %s48, 1
      %s685 = smul.addr %s684, 2
      %s686 = smul.addr %s685, 8
      %s687 = scalar_lea.vmem %s0, %s686
      %p688 = pneg %p69
      %p689 = pneg %p66
      %p690 = pneg %p90
      %p691 = pneg %p87
      %p692 = pneg %p111
      %p693 = pneg %p108
      %p694 = pneg %p132
      %p695 = pneg %p129
      %p696 = pneg %p153
      %p697 = pneg %p150
      %p698 = pneg %p174
      %p699 = pneg %p171
      %p700 = pneg %p195
      %p701 = pneg %p192
      %p702 = pneg %p216
      %p703 = pneg %p213
      %p704 = pneg %p237
      %p705 = pneg %p234
      %p706 = pneg %p258
      %p707 = pneg %p255
      %p708 = pneg %p279
      %p709 = pneg %p276
      %p710 = pneg %p300
      %p711 = pneg %p297
      %p712 = pneg %p321
      %p713 = pneg %p318
      %p714 = pneg %p342
      %p715 = pneg %p339
      %p716 = pneg %p363
      %p717 = pneg %p360
      %p718 = pneg %p384
      %p719 = pneg %p381
      %p720 = pneg %p405
      %p721 = pneg %p402
      %p722 = pneg %p426
      %p723 = pneg %p423
      %p724 = pneg %p447
      %p725 = pneg %p444
      %p726 = pneg %p468
      %p727 = pneg %p465
      %p728 = pneg %p489
      %p729 = pneg %p486
      %p730 = pneg %p510
      %p731 = pneg %p507
      %p732 = pneg %p531
      %p733 = pneg %p528
      %p734 = pneg %p557
      %p735 = pneg %p554
      %p736 = scmp.lt.s32.totalorder %s48, 1
      %s737 = scalar_select %p736, %s48, 1
      %s738 = smul.addr %s737, 2
      %s739 = scalar_lea.vmem %s23, %s738
      %p740 = pneg %p583
      %p741 = pneg %p580
      %p742 = scmp.lt.s32.totalorder %s48, 1
      %s743 = scalar_select %p742, %s48, 1
      %s744 = smul.addr %s743, 2
      %s745 = scalar_lea.vmem %s24, %s744
      %p746 = scmp.lt.s32.totalorder %s48, 1
      %s747 = scalar_select %p746, %s48, 1
      %s748 = smul.addr %s747, 2
      %s749 = smul.addr %s748, 8
      %s750 = scalar_lea.vmem %s0, %s749
      %p751 = scmp.lt.s32.totalorder %s48, 1
      %s752 = scalar_select %p751, %s48, 1
      %s753 = smul.addr %s752, 2
      %s754 = scalar_lea.vmem %s23, %s753
      %p755 = scmp.lt.s32.totalorder %s48, 1
      %s756 = scalar_select %p755, %s48, 1
      %s757 = smul.addr %s756, 2
      %s758 = scalar_lea.vmem %s24, %s757
      %p759 = scmp.eq.s32.totalorder %s48, 0
      // Predicated region
      $region113: #{_lambda_.1} parent=111 // pred_check
        %p760 = pneg %p759
      $region114: #{_lambda_.1} parent=111 // pred_check_branch
        %762 = sbr.rel (%p760) target = $region116
      $region115: #{_lambda_.1} parent=111 // pred_region
        %763 = vst [vmem:[#allocation2] sm:$0xff] 0.0
        %764 = vst [vmem:[#allocation2 + $0x20] sm:$0xff] 0.0
        %765 = vst [vmem:[#allocation2 + $0x40] sm:$0xff] 0.0
        %766 = vst [vmem:[#allocation2 + $0x60] sm:$0xff] 0.0
        %vm767 = vcmask 1047680
        %768 = vst.msk [vmem:[#allocation2 + $0x10] sm:$0xff] %vm767, 0.0
        %vm769 = vcmask 130048
        %770 = vst.msk [vmem:[#allocation2 + $0x18] sm:$0xff] %vm769, 0.0
        %771 = vst.msk [vmem:[#allocation2 + $0x30] sm:$0xff] %vm767, 0.0
        %772 = vst.msk [vmem:[#allocation2 + $0x38] sm:$0xff] %vm769, 0.0
        %773 = vst.msk [vmem:[#allocation2 + $0x50] sm:$0xff] %vm767, 0.0
        %774 = vst.msk [vmem:[#allocation2 + $0x58] sm:$0xff] %vm769, 0.0
        %775 = vst.msk [vmem:[#allocation2 + $0x70] sm:$0xff] %vm767, 0.0
        %776 = vst.msk [vmem:[#allocation2 + $0x78] sm:$0xff] %vm769, 0.0
      $region116: #{_lambda_.1} parent=111 // pred_fallthru
        _
      %v777 = vld [vmem:[%s750] sm:$0xff]
      %v778 = vld [vmem:[%s750 + $0x8] sm:$0xff]
      %779 = vst [vmem:[#allocation2 + $0x8] sm:$0xff] %v777
      %vm780 = vcmask 130048
      %781 = vst.msk [vmem:[#allocation2 + $0x10] sm:$0xff] %vm780, %v778
      %v782 = vld [vmem:[%s13] sm:$0x3]
      %v783 = vld [vmem:[%s1] sm:$0xff]
      %v784 = vld [vmem:[#allocation2 + $0x8] sm:$0xff]
      %v785 = vld [vmem:[#allocation2 + $0x10] sm:$0xff]
      %787 = vset.pattern.permute.xlu0 4
      %788 = vperm.xlu0 %787, %v783
      %v789 = vpop.permute.xlu0 %788
      %v791 = vmul.f32 %v784, %v789
      %v792 = vmul.f32 %v785, %v789
      %v793 = vld [vmem:[#allocation2] sm:$0xff]
      %794 = vset.pattern.permute.xlu0 0
      %795 = vperm.xlu0 %794, %v783
      %v796 = vpop.permute.xlu0 %795
      %v798 = vmul.f32 %v793, %v796
      %v799 = vmul.f32 %v784, %v796
      %v800 = vmul.f32 %v785, %v796
      %804 = vrot.lane.b32.xlu0 %v798, 10
      %v805 = vpop.permute.xlu0 %804
      %806 = vrot.lane.b32.xlu0 %v799, 10
      %v807 = vpop.permute.xlu0 %806
      %808 = vrot.lane.b32.xlu0 %v800, 10
      %v809 = vpop.permute.xlu0 %808
      %vm810 = vcmask 80896
      %v811 = vsel %vm810, %v805, %v807
      %v812 = vsel %vm810, %v807, %v809
      %v815 = vadd.f32 %v791, %v811
      %v816 = vadd.f32 %v792, %v812
      %817 = vset.pattern.permute.xlu0 1
      %818 = vperm.xlu0 %817, %v783
      %v819 = vpop.permute.xlu0 %818
      %v821 = vmul.f32 %v793, %v819
      %v822 = vmul.f32 %v784, %v819
      %v823 = vmul.f32 %v785, %v819
      %827 = vrot.lane.b32.xlu0 %v821, 9
      %v828 = vpop.permute.xlu0 %827
      %829 = vrot.lane.b32.xlu0 %v822, 9
      %v830 = vpop.permute.xlu0 %829
      %831 = vrot.lane.b32.xlu0 %v823, 9
      %v832 = vpop.permute.xlu0 %831
      %vm833 = vcmask 72704
      %v834 = vsel %vm833, %v828, %v830
      %v835 = vsel %vm833, %v830, %v832
      %v838 = vadd.f32 %v815, %v834
      %v839 = vadd.f32 %v816, %v835
      %840 = vset.pattern.permute.xlu0 2
      %841 = vperm.xlu0 %840, %v783
      %v842 = vpop.permute.xlu0 %841
      %v844 = vmul.f32 %v793, %v842
      %v845 = vmul.f32 %v784, %v842
      %v846 = vmul.f32 %v785, %v842
      %850 = vrot.lane.b32.xlu0 %v844, 8
      %v851 = vpop.permute.xlu0 %850
      %852 = vrot.lane.b32.xlu0 %v845, 8
      %v853 = vpop.permute.xlu0 %852
      %854 = vrot.lane.b32.xlu0 %v846, 8
      %v855 = vpop.permute.xlu0 %854
      %vm856 = vcmask 64512
      %v857 = vsel %vm856, %v851, %v853
      %v858 = vsel %vm856, %v853, %v855
      %v861 = vadd.f32 %v838, %v857
      %v862 = vadd.f32 %v839, %v858
      %863 = vset.pattern.permute.xlu0 3
      %864 = vperm.xlu0 %863, %v783
      %v865 = vpop.permute.xlu0 %864
      %v867 = vmul.f32 %v793, %v865
      %v868 = vmul.f32 %v784, %v865
      %v869 = vmul.f32 %v785, %v865
      %873 = vrot.lane.b32.xlu0 %v867, 1
      %v874 = vpop.permute.xlu0 %873
      %875 = vrot.lane.b32.xlu0 %v868, 1
      %v876 = vpop.permute.xlu0 %875
      %877 = vrot.lane.b32.xlu0 %v869, 1
      %v878 = vpop.permute.xlu0 %877
      %vm879 = vcmask 7168
      %v880 = vsel %vm879, %v874, %v876
      %v881 = vsel %vm879, %v876, %v878
      %v884 = vadd.f32 %v861, %v880
      %v885 = vadd.f32 %v862, %v881
      %886 = vset.pattern.permute.xlu0 5
      %887 = vperm.xlu0 %886, %v783
      %v888 = vpop.permute.xlu0 %887
      %v890 = vmul.f32 %v784, %v888
      %v891 = vmul.f32 %v785, %v888
      %894 = vrot.lane.b32.xlu0 %v890, 127
      %v895 = vpop.permute.xlu0 %894
      %896 = vrot.lane.b32.xlu0 %v891, 127
      %v897 = vpop.permute.xlu0 %896
      %vm898 = vcmask 1039360
      %v899 = vsel %vm898, %v895, %v897
      %v902 = vadd.f32 %v884, %v899
      %v903 = vadd.f32 %v885, %v897
      %904 = vset.pattern.permute.xlu0 6
      %905 = vperm.xlu0 %904, %v783
      %v906 = vpop.permute.xlu0 %905
      %v908 = vmul.f32 %v784, %v906
      %v909 = vmul.f32 %v785, %v906
      %912 = vrot.lane.b32.xlu0 %v908, 120
      %v913 = vpop.permute.xlu0 %912
      %914 = vrot.lane.b32.xlu0 %v909, 120
      %v915 = vpop.permute.xlu0 %914
      %vm916 = vcmask 982016
      %v917 = vsel %vm916, %v913, %v915
      %v920 = vadd.f32 %v902, %v917
      %v921 = vadd.f32 %v903, %v915
      %922 = vset.pattern.permute.xlu0 7
      %923 = vperm.xlu0 %922, %v783
      %v924 = vpop.permute.xlu0 %923
      %v926 = vmul.f32 %v784, %v924
      %v927 = vmul.f32 %v785, %v924
      %930 = vrot.lane.b32.xlu0 %v926, 119
      %v931 = vpop.permute.xlu0 %930
      %932 = vrot.lane.b32.xlu0 %v927, 119
      %v933 = vpop.permute.xlu0 %932
      %vm934 = vcmask 973824
      %v935 = vsel %vm934, %v931, %v933
      %v938 = vadd.f32 %v920, %v935
      %v939 = vadd.f32 %v921, %v933
      %940 = vset.pattern.permute.xlu0 8
      %941 = vperm.xlu0 %940, %v783
      %v942 = vpop.permute.xlu0 %941
      %v944 = vmul.f32 %v784, %v942
      %v945 = vmul.f32 %v785, %v942
      %948 = vrot.lane.b32.xlu0 %v944, 118
      %v949 = vpop.permute.xlu0 %948
      %950 = vrot.lane.b32.xlu0 %v945, 118
      %v951 = vpop.permute.xlu0 %950
      %vm952 = vcmask 965632
      %v953 = vsel %vm952, %v949, %v951
      %v956 = vadd.f32 %v938, %v953
      %v957 = vadd.f32 %v939, %v951
      %v958 = vld [vmem:[%s2] sm:$0xff]
      %v959 = vld [vmem:[%s9] sm:$0xff]
      %961 = vset.pattern.permute.xlu0 0
      %962 = vperm.xlu0 %961, %v959
      %v963 = vpop.permute.xlu0 %962
      %v966 = vsel %vm856, %v958, 0
      %968 = vmatpush.msra.mxu0 0.0
      %969 = vmatpush.msra.mxu0 0.0
      %970 = vmatpush.msra.mxu0 0.0
      %971 = vmatpush.msra.mxu0 0.0
      %972 = vmatpush.msra.mxu0 0.0
      %973 = vmatpush.msra.mxu0 0.0
      %974 = vmatpush.msra.mxu0 0.0
      %975 = vmatpush.msra.mxu0 0.0
      %976 = vmatpush.msra.mxu0 0.0
      %977 = vmatpush.msra.mxu0 0.0
      %978 = vmatpush.msra.mxu0 0.0
      %979 = vmatpush.msra.mxu0 0.0
      %980 = vmatpush.msra.mxu0 0.0
      %981 = vmatpush.msra.mxu0 0.0
      %982 = vmatpush.msra.mxu0 0.0
      %983 = vmatpush.msra.mxu0 %v956
      %984 = vmatmul.f32.gmra.mxu0 %v966
      %v985 = vpop.f32.mrf.mxu0
      %v986 = vadd.f32 %v963, %v985
      %987 = vdwg.mxu0
      %988 = vmatpush.msra.mxu0 0.0
      %989 = vmatpush.msra.mxu0 0.0
      %990 = vmatpush.msra.mxu0 0.0
      %991 = vmatpush.msra.mxu0 0.0
      %992 = vmatpush.msra.mxu0 0.0
      %993 = vmatpush.msra.mxu0 0.0
      %994 = vmatpush.msra.mxu0 0.0
      %995 = vmatpush.msra.mxu0 0.0
      %996 = vmatpush.msra.mxu0 0.0
      %997 = vmatpush.msra.mxu0 0.0
      %998 = vmatpush.msra.mxu0 0.0
      %999 = vmatpush.msra.mxu0 0.0
      %1000 = vmatpush.msra.mxu0 0.0
      %1001 = vmatpush.msra.mxu0 0.0
      %1002 = vmatpush.msra.mxu0 0.0
      %1003 = vmatpush.msra.mxu0 %v957
      %1004 = vmatmul.f32.gmra.mxu0 %v966
      %v1005 = vpop.f32.mrf.mxu0
      %v1006 = vadd.f32 %v963, %v1005
      %1007 = vdwg.mxu0
      %v1009 = vperm.slane %v782, 0
      %v1010 = vperm.slane %v782, 1
      %v1013 = vmul.f32 %v986, %v1009
      %v1014 = vmul.f32 %v1006, %v1010
      %v1015 = vsel %vm780, %v1014, 0.0
      %v1016 = vadd.f32 %v1013, %v1015
      %1017 = vadd.xlane.f32.xlu0 %v1016
      %v1018 = vpop.xlane.xlu0 %1017
      %v1019 = vmul.f32 %v1013, %v1013
      %v1020 = vmul.f32 %v1014, %v1014
      %v1021 = vsel %vm780, %v1020, 0.0
      %v1022 = vadd.f32 %v1019, %v1021
      %1023 = vadd.xlane.f32.xlu0 %v1022
      %v1024 = vpop.xlane.xlu0 %1023
      %v1025 = vmul.f32 %v1018, 0.0078125
      %v1026 = vmul.f32 %v1024, 0.0078125
      %v1027 = vmul.f32 %v1025, %v1025
      %v1028 = vsub.f32 %v1026, %v1027
      %v1029 = vmax.f32 %v1028, 0.0
      %v1030 = vadd.f32 %v1029, 1e-05
      %v1031 = vrsqrt.pop %v1030
      %v1032 = vmul.f32 %v1031, %v1030
      %v1033 = vmul.f32 %v1032, %v1031
      %v1034 = vmul.f32 0.5, %v1033
      %v1035 = vsub.f32 1.5, %v1034
      %v1036 = vmul.f32 %v1031, %v1035
      %vm1037 = vweird.f32 %v1030
      %vm1038 = vweird.f32 %v1031
      %vm1039 = vmor %vm1037, %vm1038
      %v1040 = vsel %vm1039, %v1031, %v1036
      %v1041 = vld [vmem:[%s10] sm:$0xff]
      %v1042 = vmul.f32 %v1040, %v1041
      %v1043 = vld [vmem:[%s11] sm:$0xff]
      %v1044 = vmul.f32 %v1025, %v1042
      %v1045 = vsub.f32 %v1043, %v1044
      %1047 = vset.pattern.permute.xlu0 0
      %1048 = vperm.xlu0 %1047, %v1042
      %v1049 = vpop.permute.xlu0 %1048
      %v1051 = vmul.f32 %v1013, %v1049
      %v1052 = vmul.f32 %v1014, %v1049
      %1054 = vset.pattern.permute.xlu0 0
      %1055 = vperm.xlu0 %1054, %v1045
      %v1056 = vpop.permute.xlu0 %1055
      %v1058 = vadd.f32 %v1051, %v1056
      %v1059 = vadd.f32 %v1052, %v1056
      %vm1060 = vcmp.ge.f32.partialorder %v1058, 0.0
      %vm1061 = vcmp.ge.f32.partialorder %v1059, 0.0
      %v1062 = vld [vmem:[%s12] sm:$0xff]
      %1064 = vset.pattern.permute.xlu0 0
      %1065 = vperm.xlu0 %1064, %v1062
      %v1066 = vpop.permute.xlu0 %1065
      %v1068 = vmul.f32 %v1058, %v1066
      %v1069 = vmul.f32 %v1059, %v1066
      %v1070 = vsel %vm1060, %v1058, %v1068
      %v1071 = vsel %vm1061, %v1059, %v1069
      %v1072 = vmul.f32 %v1070, %v1009
      %v1073 = vmul.f32 %v1071, %v1010
      %1074 = vst [vmem:[#allocation2 + $0x28] sm:$0xff] %v1072
      %1075 = vst.msk [vmem:[#allocation2 + $0x30] sm:$0xff] %vm780, %v1073
      %v1076 = vld [vmem:[%s3] sm:$0xff]
      %v1077 = vld [vmem:[%s3 + $0x8] sm:$0xff]
      %v1078 = vld [vmem:[#allocation2 + $0x8] sm:$0xff]
      %v1079 = vld [vmem:[#allocation2 + $0x10] sm:$0xff]
      %v1080 = vld [vmem:[#allocation2 + $0x28] sm:$0xff]
      %v1081 = vld [vmem:[#allocation2 + $0x30] sm:$0xff]
      %1083 = vset.pattern.permute.xlu0 4
      %1084 = vperm.xlu0 %1083, %v1076
      %v1085 = vpop.permute.xlu0 %1084
      %1088 = vset.pattern.permute.xlu0 4
      %1089 = vperm.xlu0 %1088, %v1077
      %v1090 = vpop.permute.xlu0 %1089
      %v1092 = vmul.f32 %v1078, %v1085
      %v1093 = vmul.f32 %v1079, %v1085
      %v1094 = vmul.f32 %v1080, %v1090
      %v1095 = vmul.f32 %v1081, %v1090
      %v1096 = vld [vmem:[#allocation2] sm:$0xff]
      %v1097 = vld [vmem:[#allocation2 + $0x8] sm:$0xff]
      %v1098 = vld [vmem:[#allocation2 + $0x20] sm:$0xff]
      %v1099 = vld [vmem:[#allocation2 + $0x28] sm:$0xff]
      %1100 = vset.pattern.permute.xlu0 0
      %1101 = vperm.xlu0 %1100, %v1076
      %v1102 = vpop.permute.xlu0 %1101
      %1104 = vset.pattern.permute.xlu0 0
      %1105 = vperm.xlu0 %1104, %v1077
      %v1106 = vpop.permute.xlu0 %1105
      %v1108 = vmul.f32 %v1096, %v1102
      %v1109 = vmul.f32 %v1097, %v1102
      %v1110 = vmul.f32 %v1098, %v1106
      %v1111 = vmul.f32 %v1099, %v1106
      %1116 = vrot.lane.b32.xlu0 %v1108, 19
      %v1117 = vpop.permute.xlu0 %1116
      %1118 = vrot.lane.b32.xlu0 %v1109, 19
      %v1119 = vpop.permute.xlu0 %1118
      %1120 = vrot.lane.b32.xlu0 %v1110, 19
      %v1121 = vpop.permute.xlu0 %1120
      %1122 = vrot.lane.b32.xlu0 %v1111, 19
      %v1123 = vpop.permute.xlu0 %1122
      %vm1124 = vcmask 154624
      %v1125 = vsel %vm1124, %v1117, %v1119
      %v1126 = vsel %vm1124, %v1121, %v1123
      %v1131 = vadd.f32 %v1092, %v1125
      %v1132 = vadd.f32 %v1093, %v1119
      %v1133 = vadd.f32 %v1094, %v1126
      %v1134 = vadd.f32 %v1095, %v1123
      %1135 = vset.pattern.permute.xlu0 1
      %1136 = vperm.xlu0 %1135, %v1076
      %v1137 = vpop.permute.xlu0 %1136
      %1139 = vset.pattern.permute.xlu0 1
      %1140 = vperm.xlu0 %1139, %v1077
      %v1141 = vpop.permute.xlu0 %1140
      %v1143 = vmul.f32 %v1096, %v1137
      %v1144 = vmul.f32 %v1097, %v1137
      %v1145 = vmul.f32 %v1098, %v1141
      %v1146 = vmul.f32 %v1099, %v1141
      %1151 = vrot.lane.b32.xlu0 %v1143, 18
      %v1152 = vpop.permute.xlu0 %1151
      %1153 = vrot.lane.b32.xlu0 %v1144, 18
      %v1154 = vpop.permute.xlu0 %1153
      %1155 = vrot.lane.b32.xlu0 %v1145, 18
      %v1156 = vpop.permute.xlu0 %1155
      %1157 = vrot.lane.b32.xlu0 %v1146, 18
      %v1158 = vpop.permute.xlu0 %1157
      %vm1159 = vcmask 146432
      %v1160 = vsel %vm1159, %v1152, %v1154
      %v1161 = vsel %vm1159, %v1156, %v1158
      %v1166 = vadd.f32 %v1131, %v1160
      %v1167 = vadd.f32 %v1132, %v1154
      %v1168 = vadd.f32 %v1133, %v1161
      %v1169 = vadd.f32 %v1134, %v1158
      %1170 = vset.pattern.permute.xlu0 2
      %1171 = vperm.xlu0 %1170, %v1076
      %v1172 = vpop.permute.xlu0 %1171
      %1174 = vset.pattern.permute.xlu0 2
      %1175 = vperm.xlu0 %1174, %v1077
      %v1176 = vpop.permute.xlu0 %1175
      %v1178 = vmul.f32 %v1096, %v1172
      %v1179 = vmul.f32 %v1097, %v1172
      %v1180 = vmul.f32 %v1098, %v1176
      %v1181 = vmul.f32 %v1099, %v1176
      %1186 = vrot.lane.b32.xlu0 %v1178, 17
      %v1187 = vpop.permute.xlu0 %1186
      %1188 = vrot.lane.b32.xlu0 %v1179, 17
      %v1189 = vpop.permute.xlu0 %1188
      %1190 = vrot.lane.b32.xlu0 %v1180, 17
      %v1191 = vpop.permute.xlu0 %1190
      %1192 = vrot.lane.b32.xlu0 %v1181, 17
      %v1193 = vpop.permute.xlu0 %1192
      %vm1194 = vcmask 138240
      %v1195 = vsel %vm1194, %v1187, %v1189
      %v1196 = vsel %vm1194, %v1191, %v1193
      %v1201 = vadd.f32 %v1166, %v1195
      %v1202 = vadd.f32 %v1167, %v1189
      %v1203 = vadd.f32 %v1168, %v1196
      %v1204 = vadd.f32 %v1169, %v1193
      %v1205 = vld [vmem:[#allocation2] sm:$0xff]
      %v1206 = vld [vmem:[#allocation2 + $0x20] sm:$0xff]
      %1207 = vset.pattern.permute.xlu0 3
      %1208 = vperm.xlu0 %1207, %v1076
      %v1209 = vpop.permute.xlu0 %1208
      %1211 = vset.pattern.permute.xlu0 3
      %1212 = vperm.xlu0 %1211, %v1077
      %v1213 = vpop.permute.xlu0 %1212
      %v1215 = vmul.f32 %v1205, %v1209
      %v1216 = vmul.f32 %v1078, %v1209
      %v1217 = vmul.f32 %v1079, %v1209
      %v1218 = vmul.f32 %v1206, %v1213
      %v1219 = vmul.f32 %v1080, %v1213
      %v1220 = vmul.f32 %v1081, %v1213
      %1227 = vrot.lane.b32.xlu0 %v1215, 1
      %v1228 = vpop.permute.xlu0 %1227
      %1229 = vrot.lane.b32.xlu0 %v1216, 1
      %v1230 = vpop.permute.xlu0 %1229
      %1231 = vrot.lane.b32.xlu0 %v1217, 1
      %v1232 = vpop.permute.xlu0 %1231
      %1233 = vrot.lane.b32.xlu0 %v1218, 1
      %v1234 = vpop.permute.xlu0 %1233
      %1235 = vrot.lane.b32.xlu0 %v1219, 1
      %v1236 = vpop.permute.xlu0 %1235
      %1237 = vrot.lane.b32.xlu0 %v1220, 1
      %v1238 = vpop.permute.xlu0 %1237
      %v1239 = vsel %vm879, %v1228, %v1230
      %v1240 = vsel %vm879, %v1230, %v1232
      %v1241 = vsel %vm879, %v1234, %v1236
      %v1242 = vsel %vm879, %v1236, %v1238
      %v1247 = vadd.f32 %v1201, %v1239
      %v1248 = vadd.f32 %v1202, %v1240
      %v1249 = vadd.f32 %v1203, %v1241
      %v1250 = vadd.f32 %v1204, %v1242
      %1251 = vset.pattern.permute.xlu0 5
      %1252 = vperm.xlu0 %1251, %v1076
      %v1253 = vpop.permute.xlu0 %1252
      %1255 = vset.pattern.permute.xlu0 5
      %1256 = vperm.xlu0 %1255, %v1077
      %v1257 = vpop.permute.xlu0 %1256
      %v1259 = vmul.f32 %v1078, %v1253
      %v1260 = vmul.f32 %v1079, %v1253
      %v1261 = vmul.f32 %v1080, %v1257
      %v1262 = vmul.f32 %v1081, %v1257
      %1267 = vrot.lane.b32.xlu0 %v1259, 127
      %v1268 = vpop.permute.xlu0 %1267
      %1269 = vrot.lane.b32.xlu0 %v1260, 127
      %v1270 = vpop.permute.xlu0 %1269
      %1271 = vrot.lane.b32.xlu0 %v1261, 127
      %v1272 = vpop.permute.xlu0 %1271
      %1273 = vrot.lane.b32.xlu0 %v1262, 127
      %v1274 = vpop.permute.xlu0 %1273
      %v1275 = vsel %vm898, %v1268, %v1270
      %v1276 = vsel %vm898, %v1272, %v1274
      %v1281 = vadd.f32 %v1247, %v1275
      %v1282 = vadd.f32 %v1248, %v1270
      %v1283 = vadd.f32 %v1249, %v1276
      %v1284 = vadd.f32 %v1250, %v1274
      %1285 = vset.pattern.permute.xlu0 6
      %1286 = vperm.xlu0 %1285, %v1076
      %v1287 = vpop.permute.xlu0 %1286
      %1289 = vset.pattern.permute.xlu0 6
      %1290 = vperm.xlu0 %1289, %v1077
      %v1291 = vpop.permute.xlu0 %1290
      %v1293 = vmul.f32 %v1078, %v1287
      %v1294 = vmul.f32 %v1079, %v1287
      %v1295 = vmul.f32 %v1080, %v1291
      %v1296 = vmul.f32 %v1081, %v1291
      %1301 = vrot.lane.b32.xlu0 %v1293, 111
      %v1302 = vpop.permute.xlu0 %1301
      %1303 = vrot.lane.b32.xlu0 %v1294, 111
      %v1304 = vpop.permute.xlu0 %1303
      %1305 = vrot.lane.b32.xlu0 %v1295, 111
      %v1306 = vpop.permute.xlu0 %1305
      %1307 = vrot.lane.b32.xlu0 %v1296, 111
      %v1308 = vpop.permute.xlu0 %1307
      %vm1309 = vcmask 908288
      %v1310 = vsel %vm1309, %v1302, %v1304
      %v1311 = vsel %vm1309, %v1306, %v1308
      %v1316 = vadd.f32 %v1281, %v1310
      %v1317 = vadd.f32 %v1282, %v1304
      %v1318 = vadd.f32 %v1283, %v1311
      %v1319 = vadd.f32 %v1284, %v1308
      %1320 = vset.pattern.permute.xlu0 7
      %1321 = vperm.xlu0 %1320, %v1076
      %v1322 = vpop.permute.xlu0 %1321
      %1324 = vset.pattern.permute.xlu0 7
      %1325 = vperm.xlu0 %1324, %v1077
      %v1326 = vpop.permute.xlu0 %1325
      %v1328 = vmul.f32 %v1078, %v1322
      %v1329 = vmul.f32 %v1079, %v1322
      %v1330 = vmul.f32 %v1080, %v1326
      %v1331 = vmul.f32 %v1081, %v1326
      %1336 = vrot.lane.b32.xlu0 %v1328, 110
      %v1337 = vpop.permute.xlu0 %1336
      %1338 = vrot.lane.b32.xlu0 %v1329, 110
      %v1339 = vpop.permute.xlu0 %1338
      %1340 = vrot.lane.b32.xlu0 %v1330, 110
      %v1341 = vpop.permute.xlu0 %1340
      %1342 = vrot.lane.b32.xlu0 %v1331, 110
      %v1343 = vpop.permute.xlu0 %1342
      %vm1344 = vcmask 900096
      %v1345 = vsel %vm1344, %v1337, %v1339
      %v1346 = vsel %vm1344, %v1341, %v1343
      %v1351 = vadd.f32 %v1316, %v1345
      %v1352 = vadd.f32 %v1317, %v1339
      %v1353 = vadd.f32 %v1318, %v1346
      %v1354 = vadd.f32 %v1319, %v1343
      %1355 = vset.pattern.permute.xlu0 8
      %1356 = vperm.xlu0 %1355, %v1076
      %v1357 = vpop.permute.xlu0 %1356
      %1359 = vset.pattern.permute.xlu0 8
      %1360 = vperm.xlu0 %1359, %v1077
      %v1361 = vpop.permute.xlu0 %1360
      %v1363 = vmul.f32 %v1078, %v1357
      %v1364 = vmul.f32 %v1079, %v1357
      %v1365 = vmul.f32 %v1080, %v1361
      %v1366 = vmul.f32 %v1081, %v1361
      %1371 = vrot.lane.b32.xlu0 %v1363, 109
      %v1372 = vpop.permute.xlu0 %1371
      %1373 = vrot.lane.b32.xlu0 %v1364, 109
      %v1374 = vpop.permute.xlu0 %1373
      %1375 = vrot.lane.b32.xlu0 %v1365, 109
      %v1376 = vpop.permute.xlu0 %1375
      %1377 = vrot.lane.b32.xlu0 %v1366, 109
      %v1378 = vpop.permute.xlu0 %1377
      %vm1379 = vcmask 891904
      %v1380 = vsel %vm1379, %v1372, %v1374
      %v1381 = vsel %vm1379, %v1376, %v1378
      %v1386 = vadd.f32 %v1351, %v1380
      %v1387 = vadd.f32 %v1352, %v1374
      %v1388 = vadd.f32 %v1353, %v1381
      %v1389 = vadd.f32 %v1354, %v1378
      %v1390 = vld [vmem:[%s4] sm:$0xff]
      %s1391 = scalar_lea.vmem %s9, 8
      %v1392 = vld [vmem:[%s1391] sm:$0xff]
      %1394 = vset.pattern.permute.xlu0 0
      %1395 = vperm.xlu0 %1394, %v1392
      %v1396 = vpop.permute.xlu0 %1395
      %v1399 = vsel %vm780, %v1390, 0
      %1401 = vmatpush.msra.mxu0 0.0
      %1402 = vmatpush.msra.mxu0 0.0
      %1403 = vmatpush.msra.mxu0 0.0
      %1404 = vmatpush.msra.mxu0 0.0
      %1405 = vmatpush.msra.mxu0 0.0
      %1406 = vmatpush.msra.mxu0 0.0
      %1407 = vmatpush.msra.mxu0 0.0
      %1408 = vmatpush.msra.mxu0 0.0
      %1409 = vmatpush.msra.mxu0 0.0
      %1410 = vmatpush.msra.mxu0 0.0
      %1411 = vmatpush.msra.mxu0 0.0
      %1412 = vmatpush.msra.mxu0 0.0
      %1413 = vmatpush.msra.mxu0 0.0
      %1414 = vmatpush.msra.mxu0 0.0
      %1415 = vmatpush.msra.mxu0 %v1388
      %1416 = vmatpush.msra.mxu0 %v1386
      %1417 = vmatmul.f32.gmra.mxu0 %v1399
      %v1418 = vpop.f32.mrf.mxu0
      %v1419 = vadd.f32 %v1396, %v1418
      %1420 = vdwg.mxu0
      %1421 = vmatpush.msra.mxu0 0.0
      %1422 = vmatpush.msra.mxu0 0.0
      %1423 = vmatpush.msra.mxu0 0.0
      %1424 = vmatpush.msra.mxu0 0.0
      %1425 = vmatpush.msra.mxu0 0.0
      %1426 = vmatpush.msra.mxu0 0.0
      %1427 = vmatpush.msra.mxu0 0.0
      %1428 = vmatpush.msra.mxu0 0.0
      %1429 = vmatpush.msra.mxu0 0.0
      %1430 = vmatpush.msra.mxu0 0.0
      %1431 = vmatpush.msra.mxu0 0.0
      %1432 = vmatpush.msra.mxu0 0.0
      %1433 = vmatpush.msra.mxu0 0.0
      %1434 = vmatpush.msra.mxu0 0.0
      %1435 = vmatpush.msra.mxu0 %v1389
      %1436 = vmatpush.msra.mxu0 %v1387
      %1437 = vmatmul.f32.gmra.mxu0 %v1399
      %v1438 = vpop.f32.mrf.mxu0
      %v1439 = vadd.f32 %v1396, %v1438
      %1440 = vdwg.mxu0
      %v1441 = vmul.f32 %v1419, %v1009
      %v1442 = vmul.f32 %v1439, %v1010
      %v1443 = vsel %vm780, %v1442, 0.0
      %v1444 = vadd.f32 %v1441, %v1443
      %1445 = vadd.xlane.f32.xlu0 %v1444
      %v1446 = vpop.xlane.xlu0 %1445
      %v1447 = vmul.f32 %v1441, %v1441
      %v1448 = vmul.f32 %v1442, %v1442
      %v1449 = vsel %vm780, %v1448, 0.0
      %v1450 = vadd.f32 %v1447, %v1449
      %1451 = vadd.xlane.f32.xlu0 %v1450
      %v1452 = vpop.xlane.xlu0 %1451
      %v1453 = vmul.f32 %v1446, 0.0078125
      %v1454 = vmul.f32 %v1452, 0.0078125
      %v1455 = vmul.f32 %v1453, %v1453
      %v1456 = vsub.f32 %v1454, %v1455
      %v1457 = vmax.f32 %v1456, 0.0
      %v1458 = vadd.f32 %v1457, 1e-05
      %v1459 = vrsqrt.pop %v1458
      %v1460 = vmul.f32 %v1459, %v1458
      %v1461 = vmul.f32 %v1460, %v1459
      %v1462 = vmul.f32 0.5, %v1461
      %v1463 = vsub.f32 1.5, %v1462
      %v1464 = vmul.f32 %v1459, %v1463
      %vm1465 = vweird.f32 %v1458
      %vm1466 = vweird.f32 %v1459
      %vm1467 = vmor %vm1465, %vm1466
      %v1468 = vsel %vm1467, %v1459, %v1464
      %s1469 = scalar_lea.vmem %s10, 8
      %v1470 = vld [vmem:[%s1469] sm:$0xff]
      %v1471 = vmul.f32 %v1468, %v1470
      %s1472 = scalar_lea.vmem %s11, 8
      %v1473 = vld [vmem:[%s1472] sm:$0xff]
      %v1474 = vmul.f32 %v1453, %v1471
      %v1475 = vsub.f32 %v1473, %v1474
      %1477 = vset.pattern.permute.xlu0 0
      %1478 = vperm.xlu0 %1477, %v1471
      %v1479 = vpop.permute.xlu0 %1478
      %v1481 = vmul.f32 %v1441, %v1479
      %v1482 = vmul.f32 %v1442, %v1479
      %1484 = vset.pattern.permute.xlu0 0
      %1485 = vperm.xlu0 %1484, %v1475
      %v1486 = vpop.permute.xlu0 %1485
      %v1488 = vadd.f32 %v1481, %v1486
      %v1489 = vadd.f32 %v1482, %v1486
      %vm1490 = vcmp.ge.f32.partialorder %v1488, 0.0
      %vm1491 = vcmp.ge.f32.partialorder %v1489, 0.0
      %s1492 = scalar_lea.vmem %s12, 8
      %v1493 = vld [vmem:[%s1492] sm:$0xff]
      %1495 = vset.pattern.permute.xlu0 0
      %1496 = vperm.xlu0 %1495, %v1493
      %v1497 = vpop.permute.xlu0 %1496
      %v1499 = vmul.f32 %v1488, %v1497
      %v1500 = vmul.f32 %v1489, %v1497
      %v1501 = vsel %vm1490, %v1488, %v1499
      %v1502 = vsel %vm1491, %v1489, %v1500
      %v1503 = vmul.f32 %v1501, %v1009
      %v1504 = vmul.f32 %v1502, %v1010
      %1505 = vst [vmem:[#allocation2 + $0x48] sm:$0xff] %v1503
      %1506 = vst.msk [vmem:[#allocation2 + $0x50] sm:$0xff] %vm780, %v1504
      %v1507 = vld [vmem:[%s5] sm:$0xff]
      %v1508 = vld [vmem:[%s5 + $0x8] sm:$0xff]
      %v1509 = vld [vmem:[%s5 + $0x10] sm:$0xff]
      %v1510 = vld [vmem:[#allocation2 + $0x8] sm:$0xff]
      %v1511 = vld [vmem:[#allocation2 + $0x10] sm:$0xff]
      %v1512 = vld [vmem:[#allocation2 + $0x28] sm:$0xff]
      %v1513 = vld [vmem:[#allocation2 + $0x30] sm:$0xff]
      %v1514 = vld [vmem:[#allocation2 + $0x48] sm:$0xff]
      %v1515 = vld [vmem:[#allocation2 + $0x50] sm:$0xff]
      %1517 = vset.pattern.permute.xlu0 4
      %1518 = vperm.xlu0 %1517, %v1507
      %v1519 = vpop.permute.xlu0 %1518
      %1522 = vset.pattern.permute.xlu0 4
      %1523 = vperm.xlu0 %1522, %v1508
      %v1524 = vpop.permute.xlu0 %1523
      %1527 = vset.pattern.permute.xlu0 4
      %1528 = vperm.xlu0 %1527, %v1509
      %v1529 = vpop.permute.xlu0 %1528
      %v1531 = vmul.f32 %v1510, %v1519
      %v1532 = vmul.f32 %v1511, %v1519
      %v1533 = vmul.f32 %v1512, %v1524
      %v1534 = vmul.f32 %v1513, %v1524
      %v1535 = vmul.f32 %v1514, %v1529
      %v1536 = vmul.f32 %v1515, %v1529
      %v1537 = vld [vmem:[#allocation2] sm:$0xff]
      %v1538 = vld [vmem:[#allocation2 + $0x8] sm:$0xff]
      %v1539 = vld [vmem:[#allocation2 + $0x20] sm:$0xff]
      %v1540 = vld [vmem:[#allocation2 + $0x28] sm:$0xff]
      %v1541 = vld [vmem:[#allocation2 + $0x40] sm:$0xff]
      %v1542 = vld [vmem:[#allocation2 + $0x48] sm:$0xff]
      %1543 = vset.pattern.permute.xlu0 0
      %1544 = vperm.xlu0 %1543, %v1507
      %v1545 = vpop.permute.xlu0 %1544
      %1547 = vset.pattern.permute.xlu0 0
      %1548 = vperm.xlu0 %1547, %v1508
      %v1549 = vpop.permute.xlu0 %1548
      %1551 = vset.pattern.permute.xlu0 0
      %1552 = vperm.xlu0 %1551, %v1509
      %v1553 = vpop.permute.xlu0 %1552
      %v1555 = vmul.f32 %v1537, %v1545
      %v1556 = vmul.f32 %v1538, %v1545
      %v1557 = vmul.f32 %v1539, %v1549
      %v1558 = vmul.f32 %v1540, %v1549
      %v1559 = vmul.f32 %v1541, %v1553
      %v1560 = vmul.f32 %v1542, %v1553
      %1567 = vrot.lane.b32.xlu0 %v1555, 37
      %v1568 = vpop.permute.xlu0 %1567
      %1569 = vrot.lane.b32.xlu0 %v1556, 37
      %v1570 = vpop.permute.xlu0 %1569
      %1571 = vrot.lane.b32.xlu0 %v1557, 37
      %v1572 = vpop.permute.xlu0 %1571
      %1573 = vrot.lane.b32.xlu0 %v1558, 37
      %v1574 = vpop.permute.xlu0 %1573
      %1575 = vrot.lane.b32.xlu0 %v1559, 37
      %v1576 = vpop.permute.xlu0 %1575
      %1577 = vrot.lane.b32.xlu0 %v1560, 37
      %v1578 = vpop.permute.xlu0 %1577
      %vm1579 = vcmask 302080
      %v1580 = vsel %vm1579, %v1568, %v1570
      %v1581 = vsel %vm1579, %v1572, %v1574
      %v1582 = vsel %vm1579, %v1576, %v1578
      %v1589 = vadd.f32 %v1531, %v1580
      %v1590 = vadd.f32 %v1532, %v1570
      %v1591 = vadd.f32 %v1533, %v1581
      %v1592 = vadd.f32 %v1534, %v1574
      %v1593 = vadd.f32 %v1535, %v1582
      %v1594 = vadd.f32 %v1536, %v1578
      %1595 = vset.pattern.permute.xlu0 1
      %1596 = vperm.xlu0 %1595, %v1507
      %v1597 = vpop.permute.xlu0 %1596
      %1599 = vset.pattern.permute.xlu0 1
      %1600 = vperm.xlu0 %1599, %v1508
      %v1601 = vpop.permute.xlu0 %1600
      %1603 = vset.pattern.permute.xlu0 1
      %1604 = vperm.xlu0 %1603, %v1509
      %v1605 = vpop.permute.xlu0 %1604
      %v1607 = vmul.f32 %v1537, %v1597
      %v1608 = vmul.f32 %v1538, %v1597
      %v1609 = vmul.f32 %v1539, %v1601
      %v1610 = vmul.f32 %v1540, %v1601
      %v1611 = vmul.f32 %v1541, %v1605
      %v1612 = vmul.f32 %v1542, %v1605
      %1619 = vrot.lane.b32.xlu0 %v1607, 36
      %v1620 = vpop.permute.xlu0 %1619
      %1621 = vrot.lane.b32.xlu0 %v1608, 36
      %v1622 = vpop.permute.xlu0 %1621
      %1623 = vrot.lane.b32.xlu0 %v1609, 36
      %v1624 = vpop.permute.xlu0 %1623
      %1625 = vrot.lane.b32.xlu0 %v1610, 36
      %v1626 = vpop.permute.xlu0 %1625
      %1627 = vrot.lane.b32.xlu0 %v1611, 36
      %v1628 = vpop.permute.xlu0 %1627
      %1629 = vrot.lane.b32.xlu0 %v1612, 36
      %v1630 = vpop.permute.xlu0 %1629
      %vm1631 = vcmask 293888
      %v1632 = vsel %vm1631, %v1620, %v1622
      %v1633 = vsel %vm1631, %v1624, %v1626
      %v1634 = vsel %vm1631, %v1628, %v1630
      %v1641 = vadd.f32 %v1589, %v1632
      %v1642 = vadd.f32 %v1590, %v1622
      %v1643 = vadd.f32 %v1591, %v1633
      %v1644 = vadd.f32 %v1592, %v1626
      %v1645 = vadd.f32 %v1593, %v1634
      %v1646 = vadd.f32 %v1594, %v1630
      %1647 = vset.pattern.permute.xlu0 2
      %1648 = vperm.xlu0 %1647, %v1507
      %v1649 = vpop.permute.xlu0 %1648
      %1651 = vset.pattern.permute.xlu0 2
      %1652 = vperm.xlu0 %1651, %v1508
      %v1653 = vpop.permute.xlu0 %1652
      %1655 = vset.pattern.permute.xlu0 2
      %1656 = vperm.xlu0 %1655, %v1509
      %v1657 = vpop.permute.xlu0 %1656
      %v1659 = vmul.f32 %v1537, %v1649
      %v1660 = vmul.f32 %v1538, %v1649
      %v1661 = vmul.f32 %v1539, %v1653
      %v1662 = vmul.f32 %v1540, %v1653
      %v1663 = vmul.f32 %v1541, %v1657
      %v1664 = vmul.f32 %v1542, %v1657
      %1671 = vrot.lane.b32.xlu0 %v1659, 35
      %v1672 = vpop.permute.xlu0 %1671
      %1673 = vrot.lane.b32.xlu0 %v1660, 35
      %v1674 = vpop.permute.xlu0 %1673
      %1675 = vrot.lane.b32.xlu0 %v1661, 35
      %v1676 = vpop.permute.xlu0 %1675
      %1677 = vrot.lane.b32.xlu0 %v1662, 35
      %v1678 = vpop.permute.xlu0 %1677
      %1679 = vrot.lane.b32.xlu0 %v1663, 35
      %v1680 = vpop.permute.xlu0 %1679
      %1681 = vrot.lane.b32.xlu0 %v1664, 35
      %v1682 = vpop.permute.xlu0 %1681
      %vm1683 = vcmask 285696
      %v1684 = vsel %vm1683, %v1672, %v1674
      %v1685 = vsel %vm1683, %v1676, %v1678
      %v1686 = vsel %vm1683, %v1680, %v1682
      %v1693 = vadd.f32 %v1641, %v1684
      %v1694 = vadd.f32 %v1642, %v1674
      %v1695 = vadd.f32 %v1643, %v1685
      %v1696 = vadd.f32 %v1644, %v1678
      %v1697 = vadd.f32 %v1645, %v1686
      %v1698 = vadd.f32 %v1646, %v1682
      %v1699 = vld [vmem:[#allocation2] sm:$0xff]
      %v1700 = vld [vmem:[#allocation2 + $0x20] sm:$0xff]
      %v1701 = vld [vmem:[#allocation2 + $0x40] sm:$0xff]
      %1702 = vset.pattern.permute.xlu0 3
      %1703 = vperm.xlu0 %1702, %v1507
      %v1704 = vpop.permute.xlu0 %1703
      %1706 = vset.pattern.permute.xlu0 3
      %1707 = vperm.xlu0 %1706, %v1508
      %v1708 = vpop.permute.xlu0 %1707
      %1710 = vset.pattern.permute.xlu0 3
      %1711 = vperm.xlu0 %1710, %v1509
      %v1712 = vpop.permute.xlu0 %1711
      %v1714 = vmul.f32 %v1699, %v1704
      %v1715 = vmul.f32 %v1510, %v1704
      %v1716 = vmul.f32 %v1511, %v1704
      %v1717 = vmul.f32 %v1700, %v1708
      %v1718 = vmul.f32 %v1512, %v1708
      %v1719 = vmul.f32 %v1513, %v1708
      %v1720 = vmul.f32 %v1701, %v1712
      %v1721 = vmul.f32 %v1514, %v1712
      %v1722 = vmul.f32 %v1515, %v1712
      %1732 = vrot.lane.b32.xlu0 %v1714, 1
      %v1733 = vpop.permute.xlu0 %1732
      %1734 = vrot.lane.b32.xlu0 %v1715, 1
      %v1735 = vpop.permute.xlu0 %1734
      %1736 = vrot.lane.b32.xlu0 %v1716, 1
      %v1737 = vpop.permute.xlu0 %1736
      %1738 = vrot.lane.b32.xlu0 %v1717, 1
      %v1739 = vpop.permute.xlu0 %1738
      %1740 = vrot.lane.b32.xlu0 %v1718, 1
      %v1741 = vpop.permute.xlu0 %1740
      %1742 = vrot.lane.b32.xlu0 %v1719, 1
      %v1743 = vpop.permute.xlu0 %1742
      %1744 = vrot.lane.b32.xlu0 %v1720, 1
      %v1745 = vpop.permute.xlu0 %1744
      %1746 = vrot.lane.b32.xlu0 %v1721, 1
      %v1747 = vpop.permute.xlu0 %1746
      %1748 = vrot.lane.b32.xlu0 %v1722, 1
      %v1749 = vpop.permute.xlu0 %1748
      %v1750 = vsel %vm879, %v1733, %v1735
      %v1751 = vsel %vm879, %v1735, %v1737
      %v1752 = vsel %vm879, %v1739, %v1741
      %v1753 = vsel %vm879, %v1741, %v1743
      %v1754 = vsel %vm879, %v1745, %v1747
      %v1755 = vsel %vm879, %v1747, %v1749
      %v1762 = vadd.f32 %v1693, %v1750
      %v1763 = vadd.f32 %v1694, %v1751
      %v1764 = vadd.f32 %v1695, %v1752
      %v1765 = vadd.f32 %v1696, %v1753
      %v1766 = vadd.f32 %v1697, %v1754
      %v1767 = vadd.f32 %v1698, %v1755
      %1768 = vset.pattern.permute.xlu0 5
      %1769 = vperm.xlu0 %1768, %v1507
      %v1770 = vpop.permute.xlu0 %1769
      %1772 = vset.pattern.permute.xlu0 5
      %1773 = vperm.xlu0 %1772, %v1508
      %v1774 = vpop.permute.xlu0 %1773
      %1776 = vset.pattern.permute.xlu0 5
      %1777 = vperm.xlu0 %1776, %v1509
      %v1778 = vpop.permute.xlu0 %1777
      %v1780 = vmul.f32 %v1510, %v1770
      %v1781 = vmul.f32 %v1511, %v1770
      %v1782 = vmul.f32 %v1512, %v1774
      %v1783 = vmul.f32 %v1513, %v1774
      %v1784 = vmul.f32 %v1514, %v1778
      %v1785 = vmul.f32 %v1515, %v1778
      %1792 = vrot.lane.b32.xlu0 %v1780, 127
      %v1793 = vpop.permute.xlu0 %1792
      %1794 = vrot.lane.b32.xlu0 %v1781, 127
      %v1795 = vpop.permute.xlu0 %1794
      %1796 = vrot.lane.b32.xlu0 %v1782, 127
      %v1797 = vpop.permute.xlu0 %1796
      %1798 = vrot.lane.b32.xlu0 %v1783, 127
      %v1799 = vpop.permute.xlu0 %1798
      %1800 = vrot.lane.b32.xlu0 %v1784, 127
      %v1801 = vpop.permute.xlu0 %1800
      %1802 = vrot.lane.b32.xlu0 %v1785, 127
      %v1803 = vpop.permute.xlu0 %1802
      %v1804 = vsel %vm898, %v1793, %v1795
      %v1805 = vsel %vm898, %v1797, %v1799
      %v1806 = vsel %vm898, %v1801, %v1803
      %v1813 = vadd.f32 %v1762, %v1804
      %v1814 = vadd.f32 %v1763, %v1795
      %v1815 = vadd.f32 %v1764, %v1805
      %v1816 = vadd.f32 %v1765, %v1799
      %v1817 = vadd.f32 %v1766, %v1806
      %v1818 = vadd.f32 %v1767, %v1803
      %1819 = vset.pattern.permute.xlu0 6
      %1820 = vperm.xlu0 %1819, %v1507
      %v1821 = vpop.permute.xlu0 %1820
      %1823 = vset.pattern.permute.xlu0 6
      %1824 = vperm.xlu0 %1823, %v1508
      %v1825 = vpop.permute.xlu0 %1824
      %1827 = vset.pattern.permute.xlu0 6
      %1828 = vperm.xlu0 %1827, %v1509
      %v1829 = vpop.permute.xlu0 %1828
      %v1831 = vmul.f32 %v1510, %v1821
      %v1832 = vmul.f32 %v1511, %v1821
      %v1833 = vmul.f32 %v1512, %v1825
      %v1834 = vmul.f32 %v1513, %v1825
      %v1835 = vmul.f32 %v1514, %v1829
      %v1836 = vmul.f32 %v1515, %v1829
      %1843 = vrot.lane.b32.xlu0 %v1831, 93
      %v1844 = vpop.permute.xlu0 %1843
      %1845 = vrot.lane.b32.xlu0 %v1832, 93
      %v1846 = vpop.permute.xlu0 %1845
      %1847 = vrot.lane.b32.xlu0 %v1833, 93
      %v1848 = vpop.permute.xlu0 %1847
      %1849 = vrot.lane.b32.xlu0 %v1834, 93
      %v1850 = vpop.permute.xlu0 %1849
      %1851 = vrot.lane.b32.xlu0 %v1835, 93
      %v1852 = vpop.permute.xlu0 %1851
      %1853 = vrot.lane.b32.xlu0 %v1836, 93
      %v1854 = vpop.permute.xlu0 %1853
      %vm1855 = vcmask 760832
      %v1856 = vsel %vm1855, %v1844, %v1846
      %v1857 = vsel %vm1855, %v1848, %v1850
      %v1858 = vsel %vm1855, %v1852, %v1854
      %v1865 = vadd.f32 %v1813, %v1856
      %v1866 = vadd.f32 %v1814, %v1846
      %v1867 = vadd.f32 %v1815, %v1857
      %v1868 = vadd.f32 %v1816, %v1850
      %v1869 = vadd.f32 %v1817, %v1858
      %v1870 = vadd.f32 %v1818, %v1854
      %1871 = vset.pattern.permute.xlu0 7
      %1872 = vperm.xlu0 %1871, %v1507
      %v1873 = vpop.permute.xlu0 %1872
      %1875 = vset.pattern.permute.xlu0 7
      %1876 = vperm.xlu0 %1875, %v1508
      %v1877 = vpop.permute.xlu0 %1876
      %1879 = vset.pattern.permute.xlu0 7
      %1880 = vperm.xlu0 %1879, %v1509
      %v1881 = vpop.permute.xlu0 %1880
      %v1883 = vmul.f32 %v1510, %v1873
      %v1884 = vmul.f32 %v1511, %v1873
      %v1885 = vmul.f32 %v1512, %v1877
      %v1886 = vmul.f32 %v1513, %v1877
      %v1887 = vmul.f32 %v1514, %v1881
      %v1888 = vmul.f32 %v1515, %v1881
      %1895 = vrot.lane.b32.xlu0 %v1883, 92
      %v1896 = vpop.permute.xlu0 %1895
      %1897 = vrot.lane.b32.xlu0 %v1884, 92
      %v1898 = vpop.permute.xlu0 %1897
      %1899 = vrot.lane.b32.xlu0 %v1885, 92
      %v1900 = vpop.permute.xlu0 %1899
      %1901 = vrot.lane.b32.xlu0 %v1886, 92
      %v1902 = vpop.permute.xlu0 %1901
      %1903 = vrot.lane.b32.xlu0 %v1887, 92
      %v1904 = vpop.permute.xlu0 %1903
      %1905 = vrot.lane.b32.xlu0 %v1888, 92
      %v1906 = vpop.permute.xlu0 %1905
      %vm1907 = vcmask 752640
      %v1908 = vsel %vm1907, %v1896, %v1898
      %v1909 = vsel %vm1907, %v1900, %v1902
      %v1910 = vsel %vm1907, %v1904, %v1906
      %v1917 = vadd.f32 %v1865, %v1908
      %v1918 = vadd.f32 %v1866, %v1898
      %v1919 = vadd.f32 %v1867, %v1909
      %v1920 = vadd.f32 %v1868, %v1902
      %v1921 = vadd.f32 %v1869, %v1910
      %v1922 = vadd.f32 %v1870, %v1906
      %1923 = vset.pattern.permute.xlu0 8
      %1924 = vperm.xlu0 %1923, %v1507
      %v1925 = vpop.permute.xlu0 %1924
      %1927 = vset.pattern.permute.xlu0 8
      %1928 = vperm.xlu0 %1927, %v1508
      %v1929 = vpop.permute.xlu0 %1928
      %1931 = vset.pattern.permute.xlu0 8
      %1932 = vperm.xlu0 %1931, %v1509
      %v1933 = vpop.permute.xlu0 %1932
      %v1935 = vmul.f32 %v1510, %v1925
      %v1936 = vmul.f32 %v1511, %v1925
      %v1937 = vmul.f32 %v1512, %v1929
      %v1938 = vmul.f32 %v1513, %v1929
      %v1939 = vmul.f32 %v1514, %v1933
      %v1940 = vmul.f32 %v1515, %v1933
      %1947 = vrot.lane.b32.xlu0 %v1935, 91
      %v1948 = vpop.permute.xlu0 %1947
      %1949 = vrot.lane.b32.xlu0 %v1936, 91
      %v1950 = vpop.permute.xlu0 %1949
      %1951 = vrot.lane.b32.xlu0 %v1937, 91
      %v1952 = vpop.permute.xlu0 %1951
      %1953 = vrot.lane.b32.xlu0 %v1938, 91
      %v1954 = vpop.permute.xlu0 %1953
      %1955 = vrot.lane.b32.xlu0 %v1939, 91
      %v1956 = vpop.permute.xlu0 %1955
      %1957 = vrot.lane.b32.xlu0 %v1940, 91
      %v1958 = vpop.permute.xlu0 %1957
      %vm1959 = vcmask 744448
      %v1960 = vsel %vm1959, %v1948, %v1950
      %v1961 = vsel %vm1959, %v1952, %v1954
      %v1962 = vsel %vm1959, %v1956, %v1958
      %v1969 = vadd.f32 %v1917, %v1960
      %v1970 = vadd.f32 %v1918, %v1950
      %v1971 = vadd.f32 %v1919, %v1961
      %v1972 = vadd.f32 %v1920, %v1954
      %v1973 = vadd.f32 %v1921, %v1962
      %v1974 = vadd.f32 %v1922, %v1958
      %v1975 = vld [vmem:[%s6] sm:$0xff]
      %s1976 = scalar_lea.vmem %s9, 16
      %v1977 = vld [vmem:[%s1976] sm:$0xff]
      %1979 = vset.pattern.permute.xlu0 0
      %1980 = vperm.xlu0 %1979, %v1977
      %v1981 = vpop.permute.xlu0 %1980
      %vm1983 = vcmask 195584
      %v1985 = vsel %vm1983, %v1975, 0
      %1987 = vmatpush.msra.mxu0 0.0
      %1988 = vmatpush.msra.mxu0 0.0
      %1989 = vmatpush.msra.mxu0 0.0
      %1990 = vmatpush.msra.mxu0 0.0
      %1991 = vmatpush.msra.mxu0 0.0
      %1992 = vmatpush.msra.mxu0 0.0
      %1993 = vmatpush.msra.mxu0 0.0
      %1994 = vmatpush.msra.mxu0 0.0
      %1995 = vmatpush.msra.mxu0 0.0
      %1996 = vmatpush.msra.mxu0 0.0
      %1997 = vmatpush.msra.mxu0 0.0
      %1998 = vmatpush.msra.mxu0 0.0
      %1999 = vmatpush.msra.mxu0 0.0
      %2000 = vmatpush.msra.mxu0 %v1973
      %2001 = vmatpush.msra.mxu0 %v1971
      %2002 = vmatpush.msra.mxu0 %v1969
      %2003 = vmatmul.f32.gmra.mxu0 %v1985
      %v2004 = vpop.f32.mrf.mxu0
      %v2005 = vadd.f32 %v1981, %v2004
      %2006 = vdwg.mxu0
      %2007 = vmatpush.msra.mxu0 0.0
      %2008 = vmatpush.msra.mxu0 0.0
      %2009 = vmatpush.msra.mxu0 0.0
      %2010 = vmatpush.msra.mxu0 0.0
      %2011 = vmatpush.msra.mxu0 0.0
      %2012 = vmatpush.msra.mxu0 0.0
      %2013 = vmatpush.msra.mxu0 0.0
      %2014 = vmatpush.msra.mxu0 0.0
      %2015 = vmatpush.msra.mxu0 0.0
      %2016 = vmatpush.msra.mxu0 0.0
      %2017 = vmatpush.msra.mxu0 0.0
      %2018 = vmatpush.msra.mxu0 0.0
      %2019 = vmatpush.msra.mxu0 0.0
      %2020 = vmatpush.msra.mxu0 %v1974
      %2021 = vmatpush.msra.mxu0 %v1972
      %2022 = vmatpush.msra.mxu0 %v1970
      %2023 = vmatmul.f32.gmra.mxu0 %v1985
      %v2024 = vpop.f32.mrf.mxu0
      %v2025 = vadd.f32 %v1981, %v2024
      %2026 = vdwg.mxu0
      %v2027 = vmul.f32 %v2005, %v1009
      %v2028 = vmul.f32 %v2025, %v1010
      %v2029 = vsel %vm780, %v2028, 0.0
      %v2030 = vadd.f32 %v2027, %v2029
      %2031 = vadd.xlane.f32.xlu0 %v2030
      %v2032 = vpop.xlane.xlu0 %2031
      %v2033 = vmul.f32 %v2027, %v2027
      %v2034 = vmul.f32 %v2028, %v2028
      %v2035 = vsel %vm780, %v2034, 0.0
      %v2036 = vadd.f32 %v2033, %v2035
      %2037 = vadd.xlane.f32.xlu0 %v2036
      %v2038 = vpop.xlane.xlu0 %2037
      %v2039 = vmul.f32 %v2032, 0.0078125
      %v2040 = vmul.f32 %v2038, 0.0078125
      %v2041 = vmul.f32 %v2039, %v2039
      %v2042 = vsub.f32 %v2040, %v2041
      %v2043 = vmax.f32 %v2042, 0.0
      %v2044 = vadd.f32 %v2043, 1e-05
      %v2045 = vrsqrt.pop %v2044
      %v2046 = vmul.f32 %v2045, %v2044
      %v2047 = vmul.f32 %v2046, %v2045
      %v2048 = vmul.f32 0.5, %v2047
      %v2049 = vsub.f32 1.5, %v2048
      %v2050 = vmul.f32 %v2045, %v2049
      %vm2051 = vweird.f32 %v2044
      %vm2052 = vweird.f32 %v2045
      %vm2053 = vmor %vm2051, %vm2052
      %v2054 = vsel %vm2053, %v2045, %v2050
      %s2055 = scalar_lea.vmem %s10, 16
      %v2056 = vld [vmem:[%s2055] sm:$0xff]
      %v2057 = vmul.f32 %v2054, %v2056
      %s2058 = scalar_lea.vmem %s11, 16
      %v2059 = vld [vmem:[%s2058] sm:$0xff]
      %v2060 = vmul.f32 %v2039, %v2057
      %v2061 = vsub.f32 %v2059, %v2060
      %2063 = vset.pattern.permute.xlu0 0
      %2064 = vperm.xlu0 %2063, %v2057
      %v2065 = vpop.permute.xlu0 %2064
      %v2067 = vmul.f32 %v2027, %v2065
      %v2068 = vmul.f32 %v2028, %v2065
      %2070 = vset.pattern.permute.xlu0 0
      %2071 = vperm.xlu0 %2070, %v2061
      %v2072 = vpop.permute.xlu0 %2071
      %v2074 = vadd.f32 %v2067, %v2072
      %v2075 = vadd.f32 %v2068, %v2072
      %vm2076 = vcmp.ge.f32.partialorder %v2074, 0.0
      %vm2077 = vcmp.ge.f32.partialorder %v2075, 0.0
      %s2078 = scalar_lea.vmem %s12, 16
      %v2079 = vld [vmem:[%s2078] sm:$0xff]
      %2081 = vset.pattern.permute.xlu0 0
      %2082 = vperm.xlu0 %2081, %v2079
      %v2083 = vpop.permute.xlu0 %2082
      %v2085 = vmul.f32 %v2074, %v2083
      %v2086 = vmul.f32 %v2075, %v2083
      %v2087 = vsel %vm2076, %v2074, %v2085
      %v2088 = vsel %vm2077, %v2075, %v2086
      %v2089 = vmul.f32 %v2087, %v1009
      %v2090 = vmul.f32 %v2088, %v1010
      %2091 = vst [vmem:[#allocation2 + $0x68] sm:$0xff] %v2089
      %2092 = vst.msk [vmem:[#allocation2 + $0x70] sm:$0xff] %vm780, %v2090
      %v2093 = vld [vmem:[%s7] sm:$0xff]
      %v2094 = vld [vmem:[%s7 + $0x8] sm:$0xff]
      %v2095 = vld [vmem:[%s7 + $0x10] sm:$0xff]
      %v2096 = vld [vmem:[%s7 + $0x18] sm:$0xff]
      %v2097 = vld [vmem:[#allocation2 + $0x8] sm:$0xff]
      %v2098 = vld [vmem:[#allocation2 + $0x10] sm:$0xff]
      %v2099 = vld [vmem:[#allocation2 + $0x28] sm:$0xff]
      %v2100 = vld [vmem:[#allocation2 + $0x30] sm:$0xff]
      %v2101 = vld [vmem:[#allocation2 + $0x48] sm:$0xff]
      %v2102 = vld [vmem:[#allocation2 + $0x50] sm:$0xff]
      %v2103 = vld [vmem:[#allocation2 + $0x68] sm:$0xff]
      %v2104 = vld [vmem:[#allocation2 + $0x70] sm:$0xff]
      %2106 = vset.pattern.permute.xlu0 4
      %2107 = vperm.xlu0 %2106, %v2093
      %v2108 = vpop.permute.xlu0 %2107
      %2111 = vset.pattern.permute.xlu0 4
      %2112 = vperm.xlu0 %2111, %v2094
      %v2113 = vpop.permute.xlu0 %2112
      %2116 = vset.pattern.permute.xlu0 4
      %2117 = vperm.xlu0 %2116, %v2095
      %v2118 = vpop.permute.xlu0 %2117
      %2121 = vset.pattern.permute.xlu0 4
      %2122 = vperm.xlu0 %2121, %v2096
      %v2123 = vpop.permute.xlu0 %2122
      %v2125 = vmul.f32 %v2097, %v2108
      %v2126 = vmul.f32 %v2098, %v2108
      %v2127 = vmul.f32 %v2099, %v2113
      %v2128 = vmul.f32 %v2100, %v2113
      %v2129 = vmul.f32 %v2101, %v2118
      %v2130 = vmul.f32 %v2102, %v2118
      %v2131 = vmul.f32 %v2103, %v2123
      %v2132 = vmul.f32 %v2104, %v2123
      %v2133 = vld [vmem:[#allocation2] sm:$0xff]
      %v2134 = vld [vmem:[#allocation2 + $0x8] sm:$0xff]
      %v2135 = vld [vmem:[#allocation2 + $0x20] sm:$0xff]
      %v2136 = vld [vmem:[#allocation2 + $0x28] sm:$0xff]
      %v2137 = vld [vmem:[#allocation2 + $0x40] sm:$0xff]
      %v2138 = vld [vmem:[#allocation2 + $0x48] sm:$0xff]
      %v2139 = vld [vmem:[#allocation2 + $0x60] sm:$0xff]
      %v2140 = vld [vmem:[#allocation2 + $0x68] sm:$0xff]
      %2141 = vset.pattern.permute.xlu0 0
      %2142 = vperm.xlu0 %2141, %v2093
      %v2143 = vpop.permute.xlu0 %2142
      %2145 = vset.pattern.permute.xlu0 0
      %2146 = vperm.xlu0 %2145, %v2094
      %v2147 = vpop.permute.xlu0 %2146
      %2149 = vset.pattern.permute.xlu0 0
      %2150 = vperm.xlu0 %2149, %v2095
      %v2151 = vpop.permute.xlu0 %2150
      %2153 = vset.pattern.permute.xlu0 0
      %2154 = vperm.xlu0 %2153, %v2096
      %v2155 = vpop.permute.xlu0 %2154
      %v2157 = vmul.f32 %v2133, %v2143
      %v2158 = vmul.f32 %v2134, %v2143
      %v2159 = vmul.f32 %v2135, %v2147
      %v2160 = vmul.f32 %v2136, %v2147
      %v2161 = vmul.f32 %v2137, %v2151
      %v2162 = vmul.f32 %v2138, %v2151
      %v2163 = vmul.f32 %v2139, %v2155
      %v2164 = vmul.f32 %v2140, %v2155
      %2173 = vrot.lane.b32.xlu0 %v2157, 73
      %v2174 = vpop.permute.xlu0 %2173
      %2175 = vrot.lane.b32.xlu0 %v2158, 73
      %v2176 = vpop.permute.xlu0 %2175
      %2177 = vrot.lane.b32.xlu0 %v2159, 73
      %v2178 = vpop.permute.xlu0 %2177
      %2179 = vrot.lane.b32.xlu0 %v2160, 73
      %v2180 = vpop.permute.xlu0 %2179
      %2181 = vrot.lane.b32.xlu0 %v2161, 73
      %v2182 = vpop.permute.xlu0 %2181
      %2183 = vrot.lane.b32.xlu0 %v2162, 73
      %v2184 = vpop.permute.xlu0 %2183
      %2185 = vrot.lane.b32.xlu0 %v2163, 73
      %v2186 = vpop.permute.xlu0 %2185
      %2187 = vrot.lane.b32.xlu0 %v2164, 73
      %v2188 = vpop.permute.xlu0 %2187
      %vm2189 = vcmask 596992
      %v2190 = vsel %vm2189, %v2174, %v2176
      %v2191 = vsel %vm2189, %v2178, %v2180
      %v2192 = vsel %vm2189, %v2182, %v2184
      %v2193 = vsel %vm2189, %v2186, %v2188
      %v2202 = vadd.f32 %v2125, %v2190
      %v2203 = vadd.f32 %v2126, %v2176
      %v2204 = vadd.f32 %v2127, %v2191
      %v2205 = vadd.f32 %v2128, %v2180
      %v2206 = vadd.f32 %v2129, %v2192
      %v2207 = vadd.f32 %v2130, %v2184
      %v2208 = vadd.f32 %v2131, %v2193
      %v2209 = vadd.f32 %v2132, %v2188
      %2210 = vset.pattern.permute.xlu0 1
      %2211 = vperm.xlu0 %2210, %v2093
      %v2212 = vpop.permute.xlu0 %2211
      %2214 = vset.pattern.permute.xlu0 1
      %2215 = vperm.xlu0 %2214, %v2094
      %v2216 = vpop.permute.xlu0 %2215
      %2218 = vset.pattern.permute.xlu0 1
      %2219 = vperm.xlu0 %2218, %v2095
      %v2220 = vpop.permute.xlu0 %2219
      %2222 = vset.pattern.permute.xlu0 1
      %2223 = vperm.xlu0 %2222, %v2096
      %v2224 = vpop.permute.xlu0 %2223
      %v2226 = vmul.f32 %v2133, %v2212
      %v2227 = vmul.f32 %v2134, %v2212
      %v2228 = vmul.f32 %v2135, %v2216
      %v2229 = vmul.f32 %v2136, %v2216
      %v2230 = vmul.f32 %v2137, %v2220
      %v2231 = vmul.f32 %v2138, %v2220
      %v2232 = vmul.f32 %v2139, %v2224
      %v2233 = vmul.f32 %v2140, %v2224
      %2242 = vrot.lane.b32.xlu0 %v2226, 72
      %v2243 = vpop.permute.xlu0 %2242
      %2244 = vrot.lane.b32.xlu0 %v2227, 72
      %v2245 = vpop.permute.xlu0 %2244
      %2246 = vrot.lane.b32.xlu0 %v2228, 72
      %v2247 = vpop.permute.xlu0 %2246
      %2248 = vrot.lane.b32.xlu0 %v2229, 72
      %v2249 = vpop.permute.xlu0 %2248
      %2250 = vrot.lane.b32.xlu0 %v2230, 72
      %v2251 = vpop.permute.xlu0 %2250
      %2252 = vrot.lane.b32.xlu0 %v2231, 72
      %v2253 = vpop.permute.xlu0 %2252
      %2254 = vrot.lane.b32.xlu0 %v2232, 72
      %v2255 = vpop.permute.xlu0 %2254
      %2256 = vrot.lane.b32.xlu0 %v2233, 72
      %v2257 = vpop.permute.xlu0 %2256
      %vm2258 = vcmask 588800
      %v2259 = vsel %vm2258, %v2243, %v2245
      %v2260 = vsel %vm2258, %v2247, %v2249
      %v2261 = vsel %vm2258, %v2251, %v2253
      %v2262 = vsel %vm2258, %v2255, %v2257
      %v2271 = vadd.f32 %v2202, %v2259
      %v2272 = vadd.f32 %v2203, %v2245
      %v2273 = vadd.f32 %v2204, %v2260
      %v2274 = vadd.f32 %v2205, %v2249
      %v2275 = vadd.f32 %v2206, %v2261
      %v2276 = vadd.f32 %v2207, %v2253
      %v2277 = vadd.f32 %v2208, %v2262
      %v2278 = vadd.f32 %v2209, %v2257
      %2279 = vset.pattern.permute.xlu0 2
      %2280 = vperm.xlu0 %2279, %v2093
      %v2281 = vpop.permute.xlu0 %2280
      %2283 = vset.pattern.permute.xlu0 2
      %2284 = vperm.xlu0 %2283, %v2094
      %v2285 = vpop.permute.xlu0 %2284
      %2287 = vset.pattern.permute.xlu0 2
      %2288 = vperm.xlu0 %2287, %v2095
      %v2289 = vpop.permute.xlu0 %2288
      %2291 = vset.pattern.permute.xlu0 2
      %2292 = vperm.xlu0 %2291, %v2096
      %v2293 = vpop.permute.xlu0 %2292
      %v2295 = vmul.f32 %v2133, %v2281
      %v2296 = vmul.f32 %v2134, %v2281
      %v2297 = vmul.f32 %v2135, %v2285
      %v2298 = vmul.f32 %v2136, %v2285
      %v2299 = vmul.f32 %v2137, %v2289
      %v2300 = vmul.f32 %v2138, %v2289
      %v2301 = vmul.f32 %v2139, %v2293
      %v2302 = vmul.f32 %v2140, %v2293
      %2311 = vrot.lane.b32.xlu0 %v2295, 71
      %v2312 = vpop.permute.xlu0 %2311
      %2313 = vrot.lane.b32.xlu0 %v2296, 71
      %v2314 = vpop.permute.xlu0 %2313
      %2315 = vrot.lane.b32.xlu0 %v2297, 71
      %v2316 = vpop.permute.xlu0 %2315
      %2317 = vrot.lane.b32.xlu0 %v2298, 71
      %v2318 = vpop.permute.xlu0 %2317
      %2319 = vrot.lane.b32.xlu0 %v2299, 71
      %v2320 = vpop.permute.xlu0 %2319
      %2321 = vrot.lane.b32.xlu0 %v2300, 71
      %v2322 = vpop.permute.xlu0 %2321
      %2323 = vrot.lane.b32.xlu0 %v2301, 71
      %v2324 = vpop.permute.xlu0 %2323
      %2325 = vrot.lane.b32.xlu0 %v2302, 71
      %v2326 = vpop.permute.xlu0 %2325
      %vm2327 = vcmask 580608
      %v2328 = vsel %vm2327, %v2312, %v2314
      %v2329 = vsel %vm2327, %v2316, %v2318
      %v2330 = vsel %vm2327, %v2320, %v2322
      %v2331 = vsel %vm2327, %v2324, %v2326
      %v2340 = vadd.f32 %v2271, %v2328
      %v2341 = vadd.f32 %v2272, %v2314
      %v2342 = vadd.f32 %v2273, %v2329
      %v2343 = vadd.f32 %v2274, %v2318
      %v2344 = vadd.f32 %v2275, %v2330
      %v2345 = vadd.f32 %v2276, %v2322
      %v2346 = vadd.f32 %v2277, %v2331
      %v2347 = vadd.f32 %v2278, %v2326
      %v2348 = vld [vmem:[#allocation2] sm:$0xff]
      %v2349 = vld [vmem:[#allocation2 + $0x20] sm:$0xff]
      %v2350 = vld [vmem:[#allocation2 + $0x40] sm:$0xff]
      %v2351 = vld [vmem:[#allocation2 + $0x60] sm:$0xff]
      %2352 = vset.pattern.permute.xlu0 3
      %2353 = vperm.xlu0 %2352, %v2093
      %v2354 = vpop.permute.xlu0 %2353
      %2356 = vset.pattern.permute.xlu0 3
      %2357 = vperm.xlu0 %2356, %v2094
      %v2358 = vpop.permute.xlu0 %2357
      %2360 = vset.pattern.permute.xlu0 3
      %2361 = vperm.xlu0 %2360, %v2095
      %v2362 = vpop.permute.xlu0 %2361
      %2364 = vset.pattern.permute.xlu0 3
      %2365 = vperm.xlu0 %2364, %v2096
      %v2366 = vpop.permute.xlu0 %2365
      %v2368 = vmul.f32 %v2348, %v2354
      %v2369 = vmul.f32 %v2097, %v2354
      %v2370 = vmul.f32 %v2098, %v2354
      %v2371 = vmul.f32 %v2349, %v2358
      %v2372 = vmul.f32 %v2099, %v2358
      %v2373 = vmul.f32 %v2100, %v2358
      %v2374 = vmul.f32 %v2350, %v2362
      %v2375 = vmul.f32 %v2101, %v2362
      %v2376 = vmul.f32 %v2102, %v2362
      %v2377 = vmul.f32 %v2351, %v2366
      %v2378 = vmul.f32 %v2103, %v2366
      %v2379 = vmul.f32 %v2104, %v2366
      %2392 = vrot.lane.b32.xlu0 %v2368, 1
      %v2393 = vpop.permute.xlu0 %2392
      %2394 = vrot.lane.b32.xlu0 %v2369, 1
      %v2395 = vpop.permute.xlu0 %2394
      %2396 = vrot.lane.b32.xlu0 %v2370, 1
      %v2397 = vpop.permute.xlu0 %2396
      %2398 = vrot.lane.b32.xlu0 %v2371, 1
      %v2399 = vpop.permute.xlu0 %2398
      %2400 = vrot.lane.b32.xlu0 %v2372, 1
      %v2401 = vpop.permute.xlu0 %2400
      %2402 = vrot.lane.b32.xlu0 %v2373, 1
      %v2403 = vpop.permute.xlu0 %2402
      %2404 = vrot.lane.b32.xlu0 %v2374, 1
      %v2405 = vpop.permute.xlu0 %2404
      %2406 = vrot.lane.b32.xlu0 %v2375, 1
      %v2407 = vpop.permute.xlu0 %2406
      %2408 = vrot.lane.b32.xlu0 %v2376, 1
      %v2409 = vpop.permute.xlu0 %2408
      %2410 = vrot.lane.b32.xlu0 %v2377, 1
      %v2411 = vpop.permute.xlu0 %2410
      %2412 = vrot.lane.b32.xlu0 %v2378, 1
      %v2413 = vpop.permute.xlu0 %2412
      %2414 = vrot.lane.b32.xlu0 %v2379, 1
      %v2415 = vpop.permute.xlu0 %2414
      %v2416 = vsel %vm879, %v2393, %v2395
      %v2417 = vsel %vm879, %v2395, %v2397
      %v2418 = vsel %vm879, %v2399, %v2401
      %v2419 = vsel %vm879, %v2401, %v2403
      %v2420 = vsel %vm879, %v2405, %v2407
      %v2421 = vsel %vm879, %v2407, %v2409
      %v2422 = vsel %vm879, %v2411, %v2413
      %v2423 = vsel %vm879, %v2413, %v2415
      %v2432 = vadd.f32 %v2340, %v2416
      %v2433 = vadd.f32 %v2341, %v2417
      %v2434 = vadd.f32 %v2342, %v2418
      %v2435 = vadd.f32 %v2343, %v2419
      %v2436 = vadd.f32 %v2344, %v2420
      %v2437 = vadd.f32 %v2345, %v2421
      %v2438 = vadd.f32 %v2346, %v2422
      %v2439 = vadd.f32 %v2347, %v2423
      %2440 = vset.pattern.permute.xlu0 5
      %2441 = vperm.xlu0 %2440, %v2093
      %v2442 = vpop.permute.xlu0 %2441
      %2444 = vset.pattern.permute.xlu0 5
      %2445 = vperm.xlu0 %2444, %v2094
      %v2446 = vpop.permute.xlu0 %2445
      %2448 = vset.pattern.permute.xlu0 5
      %2449 = vperm.xlu0 %2448, %v2095
      %v2450 = vpop.permute.xlu0 %2449
      %2452 = vset.pattern.permute.xlu0 5
      %2453 = vperm.xlu0 %2452, %v2096
      %v2454 = vpop.permute.xlu0 %2453
      %v2456 = vmul.f32 %v2097, %v2442
      %v2457 = vmul.f32 %v2098, %v2442
      %v2458 = vmul.f32 %v2099, %v2446
      %v2459 = vmul.f32 %v2100, %v2446
      %v2460 = vmul.f32 %v2101, %v2450
      %v2461 = vmul.f32 %v2102, %v2450
      %v2462 = vmul.f32 %v2103, %v2454
      %v2463 = vmul.f32 %v2104, %v2454
      %2472 = vrot.lane.b32.xlu0 %v2456, 127
      %v2473 = vpop.permute.xlu0 %2472
      %2474 = vrot.lane.b32.xlu0 %v2457, 127
      %v2475 = vpop.permute.xlu0 %2474
      %2476 = vrot.lane.b32.xlu0 %v2458, 127
      %v2477 = vpop.permute.xlu0 %2476
      %2478 = vrot.lane.b32.xlu0 %v2459, 127
      %v2479 = vpop.permute.xlu0 %2478
      %2480 = vrot.lane.b32.xlu0 %v2460, 127
      %v2481 = vpop.permute.xlu0 %2480
      %2482 = vrot.lane.b32.xlu0 %v2461, 127
      %v2483 = vpop.permute.xlu0 %2482
      %2484 = vrot.lane.b32.xlu0 %v2462, 127
      %v2485 = vpop.permute.xlu0 %2484
      %2486 = vrot.lane.b32.xlu0 %v2463, 127
      %v2487 = vpop.permute.xlu0 %2486
      %v2488 = vsel %vm898, %v2473, %v2475
      %v2489 = vsel %vm898, %v2477, %v2479
      %v2490 = vsel %vm898, %v2481, %v2483
      %v2491 = vsel %vm898, %v2485, %v2487
      %v2500 = vadd.f32 %v2432, %v2488
      %v2501 = vadd.f32 %v2433, %v2475
      %v2502 = vadd.f32 %v2434, %v2489
      %v2503 = vadd.f32 %v2435, %v2479
      %v2504 = vadd.f32 %v2436, %v2490
      %v2505 = vadd.f32 %v2437, %v2483
      %v2506 = vadd.f32 %v2438, %v2491
      %v2507 = vadd.f32 %v2439, %v2487
      %2508 = vset.pattern.permute.xlu0 6
      %2509 = vperm.xlu0 %2508, %v2093
      %v2510 = vpop.permute.xlu0 %2509
      %2512 = vset.pattern.permute.xlu0 6
      %2513 = vperm.xlu0 %2512, %v2094
      %v2514 = vpop.permute.xlu0 %2513
      %2516 = vset.pattern.permute.xlu0 6
      %2517 = vperm.xlu0 %2516, %v2095
      %v2518 = vpop.permute.xlu0 %2517
      %2520 = vset.pattern.permute.xlu0 6
      %2521 = vperm.xlu0 %2520, %v2096
      %v2522 = vpop.permute.xlu0 %2521
      %v2524 = vmul.f32 %v2097, %v2510
      %v2525 = vmul.f32 %v2098, %v2510
      %v2526 = vmul.f32 %v2099, %v2514
      %v2527 = vmul.f32 %v2100, %v2514
      %v2528 = vmul.f32 %v2101, %v2518
      %v2529 = vmul.f32 %v2102, %v2518
      %v2530 = vmul.f32 %v2103, %v2522
      %v2531 = vmul.f32 %v2104, %v2522
      %2540 = vrot.lane.b32.xlu0 %v2524, 57
      %v2541 = vpop.permute.xlu0 %2540
      %2542 = vrot.lane.b32.xlu0 %v2525, 57
      %v2543 = vpop.permute.xlu0 %2542
      %2544 = vrot.lane.b32.xlu0 %v2526, 57
      %v2545 = vpop.permute.xlu0 %2544
      %2546 = vrot.lane.b32.xlu0 %v2527, 57
      %v2547 = vpop.permute.xlu0 %2546
      %2548 = vrot.lane.b32.xlu0 %v2528, 57
      %v2549 = vpop.permute.xlu0 %2548
      %2550 = vrot.lane.b32.xlu0 %v2529, 57
      %v2551 = vpop.permute.xlu0 %2550
      %2552 = vrot.lane.b32.xlu0 %v2530, 57
      %v2553 = vpop.permute.xlu0 %2552
      %2554 = vrot.lane.b32.xlu0 %v2531, 57
      %v2555 = vpop.permute.xlu0 %2554
      %vm2556 = vcmask 465920
      %v2557 = vsel %vm2556, %v2541, %v2543
      %v2558 = vsel %vm2556, %v2545, %v2547
      %v2559 = vsel %vm2556, %v2549, %v2551
      %v2560 = vsel %vm2556, %v2553, %v2555
      %v2569 = vadd.f32 %v2500, %v2557
      %v2570 = vadd.f32 %v2501, %v2543
      %v2571 = vadd.f32 %v2502, %v2558
      %v2572 = vadd.f32 %v2503, %v2547
      %v2573 = vadd.f32 %v2504, %v2559
      %v2574 = vadd.f32 %v2505, %v2551
      %v2575 = vadd.f32 %v2506, %v2560
      %v2576 = vadd.f32 %v2507, %v2555
      %2577 = vset.pattern.permute.xlu0 7
      %2578 = vperm.xlu0 %2577, %v2093
      %v2579 = vpop.permute.xlu0 %2578
      %2581 = vset.pattern.permute.xlu0 7
      %2582 = vperm.xlu0 %2581, %v2094
      %v2583 = vpop.permute.xlu0 %2582
      %2585 = vset.pattern.permute.xlu0 7
      %2586 = vperm.xlu0 %2585, %v2095
      %v2587 = vpop.permute.xlu0 %2586
      %2589 = vset.pattern.permute.xlu0 7
      %2590 = vperm.xlu0 %2589, %v2096
      %v2591 = vpop.permute.xlu0 %2590
      %v2593 = vmul.f32 %v2097, %v2579
      %v2594 = vmul.f32 %v2098, %v2579
      %v2595 = vmul.f32 %v2099, %v2583
      %v2596 = vmul.f32 %v2100, %v2583
      %v2597 = vmul.f32 %v2101, %v2587
      %v2598 = vmul.f32 %v2102, %v2587
      %v2599 = vmul.f32 %v2103, %v2591
      %v2600 = vmul.f32 %v2104, %v2591
      %2609 = vrot.lane.b32.xlu0 %v2593, 56
      %v2610 = vpop.permute.xlu0 %2609
      %2611 = vrot.lane.b32.xlu0 %v2594, 56
      %v2612 = vpop.permute.xlu0 %2611
      %2613 = vrot.lane.b32.xlu0 %v2595, 56
      %v2614 = vpop.permute.xlu0 %2613
      %2615 = vrot.lane.b32.xlu0 %v2596, 56
      %v2616 = vpop.permute.xlu0 %2615
      %2617 = vrot.lane.b32.xlu0 %v2597, 56
      %v2618 = vpop.permute.xlu0 %2617
      %2619 = vrot.lane.b32.xlu0 %v2598, 56
      %v2620 = vpop.permute.xlu0 %2619
      %2621 = vrot.lane.b32.xlu0 %v2599, 56
      %v2622 = vpop.permute.xlu0 %2621
      %2623 = vrot.lane.b32.xlu0 %v2600, 56
      %v2624 = vpop.permute.xlu0 %2623
      %vm2625 = vcmask 457728
      %v2626 = vsel %vm2625, %v2610, %v2612
      %v2627 = vsel %vm2625, %v2614, %v2616
      %v2628 = vsel %vm2625, %v2618, %v2620
      %v2629 = vsel %vm2625, %v2622, %v2624
      %v2638 = vadd.f32 %v2569, %v2626
      %v2639 = vadd.f32 %v2570, %v2612
      %v2640 = vadd.f32 %v2571, %v2627
      %v2641 = vadd.f32 %v2572, %v2616
      %v2642 = vadd.f32 %v2573, %v2628
      %v2643 = vadd.f32 %v2574, %v2620
      %v2644 = vadd.f32 %v2575, %v2629
      %v2645 = vadd.f32 %v2576, %v2624
      %2646 = vset.pattern.permute.xlu0 8
      %2647 = vperm.xlu0 %2646, %v2093
      %v2648 = vpop.permute.xlu0 %2647
      %2650 = vset.pattern.permute.xlu0 8
      %2651 = vperm.xlu0 %2650, %v2094
      %v2652 = vpop.permute.xlu0 %2651
      %2654 = vset.pattern.permute.xlu0 8
      %2655 = vperm.xlu0 %2654, %v2095
      %v2656 = vpop.permute.xlu0 %2655
      %2658 = vset.pattern.permute.xlu0 8
      %2659 = vperm.xlu0 %2658, %v2096
      %v2660 = vpop.permute.xlu0 %2659
      %v2662 = vmul.f32 %v2097, %v2648
      %v2663 = vmul.f32 %v2098, %v2648
      %v2664 = vmul.f32 %v2099, %v2652
      %v2665 = vmul.f32 %v2100, %v2652
      %v2666 = vmul.f32 %v2101, %v2656
      %v2667 = vmul.f32 %v2102, %v2656
      %v2668 = vmul.f32 %v2103, %v2660
      %v2669 = vmul.f32 %v2104, %v2660
      %2678 = vrot.lane.b32.xlu0 %v2662, 55
      %v2679 = vpop.permute.xlu0 %2678
      %2680 = vrot.lane.b32.xlu0 %v2663, 55
      %v2681 = vpop.permute.xlu0 %2680
      %2682 = vrot.lane.b32.xlu0 %v2664, 55
      %v2683 = vpop.permute.xlu0 %2682
      %2684 = vrot.lane.b32.xlu0 %v2665, 55
      %v2685 = vpop.permute.xlu0 %2684
      %2686 = vrot.lane.b32.xlu0 %v2666, 55
      %v2687 = vpop.permute.xlu0 %2686
      %2688 = vrot.lane.b32.xlu0 %v2667, 55
      %v2689 = vpop.permute.xlu0 %2688
      %2690 = vrot.lane.b32.xlu0 %v2668, 55
      %v2691 = vpop.permute.xlu0 %2690
      %2692 = vrot.lane.b32.xlu0 %v2669, 55
      %v2693 = vpop.permute.xlu0 %2692
      %vm2694 = vcmask 449536
      %v2695 = vsel %vm2694, %v2679, %v2681
      %v2696 = vsel %vm2694, %v2683, %v2685
      %v2697 = vsel %vm2694, %v2687, %v2689
      %v2698 = vsel %vm2694, %v2691, %v2693
      %v2707 = vadd.f32 %v2638, %v2695
      %v2708 = vadd.f32 %v2639, %v2681
      %v2709 = vadd.f32 %v2640, %v2696
      %v2710 = vadd.f32 %v2641, %v2685
      %v2711 = vadd.f32 %v2642, %v2697
      %v2712 = vadd.f32 %v2643, %v2689
      %v2713 = vadd.f32 %v2644, %v2698
      %v2714 = vadd.f32 %v2645, %v2693
      %v2715 = vld [vmem:[%s8] sm:$0xff]
      %s2716 = scalar_lea.vmem %s9, 24
      %v2717 = vld [vmem:[%s2716] sm:$0xff]
      %2719 = vset.pattern.permute.xlu0 0
      %2720 = vperm.xlu0 %2719, %v2717
      %v2721 = vpop.permute.xlu0 %2720
      %vm2723 = vcmask 261120
      %v2725 = vsel %vm2723, %v2715, 0
      %2727 = vmatpush.msra.mxu0 0.0
      %2728 = vmatpush.msra.mxu0 0.0
      %2729 = vmatpush.msra.mxu0 0.0
      %2730 = vmatpush.msra.mxu0 0.0
      %2731 = vmatpush.msra.mxu0 0.0
      %2732 = vmatpush.msra.mxu0 0.0
      %2733 = vmatpush.msra.mxu0 0.0
      %2734 = vmatpush.msra.mxu0 0.0
      %2735 = vmatpush.msra.mxu0 0.0
      %2736 = vmatpush.msra.mxu0 0.0
      %2737 = vmatpush.msra.mxu0 0.0
      %2738 = vmatpush.msra.mxu0 0.0
      %2739 = vmatpush.msra.mxu0 %v2713
      %2740 = vmatpush.msra.mxu0 %v2711
      %2741 = vmatpush.msra.mxu0 %v2709
      %2742 = vmatpush.msra.mxu0 %v2707
      %2743 = vmatmul.f32.gmra.mxu0 %v2725
      %v2744 = vpop.f32.mrf.mxu0
      %v2745 = vadd.f32 %v2721, %v2744
      %2746 = vdwg.mxu0
      %2747 = vmatpush.msra.mxu0 0.0
      %2748 = vmatpush.msra.mxu0 0.0
      %2749 = vmatpush.msra.mxu0 0.0
      %2750 = vmatpush.msra.mxu0 0.0
      %2751 = vmatpush.msra.mxu0 0.0
      %2752 = vmatpush.msra.mxu0 0.0
      %2753 = vmatpush.msra.mxu0 0.0
      %2754 = vmatpush.msra.mxu0 0.0
      %2755 = vmatpush.msra.mxu0 0.0
      %2756 = vmatpush.msra.mxu0 0.0
      %2757 = vmatpush.msra.mxu0 0.0
      %2758 = vmatpush.msra.mxu0 0.0
      %2759 = vmatpush.msra.mxu0 %v2714
      %2760 = vmatpush.msra.mxu0 %v2712
      %2761 = vmatpush.msra.mxu0 %v2710
      %2762 = vmatpush.msra.mxu0 %v2708
      %2763 = vmatmul.f32.gmra.mxu0 %v2725
      %v2764 = vpop.f32.mrf.mxu0
      %v2765 = vadd.f32 %v2721, %v2764
      %2766 = vdwg.mxu0
      %v2767 = vmul.f32 %v2745, %v1009
      %v2768 = vmul.f32 %v2765, %v1010
      %v2769 = vsel %vm780, %v2768, 0.0
      %v2770 = vadd.f32 %v2767, %v2769
      %2771 = vadd.xlane.f32.xlu0 %v2770
      %v2772 = vpop.xlane.xlu0 %2771
      %v2773 = vmul.f32 %v2767, %v2767
      %v2774 = vmul.f32 %v2768, %v2768
      %v2775 = vsel %vm780, %v2774, 0.0
      %v2776 = vadd.f32 %v2773, %v2775
      %2777 = vadd.xlane.f32.xlu0 %v2776
      %v2778 = vpop.xlane.xlu0 %2777
      %v2779 = vmul.f32 %v2772, 0.0078125
      %v2780 = vmul.f32 %v2778, 0.0078125
      %v2781 = vmul.f32 %v2779, %v2779
      %v2782 = vsub.f32 %v2780, %v2781
      %v2783 = vmax.f32 %v2782, 0.0
      %v2784 = vadd.f32 %v2783, 1e-05
      %v2785 = vrsqrt.pop %v2784
      %v2786 = vmul.f32 %v2785, %v2784
      %v2787 = vmul.f32 %v2786, %v2785
      %v2788 = vmul.f32 0.5, %v2787
      %v2789 = vsub.f32 1.5, %v2788
      %v2790 = vmul.f32 %v2785, %v2789
      %vm2791 = vweird.f32 %v2784
      %vm2792 = vweird.f32 %v2785
      %vm2793 = vmor %vm2791, %vm2792
      %v2794 = vsel %vm2793, %v2785, %v2790
      %s2795 = scalar_lea.vmem %s10, 24
      %v2796 = vld [vmem:[%s2795] sm:$0xff]
      %v2797 = vmul.f32 %v2794, %v2796
      %s2798 = scalar_lea.vmem %s11, 24
      %v2799 = vld [vmem:[%s2798] sm:$0xff]
      %v2800 = vmul.f32 %v2779, %v2797
      %v2801 = vsub.f32 %v2799, %v2800
      %2803 = vset.pattern.permute.xlu0 0
      %2804 = vperm.xlu0 %2803, %v2797
      %v2805 = vpop.permute.xlu0 %2804
      %v2807 = vmul.f32 %v2767, %v2805
      %v2808 = vmul.f32 %v2768, %v2805
      %2810 = vset.pattern.permute.xlu0 0
      %2811 = vperm.xlu0 %2810, %v2801
      %v2812 = vpop.permute.xlu0 %2811
      %v2814 = vadd.f32 %v2807, %v2812
      %v2815 = vadd.f32 %v2808, %v2812
      %vm2816 = vcmp.ge.f32.partialorder %v2814, 0.0
      %vm2817 = vcmp.ge.f32.partialorder %v2815, 0.0
      %s2818 = scalar_lea.vmem %s12, 24
      %v2819 = vld [vmem:[%s2818] sm:$0xff]
      %2821 = vset.pattern.permute.xlu0 0
      %2822 = vperm.xlu0 %2821, %v2819
      %v2823 = vpop.permute.xlu0 %2822
      %v2825 = vmul.f32 %v2814, %v2823
      %v2826 = vmul.f32 %v2815, %v2823
      %v2827 = vsel %vm2816, %v2814, %v2825
      %v2828 = vsel %vm2817, %v2815, %v2826
      %v2829 = vmul.f32 %v2827, %v1009
      %v2830 = vmul.f32 %v2828, %v1010
      %2831 = vst [vmem:[#allocation2 + $0x8] sm:$0xff] %v2829
      %2832 = vst.msk [vmem:[#allocation2 + $0x10] sm:$0xff] %vm780, %v2830
      %v2833 = vld [vmem:[#allocation2 + $0x8] sm:$0xff]
      %v2834 = vld [vmem:[#allocation2 + $0x10] sm:$0xff]
      %v2835 = vld [vmem:[#allocation2] sm:$0xff]
      %v2836 = vld [vmem:[%s14] sm:$0xff]
      %v2838 = vsel %vm856, %v2836, 0
      %2840 = vmatpush.msra.mxu0 0.0
      %2841 = vmatpush.msra.mxu0 0.0
      %2842 = vmatpush.msra.mxu0 0.0
      %2843 = vmatpush.msra.mxu0 0.0
      %2844 = vmatpush.msra.mxu0 0.0
      %2845 = vmatpush.msra.mxu0 0.0
      %2846 = vmatpush.msra.mxu0 0.0
      %2847 = vmatpush.msra.mxu0 0.0
      %2848 = vmatpush.msra.mxu0 0.0
      %2849 = vmatpush.msra.mxu0 0.0
      %2850 = vmatpush.msra.mxu0 0.0
      %2851 = vmatpush.msra.mxu0 0.0
      %2852 = vmatpush.msra.mxu0 0.0
      %2853 = vmatpush.msra.mxu0 0.0
      %2854 = vmatpush.msra.mxu0 0.0
      %2855 = vmatpush.msra.mxu0 %v2833
      %2856 = vmatmul.f32.gmra.mxu0 %v2838
      %v2857 = vpop.f32.mrf.mxu0
      %v2858 = vadd.f32 0.0, %v2857
      %2859 = vdwg.mxu0
      %2860 = vmatpush.msra.mxu0 0.0
      %2861 = vmatpush.msra.mxu0 0.0
      %2862 = vmatpush.msra.mxu0 0.0
      %2863 = vmatpush.msra.mxu0 0.0
      %2864 = vmatpush.msra.mxu0 0.0
      %2865 = vmatpush.msra.mxu0 0.0
      %2866 = vmatpush.msra.mxu0 0.0
      %2867 = vmatpush.msra.mxu0 0.0
      %2868 = vmatpush.msra.mxu0 0.0
      %2869 = vmatpush.msra.mxu0 0.0
      %2870 = vmatpush.msra.mxu0 0.0
      %2871 = vmatpush.msra.mxu0 0.0
      %2872 = vmatpush.msra.mxu0 0.0
      %2873 = vmatpush.msra.mxu0 0.0
      %2874 = vmatpush.msra.mxu0 0.0
      %2875 = vmatpush.msra.mxu0 %v2834
      %2876 = vmatmul.f32.gmra.mxu0 %v2838
      %v2877 = vpop.f32.mrf.mxu0
      %v2878 = vadd.f32 0.0, %v2877
      %2879 = vdwg.mxu0
      %2883 = vrot.lane.b32.xlu0 %v2835, 1
      %v2884 = vpop.permute.xlu0 %2883
      %2885 = vrot.lane.b32.xlu0 %v2833, 1
      %v2886 = vpop.permute.xlu0 %2885
      %2887 = vrot.lane.b32.xlu0 %v2834, 1
      %v2888 = vpop.permute.xlu0 %2887
      %v2889 = vsel %vm879, %v2884, %v2886
      %v2890 = vsel %vm879, %v2886, %v2888
      %2893 = vmatpush.msra.mxu0 0.0
      %2894 = vmatpush.msra.mxu0 0.0
      %2895 = vmatpush.msra.mxu0 0.0
      %2896 = vmatpush.msra.mxu0 0.0
      %2897 = vmatpush.msra.mxu0 0.0
      %2898 = vmatpush.msra.mxu0 0.0
      %2899 = vmatpush.msra.mxu0 0.0
      %2900 = vmatpush.msra.mxu0 0.0
      %2901 = vmatpush.msra.mxu0 0.0
      %2902 = vmatpush.msra.mxu0 0.0
      %2903 = vmatpush.msra.mxu0 0.0
      %2904 = vmatpush.msra.mxu0 0.0
      %2905 = vmatpush.msra.mxu0 0.0
      %2906 = vmatpush.msra.mxu0 0.0
      %2907 = vmatpush.msra.mxu0 0.0
      %2908 = vmatpush.msra.mxu0 %v2889
      %2909 = vmatmul.f32.gmra.mxu0 %v2838
      %v2910 = vpop.f32.mrf.mxu0
      %v2911 = vadd.f32 0.0, %v2910
      %2912 = vdwg.mxu0
      %2913 = vmatpush.msra.mxu0 0.0
      %2914 = vmatpush.msra.mxu0 0.0
      %2915 = vmatpush.msra.mxu0 0.0
      %2916 = vmatpush.msra.mxu0 0.0
      %2917 = vmatpush.msra.mxu0 0.0
      %2918 = vmatpush.msra.mxu0 0.0
      %2919 = vmatpush.msra.mxu0 0.0
      %2920 = vmatpush.msra.mxu0 0.0
      %2921 = vmatpush.msra.mxu0 0.0
      %2922 = vmatpush.msra.mxu0 0.0
      %2923 = vmatpush.msra.mxu0 0.0
      %2924 = vmatpush.msra.mxu0 0.0
      %2925 = vmatpush.msra.mxu0 0.0
      %2926 = vmatpush.msra.mxu0 0.0
      %2927 = vmatpush.msra.mxu0 0.0
      %2928 = vmatpush.msra.mxu0 %v2890
      %2929 = vmatmul.f32.gmra.mxu0 %v2838
      %v2930 = vpop.f32.mrf.mxu0
      %v2931 = vadd.f32 0.0, %v2930
      %2932 = vdwg.mxu0
      %v2933 = vld [vmem:[#allocation3] sm:$0x1]
      %v2936 = vrot.slane %v2911, 2
      %v2937 = vrot.slane %v2931, 2
      %v2940 = vadd.f32 %v2858, %v2936
      %v2941 = vadd.f32 %v2878, %v2937
      %2943 = vset.pattern.permute.xlu0 0
      %2944 = vperm.xlu0 %2943, %v2933
      %v2945 = vpop.permute.xlu0 %2944
      %v2947 = vperm.slane %v2945, 0
      %v2948 = vadd.f32 %v2940, %v2947
      %v2949 = vadd.f32 %v2941, %v2947
      %v2950 = vadd.f32 %v2858, %v2947
      %v2951 = vadd.f32 %v2878, %v2947
      %v2952 = vmul.f32 %v2950, %v1009
      %v2953 = vmul.f32 %v2951, %v1010
      %vm2954 = vcmask 1040384
      %v2955 = vsel %vm2954, %v2948, 0.0
      %vm2956 = vcmask 122880
      %v2957 = vsel %vm2956, %v2949, 0.0
      %v2958 = vadd.f32 %v2955, %v2957
      %2959 = vadd.xlane.f32.xlu0 %v2958
      %v2960 = vpop.xlane.xlu0 %2959
      %v2961 = vrot.slane %v2960, 4
      %v2962 = vadd.f32 %v2960, %v2961
      %v2963 = vrot.slane %v2962, 2
      %v2964 = vadd.f32 %v2962, %v2963
      %v2965 = vrot.slane %v2964, 1
      %v2966 = vadd.f32 %v2964, %v2965
      %s2967 = vtos %v2966
      %v2968 = vstv %s2967
      %v2971 = vrot.slane %v2952, 1
      %v2972 = vrot.slane %v2953, 1
      %v2975 = vsel %vm2954, %v2971, 0.0
      %v2976 = vsel %vm2956, %v2972, 0.0
      %v2977 = vadd.f32 %v2975, %v2976
      %2978 = vadd.xlane.f32.xlu0 %v2977
      %v2979 = vpop.xlane.xlu0 %2978
      %v2980 = vrot.slane %v2979, 4
      %v2981 = vadd.f32 %v2979, %v2980
      %v2982 = vrot.slane %v2981, 2
      %v2983 = vadd.f32 %v2981, %v2982
      %v2984 = vrot.slane %v2983, 1
      %v2985 = vadd.f32 %v2983, %v2984
      %s2986 = vtos %v2985
      %v2987 = vstv %s2986
      %v2988 = vadd.f32 %v2968, %v2987
      %v2989 = vmul.f32 %v2948, %v2948
      %v2990 = vmul.f32 %v2949, %v2949
      %v2991 = vsel %vm2954, %v2989, 0.0
      %v2992 = vsel %vm2956, %v2990, 0.0
      %v2993 = vadd.f32 %v2991, %v2992
      %2994 = vadd.xlane.f32.xlu0 %v2993
      %v2995 = vpop.xlane.xlu0 %2994
      %v2996 = vrot.slane %v2995, 4
      %v2997 = vadd.f32 %v2995, %v2996
      %v2998 = vrot.slane %v2997, 2
      %v2999 = vadd.f32 %v2997, %v2998
      %v3000 = vrot.slane %v2999, 1
      %v3001 = vadd.f32 %v2999, %v3000
      %s3002 = vtos %v3001
      %v3003 = vstv %s3002
      %v3004 = vmul.f32 %v2952, %v2952
      %v3005 = vmul.f32 %v2953, %v2953
      %v3008 = vrot.slane %v3004, 1
      %v3009 = vrot.slane %v3005, 1
      %v3012 = vsel %vm2954, %v3008, 0.0
      %v3013 = vsel %vm2956, %v3009, 0.0
      %v3014 = vadd.f32 %v3012, %v3013
      %3015 = vadd.xlane.f32.xlu0 %v3014
      %v3016 = vpop.xlane.xlu0 %3015
      %v3017 = vrot.slane %v3016, 4
      %v3018 = vadd.f32 %v3016, %v3017
      %v3019 = vrot.slane %v3018, 2
      %v3020 = vadd.f32 %v3018, %v3019
      %v3021 = vrot.slane %v3020, 1
      %v3022 = vadd.f32 %v3020, %v3021
      %s3023 = vtos %v3022
      %v3024 = vstv %s3023
      %v3025 = vadd.f32 %v3003, %v3024
      %v3026 = vmul.f32 %v2988, 0.0036764706
      %v3027 = vmul.f32 %v3025, 0.0036764706
      %v3028 = vmul.f32 %v3026, %v3026
      %v3029 = vsub.f32 %v3027, %v3028
      %v3030 = vmax.f32 %v3029, 0.0
      %v3031 = vadd.f32 %v3030, 1e-05
      %v3032 = vrsqrt.pop %v3031
      %v3033 = vmul.f32 %v3032, %v3031
      %v3034 = vmul.f32 %v3033, %v3032
      %v3035 = vmul.f32 0.5, %v3034
      %v3036 = vsub.f32 1.5, %v3035
      %v3037 = vmul.f32 %v3032, %v3036
      %vm3038 = vweird.f32 %v3031
      %vm3039 = vweird.f32 %v3032
      %vm3040 = vmor %vm3038, %vm3039
      %v3041 = vsel %vm3040, %v3032, %v3037
      %v3042 = vld [vmem:[#allocation4] sm:$0x1]
      %v3043 = vmul.f32 %v3041, %v3042
      %v3044 = vld [vmem:[#allocation5] sm:$0x1]
      %v3045 = vmul.f32 %v3026, %v3043
      %v3046 = vsub.f32 %v3044, %v3045
      %v3047 = vld [vmem:[%s21] sm:$0x3]
      %3049 = vset.pattern.permute.xlu0 0
      %3050 = vperm.xlu0 %3049, %v3043
      %v3051 = vpop.permute.xlu0 %3050
      %v3053 = vperm.slane %v3051, 0
      %v3054 = vmul.f32 %v2948, %v3053
      %v3055 = vmul.f32 %v2949, %v3053
      %3057 = vset.pattern.permute.xlu0 0
      %3058 = vperm.xlu0 %3057, %v3046
      %v3059 = vpop.permute.xlu0 %3058
      %v3061 = vperm.slane %v3059, 0
      %v3062 = vadd.f32 %v3054, %v3061
      %v3063 = vadd.f32 %v3055, %v3061
      %vm3064 = vcmp.ge.f32.partialorder %v3062, 0.0
      %vm3065 = vcmp.ge.f32.partialorder %v3063, 0.0
      %v3066 = vld [vmem:[#allocation6] sm:$0x1]
      %3068 = vset.pattern.permute.xlu0 0
      %3069 = vperm.xlu0 %3068, %v3066
      %v3070 = vpop.permute.xlu0 %3069
      %v3072 = vperm.slane %v3070, 0
      %v3073 = vmul.f32 %v3062, %v3072
      %v3074 = vmul.f32 %v3063, %v3072
      %v3075 = vsel %vm3064, %v3062, %v3073
      %v3076 = vsel %vm3065, %v3063, %v3074
      %v3077 = vld [vmem:[#allocation7] sm:$0x1]
      %3079 = vset.pattern.permute.xlu0 0
      %3080 = vperm.xlu0 %3079, %v3077
      %v3081 = vpop.permute.xlu0 %3080
      %v3083 = vperm.slane %v3081, 0
      %v3084 = vmul.f32 %v3075, %v3083
      %v3085 = vmul.f32 %v3076, %v3083
      %v3086 = vld [vmem:[#allocation8] sm:$0x1]
      %3088 = vset.pattern.permute.xlu0 0
      %3089 = vperm.xlu0 %3088, %v3086
      %v3090 = vpop.permute.xlu0 %3089
      %v3092 = vperm.slane %v3090, 0
      %v3093 = vadd.f32 %v3084, %v3092
      %v3094 = vadd.f32 %v3085, %v3092
      %v3097 = vrot.slane %v3094, 7
      %v3098 = vsel %vm2954, %v3093, %v3097
      %v3100 = vmul.f32 %v3047, %v3098
      %v3101 = vxor.u32 %v3100, 2147483648
      %v3102 = vmul.f32 %v3101, 1.442695
      %v3103 = vpow.pop %v3102
      %v3104 = vadd.f32 %v3103, 1.0
      %v3105 = vrcp.pop %v3104
      %v3106 = vmul.f32 %v3104, %v3105
      %v3107 = vsub.f32 1.0, %v3106
      %v3108 = vmul.f32 %v3105, %v3107
      %v3109 = vadd.f32 %v3105, %v3108
      %vm3110 = vweird.f32 %v3104
      %vm3111 = vweird.f32 %v3105
      %vm3112 = vmor %vm3110, %vm3111
      %v3113 = vsel %vm3112, %v3105, %v3109
      %v3114 = vand.u32 2147483647, %v3104
      %vm3115 = vcmp.eq.f32.partialorder %v3114, 8.507059e+37
      %v3116 = vand.u32 %v3104, 2147483648
      %v3117 = vor.u32 1.1754944e-38, %v3116
      %v3118 = vsel %vm3115, %v3117, %v3113
      %v3119 = vmul.f32 1.0, %v3118
      %v3120 = vmul.f32 %v3119, 2.0
      %v3121 = vlaneseq
      %vm3122 = vcmp.ge.s32.totalorder %v3121, 0
      %vm3123 = vcmp.lt.s32.totalorder %v3121, 144
      %vm3124 = vmand %vm3122, %vm3123
      %3125 = vst.msk [vmem:[%s754] sm:$0x3] %vm3124, %v3120
      %v3126 = vld [vmem:[%s22] sm:$0x3]
      %v3127 = vmul.f32 %v2952, %v3053
      %v3128 = vmul.f32 %v2953, %v3053
      %v3129 = vadd.f32 %v3127, %v3061
      %v3130 = vadd.f32 %v3128, %v3061
      %vm3131 = vcmp.ge.f32.partialorder %v3129, 0.0
      %vm3132 = vcmp.ge.f32.partialorder %v3130, 0.0
      %v3133 = vld [vmem:[#allocation6] sm:$0x1]
      %3135 = vset.pattern.permute.xlu0 0
      %3136 = vperm.xlu0 %3135, %v3133
      %v3137 = vpop.permute.xlu0 %3136
      %v3139 = vperm.slane %v3137, 0
      %v3140 = vmul.f32 %v3129, %v3139
      %v3141 = vmul.f32 %v3130, %v3139
      %v3142 = vsel %vm3131, %v3129, %v3140
      %v3143 = vsel %vm3132, %v3130, %v3141
      %v3144 = vld [vmem:[#allocation7] sm:$0x1]
      %3146 = vset.pattern.permute.xlu0 0
      %3147 = vperm.xlu0 %3146, %v3144
      %v3148 = vpop.permute.xlu0 %3147
      %v3150 = vperm.slane %v3148, 0
      %v3151 = vmul.f32 %v3142, %v3150
      %v3152 = vmul.f32 %v3143, %v3150
      %v3153 = vld [vmem:[#allocation8] sm:$0x1]
      %3155 = vset.pattern.permute.xlu0 0
      %3156 = vperm.xlu0 %3155, %v3153
      %v3157 = vpop.permute.xlu0 %3156
      %v3159 = vperm.slane %v3157, 0
      %v3160 = vadd.f32 %v3151, %v3159
      %v3161 = vadd.f32 %v3152, %v3159
      %3164 = vst [vmem:[#allocation1] sm:$0xff] %v3160
      %3165 = vst [vmem:[#allocation1 + $0x9] sm:$0xff] %v3161
      %s3166 = scalar_lea.vmem [#allocation1], 1
      %v3167 = vld [vmem:[%s3166] ss:$9 sm:$0xff]
      %v3169 = vmul.f32 %v3126, %v3167
      %v3170 = vxor.u32 %v3169, 2147483648
      %v3171 = vmul.f32 %v3170, 1.442695
      %v3172 = vpow.pop %v3171
      %v3173 = vadd.f32 %v3172, 1.0
      %v3174 = vrcp.pop %v3173
      %v3175 = vmul.f32 %v3173, %v3174
      %v3176 = vsub.f32 1.0, %v3175
      %v3177 = vmul.f32 %v3174, %v3176
      %v3178 = vadd.f32 %v3174, %v3177
      %vm3179 = vweird.f32 %v3173
      %vm3180 = vweird.f32 %v3174
      %vm3181 = vmor %vm3179, %vm3180
      %v3182 = vsel %vm3181, %v3174, %v3178
      %v3183 = vand.u32 2147483647, %v3173
      %vm3184 = vcmp.eq.f32.partialorder %v3183, 8.507059e+37
      %v3185 = vand.u32 %v3173, 2147483648
      %v3186 = vor.u32 1.1754944e-38, %v3185
      %v3187 = vsel %vm3184, %v3186, %v3182
      %v3188 = vmul.f32 1.0, %v3187
      %v3189 = vmul.f32 %v3188, 2.0
      %3190 = vst.msk [vmem:[%s758] sm:$0x3] %vm3124, %v3189
      %p3191 = scmp.lt.s32.totalorder %s48, 1
      %s3192 = scalar_select %p3191, %s48, 1
      %s3193 = smul.addr %s3192, 2
      %s3194 = scalar_lea.vmem %s23, %s3193
      %p3195 = scmp.lt.s32.totalorder %s48, 1
      %s3196 = scalar_select %p3195, %s48, 1
      %s3197 = smul.addr %s3196, 2
      %s3198 = scalar_lea.vmem %s24, %s3197
      // Predicated region
      $region117: #{_lambda_.1} parent=111 // pred_check
        %p3199 = pneg %p554
      $region118: #{_lambda_.1} parent=111 // pred_check_branch
        %3201 = sbr.rel (%p3199) target = $region120
      $region119: #{_lambda_.1} parent=111 // pred_region
        _
      $region120: #{_lambda_.1} parent=111 // pred_fallthru
        _
      // Predicated region
      $region121: #{_lambda_.1} parent=111 // pred_check
        %p3202 = pneg %p580
      $region122: #{_lambda_.1} parent=111 // pred_check_branch
        %3204 = sbr.rel (%p3202) target = $region124
      $region123: #{_lambda_.1} parent=111 // pred_region
        _
      $region124: #{_lambda_.1} parent=111 // pred_fallthru
        _
    $region112: #{_lambda_.1} parent=5 // pred_fallthru
      _
    %p3205 = scmp.le.s32.totalorder 2, %s43
    // Predicated region
    $region125: #{_lambda_.1} parent=5 // pred_check
      %p3206 = pneg %p3205
    $region126: #{_lambda_.1} parent=5 // pred_check_branch
      %3208 = sbr.rel (%p3206) target = $region128
    $region127: #{_lambda_.1} parent=5 // pred_region
      %s3209 = ssub.s32 %s43, 2
      // Predicated region
      $region129: #{_lambda_.1} parent=127 // pred_check
        %p3210 = pneg %p560
      $region130: #{_lambda_.1} parent=127 // pred_check_branch
        %3212 = sbr.rel (%p3210) target = $region132
      $region131: #{_lambda_.1} parent=127 // pred_region
        %p3213 = scmp.lt.s32.totalorder %s49, 1
        %s3214 = scalar_select %p3213, %s49, 1
        %s3215 = smul.addr %s3214, 2
        %s3216 = scalar_lea.vmem %s23, %s3215
      $region132: #{_lambda_.1} parent=127 // pred_fallthru
        _
      // Predicated region
      $region133: #{_lambda_.1} parent=127 // pred_check
        %p3217 = pneg %p586
      $region134: #{_lambda_.1} parent=127 // pred_check_branch
        %3219 = sbr.rel (%p3217) target = $region136
      $region135: #{_lambda_.1} parent=127 // pred_region
        %p3220 = scmp.lt.s32.totalorder %s49, 1
        %s3221 = scalar_select %p3220, %s49, 1
        %s3222 = smul.addr %s3221, 2
        %s3223 = scalar_lea.vmem %s24, %s3222
      $region136: #{_lambda_.1} parent=127 // pred_fallthru
        _
    $region128: #{_lambda_.1} parent=5 // pred_fallthru
      _
  $region6: #{_lambda_.1} parent=0 // loop_footer
    %s47 = sadd.s32 1, %s43
  $region7: #{_lambda_.1} parent=0 // loop_footer_branch
    %42 = sbr.rel target = $region3
  $region8: #{_lambda_.1} parent=0 // loop_exit
    _

</llo_original>
